<compile_context>
chip_gen: v7x
topology: tpu7x:2x2x1
jax: 0.10.0
libtpu: 0.0.40
codegen_flags: <defaults>
</compile_context>

<pallas_src>
import math
import functools
import numpy as np

import jax
import jax.numpy as jnp
from jax.experimental import pallas as pl
from jax.experimental.pallas import tpu as pltpu

PAD_TOKEN, SOS_TOKEN, EOS_TOKEN = 0, 1, 2   # constant.{PAD,SOS,EOS}_TOKEN

# bf16 MXU inputs everywhere; f32 accumulation / softmax / LayerNorm.
MATMUL_DTYPE = jnp.bfloat16


def _round_up(x, m):
    return ((x + m - 1) // m) * m


# ----------------------------- kernel helpers -----------------------------

def _layer_norm(y, g, b):
    mean = jnp.mean(y, axis=-1, keepdims=True)
    var = jnp.mean(jnp.square(y - mean), axis=-1, keepdims=True)
    return (y - mean) * jax.lax.rsqrt(var + 1e-5) * g + b


def _masked_softmax(s, mask):
    # mask: 1.0 == masked.  Matches torch masked_fill(mask, -inf) + softmax for any
    # row that has at least one unmasked key (always true here: SOS / first encoder
    # frame is never masked).  Softmax math stays f32.
    s = jnp.where(mask > 0.5, -1e30, s)
    s = s - jnp.max(s, axis=-1, keepdims=True)
    p = jnp.exp(s)
    return p * pl.reciprocal(jnp.sum(p, axis=-1, keepdims=True), approx=True)


def _pad_last(p, width):
    # Pad the last (lane) axis with zeros so the attention-prob store is lane-dense.
    k = p.shape[-1]
    if width == k:
        return p
    zeros = jnp.zeros(p.shape[:-1] + (width - k,), p.dtype)
    return jnp.concatenate([p, zeros], axis=-1)


# ----------------------------- Pallas kernels -----------------------------

def decoder_stack_kernel(
        # activations / masks (constant across layers)
        x0_ref, enc_ref, npm_ref, smask_ref, emask_ref,
        # self-attention params (stacked over layers)
        wsqkv_ref, bsqkv_ref, wso_ref, bso_ref, ln1g_ref, ln1b_ref,
        # encoder-decoder attention params
        weq_ref, beq_ref, wekv_ref, bekv_ref, weo_ref, beo_ref, ln2g_ref, ln2b_ref,
        # position-wise FFN params (Conv1d k=1 == Linear)
        w1_ref, b1_ref, w2_ref, b2_ref, ln3g_ref, ln3b_ref,
        # outputs
        x_ref, sattn_ref, eattn_ref,
        *, B, T, Tenc, H, dk, dv, skpad, ekpad):
    l = pl.program_id(0)
    mdt = MATMUL_DTYPE
    nq = H * dk

    # Initialize the VMEM-resident running activation from the embedded input.
    @pl.when(l == 0)
    def _():
        x_ref[...] = x0_ref[...]

    x = x_ref[...]                 # (B*T, D) f32, resident across layers
    npm = npm_ref[...]             # (B*T, 1)  non-pad mask
    smask = smask_ref[...]         # (B, T, T)
    emask = emask_ref[...]         # (B, T, Tenc)

    # ---------------- self attention ----------------
    # Fused QKV projection; 1/sqrt(dk) already folded into the Q columns/bias.
    qkv = jnp.dot(x.astype(mdt), wsqkv_ref[0],
                  preferred_element_type=jnp.float32) + bsqkv_ref[0]
    y = x + bso_ref[0]             # residual + output-proj bias; heads accumulate below
    for h in range(H):             # static unroll; every matmul is batched over B
        qh = qkv[:, h * dk:(h + 1) * dk].reshape(B, T, dk).astype(mdt)
        kh = qkv[:, nq + h * dk: nq + (h + 1) * dk].reshape(B, T, dk).astype(mdt)
        vh = qkv[:, 2 * nq + h * dv: 2 * nq + (h + 1) * dv].reshape(B, T, dv).astype(mdt)
        s = jnp.einsum('bqd,bkd->bqk', qh, kh, preferred_element_type=jnp.float32)
        p = _masked_softmax(s, smask)                       # (B, T, T) f32
        sattn_ref[0, h * B:(h + 1) * B, :, :] = _pad_last(p, skpad)   # lane-dense store
        ctx = jnp.einsum('bqk,bkd->bqd', p.astype(mdt), vh,
                         preferred_element_type=jnp.float32).reshape(B * T, dv)
        # per-head partial output projection (no head concat)
        y = y + jnp.dot(ctx.astype(mdt), wso_ref[0, h],
                        preferred_element_type=jnp.float32)
    y = _layer_norm(y, ln1g_ref[0], ln1b_ref[0]) * npm      # fused non_pad_mask

    # ---------------- encoder-decoder attention ----------------
    eq = jnp.dot(y.astype(mdt), weq_ref[0],
                 preferred_element_type=jnp.float32) + beq_ref[0]       # (B*T, H*dk)
    # Single K/V projection for all B*Tenc encoder rows.
    ekv = jnp.dot(enc_ref[...].astype(mdt), wekv_ref[0],
                  preferred_element_type=jnp.float32) + bekv_ref[0]     # (B*Tenc, H*(dk+dv))
    y2 = y + beo_ref[0]
    for h in range(H):
        qh = eq[:, h * dk:(h + 1) * dk].reshape(B, T, dk).astype(mdt)
        kh = ekv[:, h * dk:(h + 1) * dk].reshape(B, Tenc, dk).astype(mdt)
        vh = ekv[:, nq + h * dv: nq + (h + 1) * dv].reshape(B, Tenc, dv).astype(mdt)
        s = jnp.einsum('bqd,bkd->bqk', qh, kh, preferred_element_type=jnp.float32)
        p = _masked_softmax(s, emask)                       # (B, T, Tenc) f32
        eattn_ref[0, h * B:(h + 1) * B, :, :] = _pad_last(p, ekpad)
        ctx = jnp.einsum('bqk,bkd->bqd', p.astype(mdt), vh,
                         preferred_element_type=jnp.float32).reshape(B * T, dv)
        y2 = y2 + jnp.dot(ctx.astype(mdt), weo_ref[0, h],
                          preferred_element_type=jnp.float32)
    y2 = _layer_norm(y2, ln2g_ref[0], ln2b_ref[0]) * npm

    # ---------------- position-wise FFN ----------------
    hid = jnp.dot(y2.astype(mdt), w1_ref[0],
                  preferred_element_type=jnp.float32) + b1_ref[0]
    hid = jnp.maximum(hid, 0.0)
    z = jnp.dot(hid.astype(mdt), w2_ref[0],
                preferred_element_type=jnp.float32) + b2_ref[0] + y2
    z = _layer_norm(z, ln3g_ref[0], ln3b_ref[0]) * npm

    x_ref[...] = z   # resident state for the next layer / final output


def decoder_stack(fused, x0, enc_flat, npm, smask, emask,
                  *, B, T, Tenc, H, dk, dv, D, inner, L):
    skpad = _round_up(T, 128)      # lane-dense key axis for self-attn probs
    ekpad = _round_up(Tenc, 128)   # lane-dense key axis for enc-attn probs
    kernel = functools.partial(decoder_stack_kernel,
                               B=B, T=T, Tenc=Tenc, H=H, dk=dk, dv=dv,
                               skpad=skpad, ekpad=ekpad)

    def rep(shape):                # same block every layer (loaded once / resident)
        nd = len(shape)
        return pl.BlockSpec(shape, lambda l: (0,) * nd)

    def per_layer(shape):          # leading layer axis indexed by the grid
        nd = len(shape)
        return pl.BlockSpec(shape, lambda l: (l,) + (0,) * (nd - 1))

    nqkv = H * (2 * dk + dv)
    nq = H * dk
    nkv = H * (dk + dv)

    in_specs = [
        rep((B * T, D)),            # x0 (embedded input)
        rep((B * Tenc, D)),         # flattened encoder outputs
        rep((B * T, 1)),            # non-pad mask
        rep((B, T, T)),             # self-attn mask
        rep((B, T, Tenc)),          # dec-enc attn mask
        per_layer((1, D, nqkv)), per_layer((1, 1, nqkv)),           # self QKV
        per_layer((1, H, dv, D)), per_layer((1, 1, D)),             # self out proj (head-major)
        per_layer((1, 1, D)), per_layer((1, 1, D)),                 # LN1
        per_layer((1, D, nq)), per_layer((1, 1, nq)),               # enc Q
        per_layer((1, D, nkv)), per_layer((1, 1, nkv)),             # enc KV
        per_layer((1, H, dv, D)), per_layer((1, 1, D)),             # enc out proj
        per_layer((1, 1, D)), per_layer((1, 1, D)),                 # LN2
        per_layer((1, D, inner)), per_layer((1, 1, inner)),         # FFN w1
        per_layer((1, inner, D)), per_layer((1, 1, D)),             # FFN w2
        per_layer((1, 1, D)), per_layer((1, 1, D)),                 # LN3
    ]
    out_specs = [
        rep((B * T, D)),                         # resident running activation
        per_layer((1, H * B, T, skpad)),         # per-layer self-attn probs (lane-dense)
        per_layer((1, H * B, T, ekpad)),         # per-layer enc-attn probs (lane-dense)
    ]
    out_shape = [
        jax.ShapeDtypeStruct((B * T, D), jnp.float32),
        jax.ShapeDtypeStruct((L, H * B, T, skpad), jnp.float32),
        jax.ShapeDtypeStruct((L, H * B, T, ekpad), jnp.float32),
    ]

    args = (x0, enc_flat, npm, smask, emask,
            fused['w_sqkv'], fused['b_sqkv'], fused['w_so'], fused['b_so'],
            fused['ln1_g'], fused['ln1_b'],
            fused['w_eq'], fused['b_eq'], fused['w_ekv'], fused['b_ekv'],
            fused['w_eo'], fused['b_eo'], fused['ln2_g'], fused['ln2_b'],
            fused['w1'], fused['b1'], fused['w2'], fused['b2'],
            fused['ln3_g'], fused['ln3_b'])

    # Explicit VMEM budget: resident activations/masks + double-buffered per-layer
    # weight set + double-buffered attention-prob blocks + margin.
    rep_bytes = sum(int(a.nbytes) for a in args[:5])
    layer_bytes = sum(int(a.nbytes) // L for a in args[5:])
    out_block_bytes = (B * T * D + H * B * T * skpad + H * B * T * ekpad) * 4
    vmem_limit = int(min(rep_bytes + 2 * layer_bytes + 2 * out_block_bytes + (16 << 20),
                         100 << 20))

    flops_layer = (2 * B * T * D * nqkv + 2 * B * H * T * T * (dk + dv)
                   + 2 * B * T * H * dv * D + 2 * B * T * D * nq
                   + 2 * B * Tenc * D * nkv + 2 * B * H * T * Tenc * (dk + dv)
                   + 2 * B * T * H * dv * D + 4 * B * T * D * inner)
    cost = pl.CostEstimate(
        flops=int(L * flops_layer),
        transcendentals=int(L * (B * H * T * (T + Tenc) + 3 * B * T)),
        bytes_accessed=int(rep_bytes + L * layer_bytes
                           + 4 * (B * T * D + L * H * B * T * (skpad + ekpad))))

    return pl.pallas_call(
        kernel,
        grid=(L,),
        in_specs=in_specs,
        out_specs=out_specs,
        out_shape=out_shape,
        input_output_aliases={0: 0},          # x0 HBM buffer donated to the x output
        compiler_params=pltpu.CompilerParams(
            dimension_semantics=("arbitrary",),   # layers carry state sequentially
            vmem_limit_bytes=vmem_limit),
        cost_estimate=cost,
    )(*args)


def _output_linear_kernel(x_ref, w_ref, o_ref):
    o_ref[...] = jnp.dot(x_ref[...].astype(MATMUL_DTYPE), w_ref[...],
                         preferred_element_type=jnp.float32)


def output_linear(x, w_pad):
    """Separate vocab-tiled call so w_out / logits are never resident during the
    layer loop (matters on v7x's 64 MiB VMEM); stores are lane-dense."""
    n, D = x.shape
    vpad = w_pad.shape[1]
    vt = next(t for t in (1024, 512, 256, 128) if vpad % t == 0)
    return pl.pallas_call(
        _output_linear_kernel,
        grid=(vpad // vt,),
        in_specs=[pl.BlockSpec((n, D), lambda j: (0, 0)),
                  pl.BlockSpec((D, vt), lambda j: (0, j))],
        out_specs=pl.BlockSpec((n, vt), lambda j: (0, j)),
        out_shape=jax.ShapeDtypeStruct((n, vpad), jnp.float32),
        compiler_params=pltpu.CompilerParams(
            dimension_semantics=("parallel",)),
    )(x, w_pad)


# ----------------------------- JAX / host glue -----------------------------

def preprocess(padded_input_np):
    # TODO(synk): ragged SOS/EOS insertion is host-side (no clean Pallas equivalent).
    seqs = [row[row != PAD_TOKEN] for row in padded_input_np]
    seq_in = [np.concatenate([[SOS_TOKEN], y]) for y in seqs]
    seq_out = [np.concatenate([y, [EOS_TOKEN]]) for y in seqs]
    maxlen = max(len(s) for s in seq_in)
    seq_in_pad = np.full((len(seqs), maxlen), EOS_TOKEN, np.int32)
    seq_out_pad = np.full((len(seqs), maxlen), PAD_TOKEN, np.int32)
    for i, (a, b) in enumerate(zip(seq_in, seq_out)):
        seq_in_pad[i, :len(a)] = a
        seq_out_pad[i, :len(b)] = b
    return jnp.asarray(seq_in_pad), jnp.asarray(seq_out_pad)


def get_subsequent_mask(seq):
    B, T = seq.shape
    m = jnp.triu(jnp.ones((T, T), jnp.int32), k=1)
    return jnp.broadcast_to(m[None], (B, T, T))


def get_attn_key_pad_mask(seq_k, seq_q, pad_idx):
    B, Tk = seq_k.shape
    Tq = seq_q.shape[1]
    pm = (seq_k == pad_idx).astype(jnp.int32)[:, None, :]
    return jnp.broadcast_to(pm, (B, Tq, Tk))


def get_attn_pad_mask(enc_out, enc_lens, expand_length):
    B, Tenc, _ = enc_out.shape
    idx = jnp.arange(Tenc)[None, :]
    pad = (idx >= enc_lens[:, None]).astype(jnp.int32)
    return jnp.broadcast_to(pad[:, None, :], (B, expand_length, Tenc))


def positional_encoding(T, D):
    pos = np.arange(T, dtype=np.float64)[:, None]
    exp_term = np.exp(np.arange(0, D, 2, dtype=np.float64) * -(math.log(10000.0) / D))
    pe = np.zeros((T, D), np.float32)
    pe[:, 0::2] = np.sin(pos * exp_term)
    pe[:, 1::2] = np.cos(pos * exp_term)
    return jnp.asarray(pe)


def prepare_fused_params(params):
    """One-time prep: stack per-layer weights on a layer axis, fuse QKV (fold
    1/sqrt(dk) into Q), store output projections head-major (H, dv, D), pad the
    vocab projection to a lane-dense width, cast matmul weights to bf16."""
    H, dk, dv = params['H'], params['dk'], params['dv']
    temp = float(dk) ** 0.5
    layers = params['layers']
    mdt = MATMUL_DTYPE

    def stk(fn):
        return jnp.stack([fn(lp) for lp in layers], axis=0)

    fused = dict(
        w_sqkv=stk(lambda lp: jnp.concatenate(
            [lp['self_attn']['wq'] / temp, lp['self_attn']['wk'],
             lp['self_attn']['wv']], axis=1)).astype(mdt),
        b_sqkv=stk(lambda lp: jnp.concatenate(
            [lp['self_attn']['bq'] / temp, lp['self_attn']['bk'],
             lp['self_attn']['bv']])[None, :]),
        w_so=stk(lambda lp: lp['self_attn']['wo'].reshape(H, dv, -1)).astype(mdt),
        b_so=stk(lambda lp: lp['self_attn']['bo'][None, :]),
        ln1_g=stk(lambda lp: lp['self_attn']['ln_g'][None, :]),
        ln1_b=stk(lambda lp: lp['self_attn']['ln_b'][None, :]),
        w_eq=stk(lambda lp: lp['enc_attn']['wq'] / temp).astype(mdt),
        b_eq=stk(lambda lp: (lp['enc_attn']['bq'] / temp)[None, :]),
        w_ekv=stk(lambda lp: jnp.concatenate(
            [lp['enc_attn']['wk'], lp['enc_attn']['wv']], axis=1)).astype(mdt),
        b_ekv=stk(lambda lp: jnp.concatenate(
            [lp['enc_attn']['bk'], lp['enc_attn']['bv']])[None, :]),
        w_eo=stk(lambda lp: lp['enc_attn']['wo'].reshape(H, dv, -1)).astype(mdt),
        b_eo=stk(lambda lp: lp['enc_attn']['bo'][None, :]),
        ln2_g=stk(lambda lp: lp['enc_attn']['ln_g'][None, :]),
        ln2_b=stk(lambda lp: lp['enc_attn']['ln_b'][None, :]),
        w1=stk(lambda lp: lp['ffn']['w1']).astype(mdt),
        b1=stk(lambda lp: lp['ffn']['b1'][None, :]),
        w2=stk(lambda lp: lp['ffn']['w2']).astype(mdt),
        b2=stk(lambda lp: lp['ffn']['b2'][None, :]),
        ln3_g=stk(lambda lp: lp['ffn']['ln_g'][None, :]),
        ln3_b=stk(lambda lp: lp['ffn']['ln_b'][None, :]),
    )
    D, vocab = params['w_out'].shape
    vpad = _round_up(vocab, 128)
    w_out = jnp.zeros((D, vpad), jnp.float32).at[:, :vocab].set(params['w_out'])
    fused['w_out'] = w_out.astype(mdt)
    fused['vpad'] = vpad
    return fused


def decoder_forward(params, fused, padded_input_np, encoder_padded_outputs,
                    encoder_input_lengths):
    H, dk, dv = params['H'], params['dk'], params['dv']
    L = len(params['layers'])
    D = params['embedding'].shape[1]
    vocab = params['w_out'].shape[1]
    inner = params['layers'][0]['ffn']['w1'].shape[1]

    seq_in_pad, seq_out_pad = preprocess(padded_input_np)
    B, T = seq_in_pad.shape
    Tenc = encoder_padded_outputs.shape[1]

    # Pad decoder length (with EOS, the decoder pad token) and encoder length to
    # sublane multiples so every in-kernel row reshape/slice is (8,128)-aligned.
    Tp = _round_up(T, 8)
    Te = _round_up(Tenc, 8)
    seq_in_k = jnp.pad(seq_in_pad, ((0, 0), (0, Tp - T)), constant_values=EOS_TOKEN)
    enc_p = jnp.pad(encoder_padded_outputs, ((0, 0), (0, Te - Tenc), (0, 0)))

    non_pad_mask = (seq_in_k != EOS_TOKEN).astype(jnp.float32).reshape(B * Tp, 1)
    subseq = get_subsequent_mask(seq_in_k)
    keypad = get_attn_key_pad_mask(seq_in_k, seq_in_k, EOS_TOKEN)
    self_attn_mask = ((keypad + subseq) > 0).astype(jnp.float32)          # (B,Tp,Tp)
    dec_enc_attn_mask = get_attn_pad_mask(
        enc_p, encoder_input_lengths, Tp).astype(jnp.float32)             # (B,Tp,Te)

    # TODO(synk): embedding gather + dropout stay in JAX glue (dropout = eval identity).
    emb = jnp.take(params['embedding'], seq_in_k, axis=0)                 # (B,Tp,D)
    pe = positional_encoding(Tp, D)
    x0 = (emb * params['x_logit_scale'] + pe[None]).reshape(B * Tp, D)
    enc_flat = enc_p.reshape(B * Te, D)

    x_final, sattn, eattn = decoder_stack(
        fused, x0, enc_flat, non_pad_mask, self_attn_mask, dec_enc_attn_mask,
        B=B, T=Tp, Tenc=Te, H=H, dk=dk, dv=dv, D=D, inner=inner, L=L)

    logits = output_linear(x_final, fused['w_out'])
    pred = logits[:, :vocab].reshape(B, Tp, vocab)[:, :T]

    # (L, H*B, Tq_pad, Kpad) -> per-layer (B, H, T, Tk) lists (host-side slicing of
    # the lane/sublane padding).
    sattn = sattn.reshape(L, H, B, Tp, -1)[:, :, :, :T, :T].transpose(0, 2, 1, 3, 4)
    eattn = eattn.reshape(L, H, B, Tp, -1)[:, :, :, :T, :Tenc].transpose(0, 2, 1, 3, 4)
    self_attn_list = [sattn[i] for i in range(L)]
    enc_attn_list = [eattn[i] for i in range(L)]
    return pred, seq_out_pad, self_attn_list, enc_attn_list


# ----------------------------- parameter init -----------------------------

def init_mha_params(key, D, H, dk, dv):
    ks = jax.random.split(key, 4)
    std_qk = math.sqrt(2.0 / (D + dk))
    std_v = math.sqrt(2.0 / (D + dv))
    std_o = math.sqrt(2.0 / (H * dv + D))
    return dict(
        wq=jax.random.normal(ks[0], (D, H * dk), jnp.float32) * std_qk,
        bq=jnp.zeros((H * dk,), jnp.float32),
        wk=jax.random.normal(ks[1], (D, H * dk), jnp.float32) * std_qk,
        bk=jnp.zeros((H * dk,), jnp.float32),
        wv=jax.random.normal(ks[2], (D, H * dv), jnp.float32) * std_v,
        bv=jnp.zeros((H * dv,), jnp.float32),
        wo=jax.random.normal(ks[3], (H * dv, D), jnp.float32) * std_o,
        bo=jnp.zeros((D,), jnp.float32),
        ln_g=jnp.ones((D,), jnp.float32),
        ln_b=jnp.zeros((D,), jnp.float32),
    )


def init_ffn_params(key, D, inner):
    ks = jax.random.split(key, 2)
    return dict(
        w1=jax.random.normal(ks[0], (D, inner), jnp.float32) * math.sqrt(2.0 / (D + inner)),
        b1=jnp.zeros((inner,), jnp.float32),
        w2=jax.random.normal(ks[1], (inner, D), jnp.float32) * math.sqrt(2.0 / (D + inner)),
        b2=jnp.zeros((D,), jnp.float32),
        ln_g=jnp.ones((D,), jnp.float32),
        ln_b=jnp.zeros((D,), jnp.float32),
    )


def init_decoder_params(key, vocab, D, H, dk, dv, inner, num_layers):
    keys = jax.random.split(key, num_layers + 2)
    emb = jax.random.normal(keys[0], (vocab, D), jnp.float32) * 0.1
    emb = emb.at[PAD_TOKEN].set(0.0)                       # padding_idx=PAD_TOKEN
    w_out = jax.random.normal(keys[1], (D, vocab), jnp.float32) * math.sqrt(2.0 / (D + vocab))
    layers = []
    for i in range(num_layers):
        lk = jax.random.split(keys[2 + i], 3)
        layers.append(dict(
            self_attn=init_mha_params(lk[0], D, H, dk, dv),
            enc_attn=init_mha_params(lk[1], D, H, dk, dv),
            ffn=init_ffn_params(lk[2], D, inner),
        ))
    return dict(embedding=emb, w_out=w_out, layers=layers,
                x_logit_scale=1.0, H=H, dk=dk, dv=dv)   # emb_trg_sharing=False


# ----------------------------- main -----------------------------

if __name__ == "__main__":
    key = jax.random.PRNGKey(0)
    B = 2
    vocab = 24          # num_trg_vocab
    D = 32              # dim_model == dim_emb
    H = 2               # num_heads
    dk = dv = 16        # dim_key, dim_value
    inner = 64          # dim_inner
    num_layers = 2
    Tenc = 10

    # padded target ids (B x T), PAD=0; token ids avoid PAD/SOS/EOS.
    padded_input = np.array([
        [5, 7, 9, 3, 4, 6, 8, 0],
        [10, 11, 12, 13, 14, 0, 0, 0],
    ], dtype=np.int32)

    enc_key, p_key = jax.random.split(key)
    encoder_padded_outputs = jax.random.normal(enc_key, (B, Tenc, D), jnp.float32)
    encoder_input_lengths = jnp.array([10, 7], jnp.int32)

    params = init_decoder_params(p_key, vocab, D, H, dk, dv, inner, num_layers)
    fused = prepare_fused_params(params)    # one-time parameter prep

    pred, gold, self_attns, enc_attns = decoder_forward(
        params, fused, padded_input, encoder_padded_outputs, encoder_input_lengths)

    jax.block_until_ready(pred)
    jax.block_until_ready(self_attns[-1])
    jax.block_until_ready(enc_attns[-1])

    T = gold.shape[1]
    assert pred.shape == (B, T, vocab)
    assert len(self_attns) == num_layers and len(enc_attns) == num_layers
    assert self_attns[0].shape == (B, H, T, T)
    assert enc_attns[0].shape == (B, H, T, Tenc)
    assert bool(jnp.all(jnp.isfinite(pred)))
    print("KERNEL_OK")
</pallas_src>

<mosaic_0001>
module attributes {stable_mosaic.version = 11 : i64} {
  func.func @decoder_stack_kernel(%arg0: i32, %arg1: memref<16x32xf32, #tpu.memory_space<vmem>>, %arg2: memref<32x32xf32, #tpu.memory_space<vmem>>, %arg3: memref<16x1xf32, #tpu.memory_space<vmem>>, %arg4: memref<2x8x8xf32, #tpu.memory_space<vmem>>, %arg5: memref<2x8x16xf32, #tpu.memory_space<vmem>>, %arg6: memref<1x32x96xbf16, #tpu.memory_space<vmem>>, %arg7: memref<1x1x96xf32, #tpu.memory_space<vmem>>, %arg8: memref<1x2x16x32xbf16, #tpu.memory_space<vmem>>, %arg9: memref<1x1x32xf32, #tpu.memory_space<vmem>>, %arg10: memref<1x1x32xf32, #tpu.memory_space<vmem>>, %arg11: memref<1x1x32xf32, #tpu.memory_space<vmem>>, %arg12: memref<1x32x32xbf16, #tpu.memory_space<vmem>>, %arg13: memref<1x1x32xf32, #tpu.memory_space<vmem>>, %arg14: memref<1x32x64xbf16, #tpu.memory_space<vmem>>, %arg15: memref<1x1x64xf32, #tpu.memory_space<vmem>>, %arg16: memref<1x2x16x32xbf16, #tpu.memory_space<vmem>>, %arg17: memref<1x1x32xf32, #tpu.memory_space<vmem>>, %arg18: memref<1x1x32xf32, #tpu.memory_space<vmem>>, %arg19: memref<1x1x32xf32, #tpu.memory_space<vmem>>, %arg20: memref<1x32x64xbf16, #tpu.memory_space<vmem>>, %arg21: memref<1x1x64xf32, #tpu.memory_space<vmem>>, %arg22: memref<1x64x32xbf16, #tpu.memory_space<vmem>>, %arg23: memref<1x1x32xf32, #tpu.memory_space<vmem>>, %arg24: memref<1x1x32xf32, #tpu.memory_space<vmem>>, %arg25: memref<1x1x32xf32, #tpu.memory_space<vmem>>, %arg26: memref<16x32xf32, #tpu.memory_space<vmem>>, %arg27: memref<1x4x8x128xf32, #tpu.memory_space<vmem>>, %arg28: memref<1x4x8x128xf32, #tpu.memory_space<vmem>>) attributes {dimension_semantics = [#tpu.dimension_semantics<arbitrary>], iteration_bounds = array<i64: 2>, scalar_prefetch = 0 : i64, scratch_operands = 0 : i64, tpu.core_type = #tpu.core_type<tc>, window_params = [{pipeline_mode = #tpu.pipeline_mode<synchronous>, transform_indices = @transform_0, window_bounds = array<i64: 16, 32>}, {pipeline_mode = #tpu.pipeline_mode<synchronous>, transform_indices = @transform_1, window_bounds = array<i64: 32, 32>}, {pipeline_mode = #tpu.pipeline_mode<synchronous>, transform_indices = @transform_2, window_bounds = array<i64: 16, 1>}, {pipeline_mode = #tpu.pipeline_mode<synchronous>, transform_indices = @transform_3, window_bounds = array<i64: 2, 8, 8>}, {pipeline_mode = #tpu.pipeline_mode<synchronous>, transform_indices = @transform_4, window_bounds = array<i64: 2, 8, 16>}, {transform_indices = @transform_5, window_bounds = array<i64: 1, 32, 96>}, {transform_indices = @transform_6, window_bounds = array<i64: 1, 1, 96>}, {transform_indices = @transform_7, window_bounds = array<i64: 1, 2, 16, 32>}, {transform_indices = @transform_8, window_bounds = array<i64: 1, 1, 32>}, {transform_indices = @transform_9, window_bounds = array<i64: 1, 1, 32>}, {transform_indices = @transform_10, window_bounds = array<i64: 1, 1, 32>}, {transform_indices = @transform_11, window_bounds = array<i64: 1, 32, 32>}, {transform_indices = @transform_12, window_bounds = array<i64: 1, 1, 32>}, {transform_indices = @transform_13, window_bounds = array<i64: 1, 32, 64>}, {transform_indices = @transform_14, window_bounds = array<i64: 1, 1, 64>}, {transform_indices = @transform_15, window_bounds = array<i64: 1, 2, 16, 32>}, {transform_indices = @transform_16, window_bounds = array<i64: 1, 1, 32>}, {transform_indices = @transform_17, window_bounds = array<i64: 1, 1, 32>}, {transform_indices = @transform_18, window_bounds = array<i64: 1, 1, 32>}, {transform_indices = @transform_19, window_bounds = array<i64: 1, 32, 64>}, {transform_indices = @transform_20, window_bounds = array<i64: 1, 1, 64>}, {transform_indices = @transform_21, window_bounds = array<i64: 1, 64, 32>}, {transform_indices = @transform_22, window_bounds = array<i64: 1, 1, 32>}, {transform_indices = @transform_23, window_bounds = array<i64: 1, 1, 32>}, {transform_indices = @transform_24, window_bounds = array<i64: 1, 1, 32>}, {pipeline_mode = #tpu.pipeline_mode<synchronous>, transform_indices = @transform_25, window_bounds = array<i64: 16, 32>}, {transform_indices = @transform_26, window_bounds = array<i64: 1, 4, 8, 128>}, {transform_indices = @transform_27, window_bounds = array<i64: 1, 4, 8, 128>}]} {
    %c0_i32 = arith.constant 0 : i32
    %0 = arith.cmpi eq, %arg0, %c0_i32 : i32
    %1 = arith.extui %0 : i1 to i32
    %c0_i32_0 = arith.constant 0 : i32
    %2 = arith.cmpi ne, %1, %c0_i32_0 : i32
    scf.if %2 {
      %c0_150 = arith.constant 0 : index
      %c0_151 = arith.constant 0 : index
      %292 = vector.load %arg1[%c0_150, %c0_151] : memref<16x32xf32, #tpu.memory_space<vmem>>, vector<16x32xf32>
      %c0_152 = arith.constant 0 : index
      %c0_153 = arith.constant 0 : index
      %293 = vector.load %arg26[%c0_152, %c0_153] : memref<16x32xf32, #tpu.memory_space<vmem>>, vector<16x32xf32>
      tpu.vector_store %arg26[%c0_152, %c0_153], %292 {strides = array<i32>} : memref<16x32xf32, #tpu.memory_space<vmem>>, vector<16x32xf32>,
    } else {
    }
    %c0 = arith.constant 0 : index
    %c0_1 = arith.constant 0 : index
    %3 = vector.load %arg26[%c0, %c0_1] : memref<16x32xf32, #tpu.memory_space<vmem>>, vector<16x32xf32>
    %c0_2 = arith.constant 0 : index
    %c0_3 = arith.constant 0 : index
    %4 = vector.load %arg3[%c0_2, %c0_3] : memref<16x1xf32, #tpu.memory_space<vmem>>, vector<16x1xf32>
    %c0_4 = arith.constant 0 : index
    %c0_5 = arith.constant 0 : index
    %c0_6 = arith.constant 0 : index
    %5 = vector.load %arg4[%c0_4, %c0_5, %c0_6] : memref<2x8x8xf32, #tpu.memory_space<vmem>>, vector<2x8x8xf32>
    %c0_7 = arith.constant 0 : index
    %c0_8 = arith.constant 0 : index
    %c0_9 = arith.constant 0 : index
    %6 = vector.load %arg5[%c0_7, %c0_8, %c0_9] : memref<2x8x16xf32, #tpu.memory_space<vmem>>, vector<2x8x16xf32>
    %7 = arith.truncf %3 : vector<16x32xf32> to vector<16x32xbf16>
    %c0_10 = arith.constant 0 : index
    %c0_11 = arith.constant 0 : index
    %c0_12 = arith.constant 0 : index
    %8 = vector.load %arg6[%c0_10, %c0_11, %c0_12] : memref<1x32x96xbf16, #tpu.memory_space<vmem>>, vector<1x32x96xbf16>
    %9 = vector.shape_cast %8 : vector<1x32x96xbf16> to vector<32x96xbf16>
    %cst = arith.constant dense<0.000000e+00> : vector<16x96xf32>
    %10 = tpu.matmul %7, %9, %cst {dimension_numbers = #tpu.dot_dimension_numbers<[1], [0], [0], [1], [0, 0, 1, 1], [], []>} : vector<16x32xbf16>, vector<32x96xbf16>, vector<16x96xf32> -> vector<16x96xf32>
    %c0_13 = arith.constant 0 : index
    %c0_14 = arith.constant 0 : index
    %c0_15 = arith.constant 0 : index
    %11 = vector.load %arg7[%c0_13, %c0_14, %c0_15] : memref<1x1x96xf32, #tpu.memory_space<vmem>>, vector<1x1x96xf32>
    %12 = vector.shape_cast %11 : vector<1x1x96xf32> to vector<1x96xf32>
    %13 = vector.broadcast %12 : vector<1x96xf32> to vector<16x96xf32>
    %14 = arith.addf %10, %13 : vector<16x96xf32>
    %c0_16 = arith.constant 0 : index
    %c0_17 = arith.constant 0 : index
    %c0_18 = arith.constant 0 : index
    %15 = vector.load %arg9[%c0_16, %c0_17, %c0_18] : memref<1x1x32xf32, #tpu.memory_space<vmem>>, vector<1x1x32xf32>
    %16 = vector.shape_cast %15 : vector<1x1x32xf32> to vector<1x32xf32>
    %17 = vector.broadcast %16 : vector<1x32xf32> to vector<16x32xf32>
    %18 = arith.addf %3, %17 : vector<16x32xf32>
    %19 = vector.extract_strided_slice %14 {offsets = [0, 0], sizes = [16, 16], strides = [1, 1]} : vector<16x96xf32> to vector<16x16xf32>
    %20 = vector.shape_cast %19 : vector<16x16xf32> to vector<2x8x16xf32>
    %21 = arith.truncf %20 : vector<2x8x16xf32> to vector<2x8x16xbf16>
    %22 = vector.extract_strided_slice %14 {offsets = [0, 32], sizes = [16, 16], strides = [1, 1]} : vector<16x96xf32> to vector<16x16xf32>
    %23 = vector.shape_cast %22 : vector<16x16xf32> to vector<2x8x16xf32>
    %24 = arith.truncf %23 : vector<2x8x16xf32> to vector<2x8x16xbf16>
    %25 = vector.extract_strided_slice %14 {offsets = [0, 64], sizes = [16, 16], strides = [1, 1]} : vector<16x96xf32> to vector<16x16xf32>
    %26 = vector.shape_cast %25 : vector<16x16xf32> to vector<2x8x16xf32>
    %27 = arith.truncf %26 : vector<2x8x16xf32> to vector<2x8x16xbf16>
    "tpu.trace_start"() <{level = 10 : i32, message = "bqd,bkd->bqk"}> : () -> ()
    %cst_19 = arith.constant dense<0.000000e+00> : vector<2x8x8xf32>
    %28 = tpu.matmul %21, %24, %cst_19 {dimension_numbers = #tpu.dot_dimension_numbers<[2], [2], [1], [1], [0, 0, 0, 1, 1, 1], [0], [0]>} : vector<2x8x16xbf16>, vector<2x8x16xbf16>, vector<2x8x8xf32> -> vector<2x8x8xf32>
    %cst_20 = arith.constant 5.000000e-01 : f32
    "tpu.trace_stop"() : () -> ()
    %29 = vector.broadcast %cst_20 : f32 to vector<2x8x8xf32>
    %30 = arith.cmpf ogt, %5, %29 : vector<2x8x8xf32>
    %cst_21 = arith.constant -1.000000e+30 : f32
    %31 = vector.broadcast %cst_21 : f32 to vector<2x8x8xf32>
    %32 = arith.select %30, %31, %28 : vector<2x8x8xi1>, vector<2x8x8xf32>
    %cst_22 = arith.constant dense<0xFF800000> : vector<2x8xf32>
    %33 = vector.multi_reduction <maximumf>, %32, %cst_22 [2] : vector<2x8x8xf32> to vector<2x8xf32>
    %34 = vector.shape_cast %33 : vector<2x8xf32> to vector<2x8x1xf32>
    %35 = vector.broadcast %34 : vector<2x8x1xf32> to vector<2x8x8xf32>
    %36 = arith.subf %32, %35 : vector<2x8x8xf32>
    %37 = math.exp %36 : vector<2x8x8xf32>
    %cst_23 = arith.constant dense<0.000000e+00> : vector<2x8xf32>
    %38 = vector.multi_reduction <add>, %37, %cst_23 [2] : vector<2x8x8xf32> to vector<2x8xf32>
    %39 = vector.shape_cast %38 : vector<2x8xf32> to vector<2x8x1xf32>
    %40 = tpu.reciprocal %39 {approx = true} : vector<2x8x1xf32> -> vector<2x8x1xf32>
    %41 = vector.broadcast %40 : vector<2x8x1xf32> to vector<2x8x8xf32>
    %42 = arith.mulf %37, %41 : vector<2x8x8xf32>
    %cst_24 = arith.constant 0.000000e+00 : f32
    %43 = vector.broadcast %cst_24 : f32 to vector<2x8x120xf32>
    %44 = tpu.concatenate %42, %43 in 2 : vector<2x8x8xf32>, vector<2x8x120xf32> -> vector<2x8x128xf32>
    %c0_25 = arith.constant 0 : index
    %c0_26 = arith.constant 0 : index
    %c0_27 = arith.constant 0 : index
    %c0_28 = arith.constant 0 : index
    %45 = vector.load %arg27[%c0_25, %c0_26, %c0_27, %c0_28] : memref<1x4x8x128xf32, #tpu.memory_space<vmem>>, vector<1x2x8x128xf32>
    %46 = vector.shape_cast %45 : vector<1x2x8x128xf32> to vector<2x8x128xf32>
    %47 = vector.shape_cast %44 : vector<2x8x128xf32> to vector<1x2x8x128xf32>
    tpu.vector_store %arg27[%c0_25, %c0_26, %c0_27, %c0_28], %47 {strides = array<i32>} : memref<1x4x8x128xf32, #tpu.memory_space<vmem>>, vector<1x2x8x128xf32>,
    %48 = arith.truncf %42 : vector<2x8x8xf32> to vector<2x8x8xbf16>
    "tpu.trace_start"() <{level = 10 : i32, message = "bqk,bkd->bqd"}> : () -> ()
    %cst_29 = arith.constant dense<0.000000e+00> : vector<2x8x16xf32>
    %49 = tpu.matmul %48, %27, %cst_29 {dimension_numbers = #tpu.dot_dimension_numbers<[2], [1], [1], [2], [0, 0, 0, 1, 1, 2], [0], [0]>} : vector<2x8x8xbf16>, vector<2x8x16xbf16>, vector<2x8x16xf32> -> vector<2x8x16xf32>
    "tpu.trace_stop"() : () -> ()
    %50 = vector.shape_cast %49 : vector<2x8x16xf32> to vector<16x16xf32>
    %51 = arith.truncf %50 : vector<16x16xf32> to vector<16x16xbf16>
    %c0_30 = arith.constant 0 : index
    %c0_31 = arith.constant 0 : index
    %c0_32 = arith.constant 0 : index
    %c0_33 = arith.constant 0 : index
    %52 = vector.load %arg8[%c0_30, %c0_31, %c0_32, %c0_33] : memref<1x2x16x32xbf16, #tpu.memory_space<vmem>>, vector<1x1x16x32xbf16>
    %53 = vector.shape_cast %52 : vector<1x1x16x32xbf16> to vector<16x32xbf16>
    %cst_34 = arith.constant dense<0.000000e+00> : vector<16x32xf32>
    %54 = tpu.matmul %51, %53, %cst_34 {dimension_numbers = #tpu.dot_dimension_numbers<[1], [0], [0], [1], [0, 0, 1, 1], [], []>} : vector<16x16xbf16>, vector<16x32xbf16>, vector<16x32xf32> -> vector<16x32xf32>
    %55 = arith.addf %18, %54 : vector<16x32xf32>
    %56 = vector.extract_strided_slice %14 {offsets = [0, 16], sizes = [16, 16], strides = [1, 1]} : vector<16x96xf32> to vector<16x16xf32>
    %57 = vector.shape_cast %56 : vector<16x16xf32> to vector<2x8x16xf32>
    %58 = arith.truncf %57 : vector<2x8x16xf32> to vector<2x8x16xbf16>
    %59 = vector.extract_strided_slice %14 {offsets = [0, 48], sizes = [16, 16], strides = [1, 1]} : vector<16x96xf32> to vector<16x16xf32>
    %60 = vector.shape_cast %59 : vector<16x16xf32> to vector<2x8x16xf32>
    %61 = arith.truncf %60 : vector<2x8x16xf32> to vector<2x8x16xbf16>
    %62 = vector.extract_strided_slice %14 {offsets = [0, 80], sizes = [16, 16], strides = [1, 1]} : vector<16x96xf32> to vector<16x16xf32>
    %63 = vector.shape_cast %62 : vector<16x16xf32> to vector<2x8x16xf32>
    %64 = arith.truncf %63 : vector<2x8x16xf32> to vector<2x8x16xbf16>
    "tpu.trace_start"() <{level = 10 : i32, message = "bqd,bkd->bqk"}> : () -> ()
    %cst_35 = arith.constant dense<0.000000e+00> : vector<2x8x8xf32>
    %65 = tpu.matmul %58, %61, %cst_35 {dimension_numbers = #tpu.dot_dimension_numbers<[2], [2], [1], [1], [0, 0, 0, 1, 1, 1], [0], [0]>} : vector<2x8x16xbf16>, vector<2x8x16xbf16>, vector<2x8x8xf32> -> vector<2x8x8xf32>
    %cst_36 = arith.constant 5.000000e-01 : f32
    "tpu.trace_stop"() : () -> ()
    %66 = vector.broadcast %cst_36 : f32 to vector<2x8x8xf32>
    %67 = arith.cmpf ogt, %5, %66 : vector<2x8x8xf32>
    %cst_37 = arith.constant -1.000000e+30 : f32
    %68 = vector.broadcast %cst_37 : f32 to vector<2x8x8xf32>
    %69 = arith.select %67, %68, %65 : vector<2x8x8xi1>, vector<2x8x8xf32>
    %cst_38 = arith.constant dense<0xFF800000> : vector<2x8xf32>
    %70 = vector.multi_reduction <maximumf>, %69, %cst_38 [2] : vector<2x8x8xf32> to vector<2x8xf32>
    %71 = vector.shape_cast %70 : vector<2x8xf32> to vector<2x8x1xf32>
    %72 = vector.broadcast %71 : vector<2x8x1xf32> to vector<2x8x8xf32>
    %73 = arith.subf %69, %72 : vector<2x8x8xf32>
    %74 = math.exp %73 : vector<2x8x8xf32>
    %cst_39 = arith.constant dense<0.000000e+00> : vector<2x8xf32>
    %75 = vector.multi_reduction <add>, %74, %cst_39 [2] : vector<2x8x8xf32> to vector<2x8xf32>
    %76 = vector.shape_cast %75 : vector<2x8xf32> to vector<2x8x1xf32>
    %77 = tpu.reciprocal %76 {approx = true} : vector<2x8x1xf32> -> vector<2x8x1xf32>
    %78 = vector.broadcast %77 : vector<2x8x1xf32> to vector<2x8x8xf32>
    %79 = arith.mulf %74, %78 : vector<2x8x8xf32>
    %cst_40 = arith.constant 0.000000e+00 : f32
    %80 = vector.broadcast %cst_40 : f32 to vector<2x8x120xf32>
    %81 = tpu.concatenate %79, %80 in 2 : vector<2x8x8xf32>, vector<2x8x120xf32> -> vector<2x8x128xf32>
    %c0_41 = arith.constant 0 : index
    %c2 = arith.constant 2 : index
    %c0_42 = arith.constant 0 : index
    %c0_43 = arith.constant 0 : index
    %82 = vector.load %arg27[%c0_41, %c2, %c0_42, %c0_43] : memref<1x4x8x128xf32, #tpu.memory_space<vmem>>, vector<1x2x8x128xf32>
    %83 = vector.shape_cast %82 : vector<1x2x8x128xf32> to vector<2x8x128xf32>
    %84 = vector.shape_cast %81 : vector<2x8x128xf32> to vector<1x2x8x128xf32>
    tpu.vector_store %arg27[%c0_41, %c2, %c0_42, %c0_43], %84 {strides = array<i32>} : memref<1x4x8x128xf32, #tpu.memory_space<vmem>>, vector<1x2x8x128xf32>,
    %85 = arith.truncf %79 : vector<2x8x8xf32> to vector<2x8x8xbf16>
    "tpu.trace_start"() <{level = 10 : i32, message = "bqk,bkd->bqd"}> : () -> ()
    %cst_44 = arith.constant dense<0.000000e+00> : vector<2x8x16xf32>
    %86 = tpu.matmul %85, %64, %cst_44 {dimension_numbers = #tpu.dot_dimension_numbers<[2], [1], [1], [2], [0, 0, 0, 1, 1, 2], [0], [0]>} : vector<2x8x8xbf16>, vector<2x8x16xbf16>, vector<2x8x16xf32> -> vector<2x8x16xf32>
    "tpu.trace_stop"() : () -> ()
    %87 = vector.shape_cast %86 : vector<2x8x16xf32> to vector<16x16xf32>
    %88 = arith.truncf %87 : vector<16x16xf32> to vector<16x16xbf16>
    %c0_45 = arith.constant 0 : index
    %c1 = arith.constant 1 : index
    %c0_46 = arith.constant 0 : index
    %c0_47 = arith.constant 0 : index
    %89 = vector.load %arg8[%c0_45, %c1, %c0_46, %c0_47] : memref<1x2x16x32xbf16, #tpu.memory_space<vmem>>, vector<1x1x16x32xbf16>
    %90 = vector.shape_cast %89 : vector<1x1x16x32xbf16> to vector<16x32xbf16>
    %cst_48 = arith.constant dense<0.000000e+00> : vector<16x32xf32>
    %91 = tpu.matmul %88, %90, %cst_48 {dimension_numbers = #tpu.dot_dimension_numbers<[1], [0], [0], [1], [0, 0, 1, 1], [], []>} : vector<16x16xbf16>, vector<16x32xbf16>, vector<16x32xf32> -> vector<16x32xf32>
    %92 = arith.addf %55, %91 : vector<16x32xf32>
    %c0_49 = arith.constant 0 : index
    %c0_50 = arith.constant 0 : index
    %c0_51 = arith.constant 0 : index
    %93 = vector.load %arg10[%c0_49, %c0_50, %c0_51] : memref<1x1x32xf32, #tpu.memory_space<vmem>>, vector<1x1x32xf32>
    %94 = vector.shape_cast %93 : vector<1x1x32xf32> to vector<1x32xf32>
    %c0_52 = arith.constant 0 : index
    %c0_53 = arith.constant 0 : index
    %c0_54 = arith.constant 0 : index
    %95 = vector.load %arg11[%c0_52, %c0_53, %c0_54] : memref<1x1x32xf32, #tpu.memory_space<vmem>>, vector<1x1x32xf32>
    %96 = vector.shape_cast %95 : vector<1x1x32xf32> to vector<1x32xf32>
    %cst_55 = arith.constant dense<0.000000e+00> : vector<16xf32>
    %97 = vector.multi_reduction <add>, %92, %cst_55 [1] : vector<16x32xf32> to vector<16xf32>
    %98 = vector.shape_cast %97 : vector<16xf32> to vector<16x1xf32>
    %cst_56 = arith.constant 3.200000e+01 : f32
    %99 = vector.broadcast %cst_56 : f32 to vector<16x1xf32>
    %100 = arith.divf %98, %99 : vector<16x1xf32>
    %101 = vector.broadcast %100 : vector<16x1xf32> to vector<16x32xf32>
    %102 = arith.subf %92, %101 : vector<16x32xf32>
    %103 = arith.mulf %102, %102 : vector<16x32xf32>
    %cst_57 = arith.constant dense<0.000000e+00> : vector<16xf32>
    %104 = vector.multi_reduction <add>, %103, %cst_57 [1] : vector<16x32xf32> to vector<16xf32>
    %105 = vector.shape_cast %104 : vector<16xf32> to vector<16x1xf32>
    %cst_58 = arith.constant 3.200000e+01 : f32
    %106 = vector.broadcast %cst_58 : f32 to vector<16x1xf32>
    %107 = arith.divf %105, %106 : vector<16x1xf32>
    %108 = vector.broadcast %100 : vector<16x1xf32> to vector<16x32xf32>
    %109 = arith.subf %92, %108 : vector<16x32xf32>
    %cst_59 = arith.constant 9.99999974E-6 : f32
    %110 = vector.broadcast %cst_59 : f32 to vector<16x1xf32>
    %111 = arith.addf %107, %110 : vector<16x1xf32>
    %112 = math.rsqrt %111 : vector<16x1xf32>
    %113 = vector.broadcast %112 : vector<16x1xf32> to vector<16x32xf32>
    %114 = arith.mulf %109, %113 : vector<16x32xf32>
    %115 = vector.broadcast %94 : vector<1x32xf32> to vector<16x32xf32>
    %116 = arith.mulf %114, %115 : vector<16x32xf32>
    %117 = vector.broadcast %96 : vector<1x32xf32> to vector<16x32xf32>
    %118 = arith.addf %116, %117 : vector<16x32xf32>
    %119 = vector.broadcast %4 : vector<16x1xf32> to vector<16x32xf32>
    %120 = arith.mulf %118, %119 : vector<16x32xf32>
    %121 = arith.truncf %120 : vector<16x32xf32> to vector<16x32xbf16>
    %c0_60 = arith.constant 0 : index
    %c0_61 = arith.constant 0 : index
    %c0_62 = arith.constant 0 : index
    %122 = vector.load %arg12[%c0_60, %c0_61, %c0_62] : memref<1x32x32xbf16, #tpu.memory_space<vmem>>, vector<1x32x32xbf16>
    %123 = vector.shape_cast %122 : vector<1x32x32xbf16> to vector<32x32xbf16>
    %cst_63 = arith.constant dense<0.000000e+00> : vector<16x32xf32>
    %124 = tpu.matmul %121, %123, %cst_63 {dimension_numbers = #tpu.dot_dimension_numbers<[1], [0], [0], [1], [0, 0, 1, 1], [], []>} : vector<16x32xbf16>, vector<32x32xbf16>, vector<16x32xf32> -> vector<16x32xf32>
    %c0_64 = arith.constant 0 : index
    %c0_65 = arith.constant 0 : index
    %c0_66 = arith.constant 0 : index
    %125 = vector.load %arg13[%c0_64, %c0_65, %c0_66] : memref<1x1x32xf32, #tpu.memory_space<vmem>>, vector<1x1x32xf32>
    %126 = vector.shape_cast %125 : vector<1x1x32xf32> to vector<1x32xf32>
    %127 = vector.broadcast %126 : vector<1x32xf32> to vector<16x32xf32>
    %128 = arith.addf %124, %127 : vector<16x32xf32>
    %c0_67 = arith.constant 0 : index
    %c0_68 = arith.constant 0 : index
    %129 = vector.load %arg2[%c0_67, %c0_68] : memref<32x32xf32, #tpu.memory_space<vmem>>, vector<32x32xf32>
    %130 = arith.truncf %129 : vector<32x32xf32> to vector<32x32xbf16>
    %c0_69 = arith.constant 0 : index
    %c0_70 = arith.constant 0 : index
    %c0_71 = arith.constant 0 : index
    %131 = vector.load %arg14[%c0_69, %c0_70, %c0_71] : memref<1x32x64xbf16, #tpu.memory_space<vmem>>, vector<1x32x64xbf16>
    %132 = vector.shape_cast %131 : vector<1x32x64xbf16> to vector<32x64xbf16>
    %cst_72 = arith.constant dense<0.000000e+00> : vector<32x64xf32>
    %133 = tpu.matmul %130, %132, %cst_72 {dimension_numbers = #tpu.dot_dimension_numbers<[1], [0], [0], [1], [0, 0, 1, 1], [], []>} : vector<32x32xbf16>, vector<32x64xbf16>, vector<32x64xf32> -> vector<32x64xf32>
    %c0_73 = arith.constant 0 : index
    %c0_74 = arith.constant 0 : index
    %c0_75 = arith.constant 0 : index
    %134 = vector.load %arg15[%c0_73, %c0_74, %c0_75] : memref<1x1x64xf32, #tpu.memory_space<vmem>>, vector<1x1x64xf32>
    %135 = vector.shape_cast %134 : vector<1x1x64xf32> to vector<1x64xf32>
    %136 = vector.broadcast %135 : vector<1x64xf32> to vector<32x64xf32>
    %137 = arith.addf %133, %136 : vector<32x64xf32>
    %c0_76 = arith.constant 0 : index
    %c0_77 = arith.constant 0 : index
    %c0_78 = arith.constant 0 : index
    %138 = vector.load %arg17[%c0_76, %c0_77, %c0_78] : memref<1x1x32xf32, #tpu.memory_space<vmem>>, vector<1x1x32xf32>
    %139 = vector.shape_cast %138 : vector<1x1x32xf32> to vector<1x32xf32>
    %140 = vector.broadcast %139 : vector<1x32xf32> to vector<16x32xf32>
    %141 = arith.addf %120, %140 : vector<16x32xf32>
    %142 = vector.extract_strided_slice %128 {offsets = [0, 0], sizes = [16, 16], strides = [1, 1]} : vector<16x32xf32> to vector<16x16xf32>
    %143 = vector.shape_cast %142 : vector<16x16xf32> to vector<2x8x16xf32>
    %144 = arith.truncf %143 : vector<2x8x16xf32> to vector<2x8x16xbf16>
    %145 = vector.extract_strided_slice %137 {offsets = [0, 0], sizes = [32, 16], strides = [1, 1]} : vector<32x64xf32> to vector<32x16xf32>
    %146 = vector.shape_cast %145 : vector<32x16xf32> to vector<2x16x16xf32>
    %147 = arith.truncf %146 : vector<2x16x16xf32> to vector<2x16x16xbf16>
    %148 = vector.extract_strided_slice %137 {offsets = [0, 32], sizes = [32, 16], strides = [1, 1]} : vector<32x64xf32> to vector<32x16xf32>
    %149 = vector.shape_cast %148 : vector<32x16xf32> to vector<2x16x16xf32>
    %150 = arith.truncf %149 : vector<2x16x16xf32> to vector<2x16x16xbf16>
    "tpu.trace_start"() <{level = 10 : i32, message = "bqd,bkd->bqk"}> : () -> ()
    %cst_79 = arith.constant dense<0.000000e+00> : vector<2x8x16xf32>
    %151 = tpu.matmul %144, %147, %cst_79 {dimension_numbers = #tpu.dot_dimension_numbers<[2], [2], [1], [1], [0, 0, 0, 1, 1, 1], [0], [0]>} : vector<2x8x16xbf16>, vector<2x16x16xbf16>, vector<2x8x16xf32> -> vector<2x8x16xf32>
    %cst_80 = arith.constant 5.000000e-01 : f32
    "tpu.trace_stop"() : () -> ()
    %152 = vector.broadcast %cst_80 : f32 to vector<2x8x16xf32>
    %153 = arith.cmpf ogt, %6, %152 : vector<2x8x16xf32>
    %cst_81 = arith.constant -1.000000e+30 : f32
    %154 = vector.broadcast %cst_81 : f32 to vector<2x8x16xf32>
    %155 = arith.select %153, %154, %151 : vector<2x8x16xi1>, vector<2x8x16xf32>
    %cst_82 = arith.constant dense<0xFF800000> : vector<2x8xf32>
    %156 = vector.multi_reduction <maximumf>, %155, %cst_82 [2] : vector<2x8x16xf32> to vector<2x8xf32>
    %157 = vector.shape_cast %156 : vector<2x8xf32> to vector<2x8x1xf32>
    %158 = vector.broadcast %157 : vector<2x8x1xf32> to vector<2x8x16xf32>
    %159 = arith.subf %155, %158 : vector<2x8x16xf32>
    %160 = math.exp %159 : vector<2x8x16xf32>
    %cst_83 = arith.constant dense<0.000000e+00> : vector<2x8xf32>
    %161 = vector.multi_reduction <add>, %160, %cst_83 [2] : vector<2x8x16xf32> to vector<2x8xf32>
    %162 = vector.shape_cast %161 : vector<2x8xf32> to vector<2x8x1xf32>
    %163 = tpu.reciprocal %162 {approx = true} : vector<2x8x1xf32> -> vector<2x8x1xf32>
    %164 = vector.broadcast %163 : vector<2x8x1xf32> to vector<2x8x16xf32>
    %165 = arith.mulf %160, %164 : vector<2x8x16xf32>
    %cst_84 = arith.constant 0.000000e+00 : f32
    %166 = vector.broadcast %cst_84 : f32 to vector<2x8x112xf32>
    %167 = tpu.concatenate %165, %166 in 2 : vector<2x8x16xf32>, vector<2x8x112xf32> -> vector<2x8x128xf32>
    %c0_85 = arith.constant 0 : index
    %c0_86 = arith.constant 0 : index
    %c0_87 = arith.constant 0 : index
    %c0_88 = arith.constant 0 : index
    %168 = vector.load %arg28[%c0_85, %c0_86, %c0_87, %c0_88] : memref<1x4x8x128xf32, #tpu.memory_space<vmem>>, vector<1x2x8x128xf32>
    %169 = vector.shape_cast %168 : vector<1x2x8x128xf32> to vector<2x8x128xf32>
    %170 = vector.shape_cast %167 : vector<2x8x128xf32> to vector<1x2x8x128xf32>
    tpu.vector_store %arg28[%c0_85, %c0_86, %c0_87, %c0_88], %170 {strides = array<i32>} : memref<1x4x8x128xf32, #tpu.memory_space<vmem>>, vector<1x2x8x128xf32>,
    %171 = arith.truncf %165 : vector<2x8x16xf32> to vector<2x8x16xbf16>
    "tpu.trace_start"() <{level = 10 : i32, message = "bqk,bkd->bqd"}> : () -> ()
    %cst_89 = arith.constant dense<0.000000e+00> : vector<2x8x16xf32>
    %172 = tpu.matmul %171, %150, %cst_89 {dimension_numbers = #tpu.dot_dimension_numbers<[2], [1], [1], [2], [0, 0, 0, 1, 1, 2], [0], [0]>} : vector<2x8x16xbf16>, vector<2x16x16xbf16>, vector<2x8x16xf32> -> vector<2x8x16xf32>
    "tpu.trace_stop"() : () -> ()
    %173 = vector.shape_cast %172 : vector<2x8x16xf32> to vector<16x16xf32>
    %174 = arith.truncf %173 : vector<16x16xf32> to vector<16x16xbf16>
    %c0_90 = arith.constant 0 : index
    %c0_91 = arith.constant 0 : index
    %c0_92 = arith.constant 0 : index
    %c0_93 = arith.constant 0 : index
    %175 = vector.load %arg16[%c0_90, %c0_91, %c0_92, %c0_93] : memref<1x2x16x32xbf16, #tpu.memory_space<vmem>>, vector<1x1x16x32xbf16>
    %176 = vector.shape_cast %175 : vector<1x1x16x32xbf16> to vector<16x32xbf16>
    %cst_94 = arith.constant dense<0.000000e+00> : vector<16x32xf32>
    %177 = tpu.matmul %174, %176, %cst_94 {dimension_numbers = #tpu.dot_dimension_numbers<[1], [0], [0], [1], [0, 0, 1, 1], [], []>} : vector<16x16xbf16>, vector<16x32xbf16>, vector<16x32xf32> -> vector<16x32xf32>
    %178 = arith.addf %141, %177 : vector<16x32xf32>
    %179 = vector.extract_strided_slice %128 {offsets = [0, 16], sizes = [16, 16], strides = [1, 1]} : vector<16x32xf32> to vector<16x16xf32>
    %180 = vector.shape_cast %179 : vector<16x16xf32> to vector<2x8x16xf32>
    %181 = arith.truncf %180 : vector<2x8x16xf32> to vector<2x8x16xbf16>
    %182 = vector.extract_strided_slice %137 {offsets = [0, 16], sizes = [32, 16], strides = [1, 1]} : vector<32x64xf32> to vector<32x16xf32>
    %183 = vector.shape_cast %182 : vector<32x16xf32> to vector<2x16x16xf32>
    %184 = arith.truncf %183 : vector<2x16x16xf32> to vector<2x16x16xbf16>
    %185 = vector.extract_strided_slice %137 {offsets = [0, 48], sizes = [32, 16], strides = [1, 1]} : vector<32x64xf32> to vector<32x16xf32>
    %186 = vector.shape_cast %185 : vector<32x16xf32> to vector<2x16x16xf32>
    %187 = arith.truncf %186 : vector<2x16x16xf32> to vector<2x16x16xbf16>
    "tpu.trace_start"() <{level = 10 : i32, message = "bqd,bkd->bqk"}> : () -> ()
    %cst_95 = arith.constant dense<0.000000e+00> : vector<2x8x16xf32>
    %188 = tpu.matmul %181, %184, %cst_95 {dimension_numbers = #tpu.dot_dimension_numbers<[2], [2], [1], [1], [0, 0, 0, 1, 1, 1], [0], [0]>} : vector<2x8x16xbf16>, vector<2x16x16xbf16>, vector<2x8x16xf32> -> vector<2x8x16xf32>
    %cst_96 = arith.constant 5.000000e-01 : f32
    "tpu.trace_stop"() : () -> ()
    %189 = vector.broadcast %cst_96 : f32 to vector<2x8x16xf32>
    %190 = arith.cmpf ogt, %6, %189 : vector<2x8x16xf32>
    %cst_97 = arith.constant -1.000000e+30 : f32
    %191 = vector.broadcast %cst_97 : f32 to vector<2x8x16xf32>
    %192 = arith.select %190, %191, %188 : vector<2x8x16xi1>, vector<2x8x16xf32>
    %cst_98 = arith.constant dense<0xFF800000> : vector<2x8xf32>
    %193 = vector.multi_reduction <maximumf>, %192, %cst_98 [2] : vector<2x8x16xf32> to vector<2x8xf32>
    %194 = vector.shape_cast %193 : vector<2x8xf32> to vector<2x8x1xf32>
    %195 = vector.broadcast %194 : vector<2x8x1xf32> to vector<2x8x16xf32>
    %196 = arith.subf %192, %195 : vector<2x8x16xf32>
    %197 = math.exp %196 : vector<2x8x16xf32>
    %cst_99 = arith.constant dense<0.000000e+00> : vector<2x8xf32>
    %198 = vector.multi_reduction <add>, %197, %cst_99 [2] : vector<2x8x16xf32> to vector<2x8xf32>
    %199 = vector.shape_cast %198 : vector<2x8xf32> to vector<2x8x1xf32>
    %200 = tpu.reciprocal %199 {approx = true} : vector<2x8x1xf32> -> vector<2x8x1xf32>
    %201 = vector.broadcast %200 : vector<2x8x1xf32> to vector<2x8x16xf32>
    %202 = arith.mulf %197, %201 : vector<2x8x16xf32>
    %cst_100 = arith.constant 0.000000e+00 : f32
    %203 = vector.broadcast %cst_100 : f32 to vector<2x8x112xf32>
    %204 = tpu.concatenate %202, %203 in 2 : vector<2x8x16xf32>, vector<2x8x112xf32> -> vector<2x8x128xf32>
    %c0_101 = arith.constant 0 : index
    %c2_102 = arith.constant 2 : index
    %c0_103 = arith.constant 0 : index
    %c0_104 = arith.constant 0 : index
    %205 = vector.load %arg28[%c0_101, %c2_102, %c0_103, %c0_104] : memref<1x4x8x128xf32, #tpu.memory_space<vmem>>, vector<1x2x8x128xf32>
    %206 = vector.shape_cast %205 : vector<1x2x8x128xf32> to vector<2x8x128xf32>
    %207 = vector.shape_cast %204 : vector<2x8x128xf32> to vector<1x2x8x128xf32>
    tpu.vector_store %arg28[%c0_101, %c2_102, %c0_103, %c0_104], %207 {strides = array<i32>} : memref<1x4x8x128xf32, #tpu.memory_space<vmem>>, vector<1x2x8x128xf32>,
    %208 = arith.truncf %202 : vector<2x8x16xf32> to vector<2x8x16xbf16>
    "tpu.trace_start"() <{level = 10 : i32, message = "bqk,bkd->bqd"}> : () -> ()
    %cst_105 = arith.constant dense<0.000000e+00> : vector<2x8x16xf32>
    %209 = tpu.matmul %208, %187, %cst_105 {dimension_numbers = #tpu.dot_dimension_numbers<[2], [1], [1], [2], [0, 0, 0, 1, 1, 2], [0], [0]>} : vector<2x8x16xbf16>, vector<2x16x16xbf16>, vector<2x8x16xf32> -> vector<2x8x16xf32>
    "tpu.trace_stop"() : () -> ()
    %210 = vector.shape_cast %209 : vector<2x8x16xf32> to vector<16x16xf32>
    %211 = arith.truncf %210 : vector<16x16xf32> to vector<16x16xbf16>
    %c0_106 = arith.constant 0 : index
    %c1_107 = arith.constant 1 : index
    %c0_108 = arith.constant 0 : index
    %c0_109 = arith.constant 0 : index
    %212 = vector.load %arg16[%c0_106, %c1_107, %c0_108, %c0_109] : memref<1x2x16x32xbf16, #tpu.memory_space<vmem>>, vector<1x1x16x32xbf16>
    %213 = vector.shape_cast %212 : vector<1x1x16x32xbf16> to vector<16x32xbf16>
    %cst_110 = arith.constant dense<0.000000e+00> : vector<16x32xf32>
    %214 = tpu.matmul %211, %213, %cst_110 {dimension_numbers = #tpu.dot_dimension_numbers<[1], [0], [0], [1], [0, 0, 1, 1], [], []>} : vector<16x16xbf16>, vector<16x32xbf16>, vector<16x32xf32> -> vector<16x32xf32>
    %215 = arith.addf %178, %214 : vector<16x32xf32>
    %c0_111 = arith.constant 0 : index
    %c0_112 = arith.constant 0 : index
    %c0_113 = arith.constant 0 : index
    %216 = vector.load %arg18[%c0_111, %c0_112, %c0_113] : memref<1x1x32xf32, #tpu.memory_space<vmem>>, vector<1x1x32xf32>
    %217 = vector.shape_cast %216 : vector<1x1x32xf32> to vector<1x32xf32>
    %c0_114 = arith.constant 0 : index
    %c0_115 = arith.constant 0 : index
    %c0_116 = arith.constant 0 : index
    %218 = vector.load %arg19[%c0_114, %c0_115, %c0_116] : memref<1x1x32xf32, #tpu.memory_space<vmem>>, vector<1x1x32xf32>
    %219 = vector.shape_cast %218 : vector<1x1x32xf32> to vector<1x32xf32>
    %cst_117 = arith.constant dense<0.000000e+00> : vector<16xf32>
    %220 = vector.multi_reduction <add>, %215, %cst_117 [1] : vector<16x32xf32> to vector<16xf32>
    %221 = vector.shape_cast %220 : vector<16xf32> to vector<16x1xf32>
    %cst_118 = arith.constant 3.200000e+01 : f32
    %222 = vector.broadcast %cst_118 : f32 to vector<16x1xf32>
    %223 = arith.divf %221, %222 : vector<16x1xf32>
    %224 = vector.broadcast %223 : vector<16x1xf32> to vector<16x32xf32>
    %225 = arith.subf %215, %224 : vector<16x32xf32>
    %226 = arith.mulf %225, %225 : vector<16x32xf32>
    %cst_119 = arith.constant dense<0.000000e+00> : vector<16xf32>
    %227 = vector.multi_reduction <add>, %226, %cst_119 [1] : vector<16x32xf32> to vector<16xf32>
    %228 = vector.shape_cast %227 : vector<16xf32> to vector<16x1xf32>
    %cst_120 = arith.constant 3.200000e+01 : f32
    %229 = vector.broadcast %cst_120 : f32 to vector<16x1xf32>
    %230 = arith.divf %228, %229 : vector<16x1xf32>
    %231 = vector.broadcast %223 : vector<16x1xf32> to vector<16x32xf32>
    %232 = arith.subf %215, %231 : vector<16x32xf32>
    %cst_121 = arith.constant 9.99999974E-6 : f32
    %233 = vector.broadcast %cst_121 : f32 to vector<16x1xf32>
    %234 = arith.addf %230, %233 : vector<16x1xf32>
    %235 = math.rsqrt %234 : vector<16x1xf32>
    %236 = vector.broadcast %235 : vector<16x1xf32> to vector<16x32xf32>
    %237 = arith.mulf %232, %236 : vector<16x32xf32>
    %238 = vector.broadcast %217 : vector<1x32xf32> to vector<16x32xf32>
    %239 = arith.mulf %237, %238 : vector<16x32xf32>
    %240 = vector.broadcast %219 : vector<1x32xf32> to vector<16x32xf32>
    %241 = arith.addf %239, %240 : vector<16x32xf32>
    %242 = vector.broadcast %4 : vector<16x1xf32> to vector<16x32xf32>
    %243 = arith.mulf %241, %242 : vector<16x32xf32>
    %244 = arith.truncf %243 : vector<16x32xf32> to vector<16x32xbf16>
    %c0_122 = arith.constant 0 : index
    %c0_123 = arith.constant 0 : index
    %c0_124 = arith.constant 0 : index
    %245 = vector.load %arg20[%c0_122, %c0_123, %c0_124] : memref<1x32x64xbf16, #tpu.memory_space<vmem>>, vector<1x32x64xbf16>
    %246 = vector.shape_cast %245 : vector<1x32x64xbf16> to vector<32x64xbf16>
    %cst_125 = arith.constant dense<0.000000e+00> : vector<16x64xf32>
    %247 = tpu.matmul %244, %246, %cst_125 {dimension_numbers = #tpu.dot_dimension_numbers<[1], [0], [0], [1], [0, 0, 1, 1], [], []>} : vector<16x32xbf16>, vector<32x64xbf16>, vector<16x64xf32> -> vector<16x64xf32>
    %c0_126 = arith.constant 0 : index
    %c0_127 = arith.constant 0 : index
    %c0_128 = arith.constant 0 : index
    %248 = vector.load %arg21[%c0_126, %c0_127, %c0_128] : memref<1x1x64xf32, #tpu.memory_space<vmem>>, vector<1x1x64xf32>
    %249 = vector.shape_cast %248 : vector<1x1x64xf32> to vector<1x64xf32>
    %250 = vector.broadcast %249 : vector<1x64xf32> to vector<16x64xf32>
    %251 = arith.addf %247, %250 : vector<16x64xf32>
    %cst_129 = arith.constant 0.000000e+00 : f32
    %252 = vector.broadcast %cst_129 : f32 to vector<16x64xf32>
    %253 = arith.maximumf %251, %252 : vector<16x64xf32>
    %254 = arith.truncf %253 : vector<16x64xf32> to vector<16x64xbf16>
    %c0_130 = arith.constant 0 : index
    %c0_131 = arith.constant 0 : index
    %c0_132 = arith.constant 0 : index
    %255 = vector.load %arg22[%c0_130, %c0_131, %c0_132] : memref<1x64x32xbf16, #tpu.memory_space<vmem>>, vector<1x64x32xbf16>
    %256 = vector.shape_cast %255 : vector<1x64x32xbf16> to vector<64x32xbf16>
    %cst_133 = arith.constant dense<0.000000e+00> : vector<16x32xf32>
    %257 = tpu.matmul %254, %256, %cst_133 {dimension_numbers = #tpu.dot_dimension_numbers<[1], [0], [0], [1], [0, 0, 1, 1], [], []>} : vector<16x64xbf16>, vector<64x32xbf16>, vector<16x32xf32> -> vector<16x32xf32>
    %c0_134 = arith.constant 0 : index
    %c0_135 = arith.constant 0 : index
    %c0_136 = arith.constant 0 : index
    %258 = vector.load %arg23[%c0_134, %c0_135, %c0_136] : memref<1x1x32xf32, #tpu.memory_space<vmem>>, vector<1x1x32xf32>
    %259 = vector.shape_cast %258 : vector<1x1x32xf32> to vector<1x32xf32>
    %260 = vector.broadcast %259 : vector<1x32xf32> to vector<16x32xf32>
    %261 = arith.addf %257, %260 : vector<16x32xf32>
    %262 = arith.addf %261, %243 : vector<16x32xf32>
    %c0_137 = arith.constant 0 : index
    %c0_138 = arith.constant 0 : index
    %c0_139 = arith.constant 0 : index
    %263 = vector.load %arg24[%c0_137, %c0_138, %c0_139] : memref<1x1x32xf32, #tpu.memory_space<vmem>>, vector<1x1x32xf32>
    %264 = vector.shape_cast %263 : vector<1x1x32xf32> to vector<1x32xf32>
    %c0_140 = arith.constant 0 : index
    %c0_141 = arith.constant 0 : index
    %c0_142 = arith.constant 0 : index
    %265 = vector.load %arg25[%c0_140, %c0_141, %c0_142] : memref<1x1x32xf32, #tpu.memory_space<vmem>>, vector<1x1x32xf32>
    %266 = vector.shape_cast %265 : vector<1x1x32xf32> to vector<1x32xf32>
    %cst_143 = arith.constant dense<0.000000e+00> : vector<16xf32>
    %267 = vector.multi_reduction <add>, %262, %cst_143 [1] : vector<16x32xf32> to vector<16xf32>
    %268 = vector.shape_cast %267 : vector<16xf32> to vector<16x1xf32>
    %cst_144 = arith.constant 3.200000e+01 : f32
    %269 = vector.broadcast %cst_144 : f32 to vector<16x1xf32>
    %270 = arith.divf %268, %269 : vector<16x1xf32>
    %271 = vector.broadcast %270 : vector<16x1xf32> to vector<16x32xf32>
    %272 = arith.subf %262, %271 : vector<16x32xf32>
    %273 = arith.mulf %272, %272 : vector<16x32xf32>
    %cst_145 = arith.constant dense<0.000000e+00> : vector<16xf32>
    %274 = vector.multi_reduction <add>, %273, %cst_145 [1] : vector<16x32xf32> to vector<16xf32>
    %275 = vector.shape_cast %274 : vector<16xf32> to vector<16x1xf32>
    %cst_146 = arith.constant 3.200000e+01 : f32
    %276 = vector.broadcast %cst_146 : f32 to vector<16x1xf32>
    %277 = arith.divf %275, %276 : vector<16x1xf32>
    %278 = vector.broadcast %270 : vector<16x1xf32> to vector<16x32xf32>
    %279 = arith.subf %262, %278 : vector<16x32xf32>
    %cst_147 = arith.constant 9.99999974E-6 : f32
    %280 = vector.broadcast %cst_147 : f32 to vector<16x1xf32>
    %281 = arith.addf %277, %280 : vector<16x1xf32>
    %282 = math.rsqrt %281 : vector<16x1xf32>
    %283 = vector.broadcast %282 : vector<16x1xf32> to vector<16x32xf32>
    %284 = arith.mulf %279, %283 : vector<16x32xf32>
    %285 = vector.broadcast %264 : vector<1x32xf32> to vector<16x32xf32>
    %286 = arith.mulf %284, %285 : vector<16x32xf32>
    %287 = vector.broadcast %266 : vector<1x32xf32> to vector<16x32xf32>
    %288 = arith.addf %286, %287 : vector<16x32xf32>
    %289 = vector.broadcast %4 : vector<16x1xf32> to vector<16x32xf32>
    %290 = arith.mulf %288, %289 : vector<16x32xf32>
    %c0_148 = arith.constant 0 : index
    %c0_149 = arith.constant 0 : index
    %291 = vector.load %arg26[%c0_148, %c0_149] : memref<16x32xf32, #tpu.memory_space<vmem>>, vector<16x32xf32>
    tpu.vector_store %arg26[%c0_148, %c0_149], %290 {strides = array<i32>} : memref<16x32xf32, #tpu.memory_space<vmem>>, vector<16x32xf32>,
    return
  }
  func.func @transform_0(%arg0: i32) -> (i32, i32) {
    %c0_i32 = arith.constant 0 : i32
    %c0_i32_0 = arith.constant 0 : i32
    %c0_i32_1 = arith.constant 0 : i32
    return %c0_i32, %c0_i32_0 : i32, i32
  }
  func.func @transform_1(%arg0: i32) -> (i32, i32) {
    %c0_i32 = arith.constant 0 : i32
    %c0_i32_0 = arith.constant 0 : i32
    %c0_i32_1 = arith.constant 0 : i32
    return %c0_i32, %c0_i32_0 : i32, i32
  }
  func.func @transform_2(%arg0: i32) -> (i32, i32) {
    %c0_i32 = arith.constant 0 : i32
    %c0_i32_0 = arith.constant 0 : i32
    %c0_i32_1 = arith.constant 0 : i32
    return %c0_i32, %c0_i32_0 : i32, i32
  }
  func.func @transform_3(%arg0: i32) -> (i32, i32, i32) {
    %c0_i32 = arith.constant 0 : i32
    %c0_i32_0 = arith.constant 0 : i32
    %c0_i32_1 = arith.constant 0 : i32
    %c0_i32_2 = arith.constant 0 : i32
    return %c0_i32, %c0_i32_0, %c0_i32_1 : i32, i32, i32
  }
  func.func @transform_4(%arg0: i32) -> (i32, i32, i32) {
    %c0_i32 = arith.constant 0 : i32
    %c0_i32_0 = arith.constant 0 : i32
    %c0_i32_1 = arith.constant 0 : i32
    %c0_i32_2 = arith.constant 0 : i32
    return %c0_i32, %c0_i32_0, %c0_i32_1 : i32, i32, i32
  }
  func.func @transform_5(%arg0: i32) -> (i32, i32, i32) {
    %c0_i32 = arith.constant 0 : i32
    %c0_i32_0 = arith.constant 0 : i32
    %c0_i32_1 = arith.constant 0 : i32
    return %arg0, %c0_i32, %c0_i32_0 : i32, i32, i32
  }
  func.func @transform_6(%arg0: i32) -> (i32, i32, i32) {
    %c0_i32 = arith.constant 0 : i32
    %c0_i32_0 = arith.constant 0 : i32
    %c0_i32_1 = arith.constant 0 : i32
    return %arg0, %c0_i32, %c0_i32_0 : i32, i32, i32
  }
  func.func @transform_7(%arg0: i32) -> (i32, i32, i32, i32) {
    %c0_i32 = arith.constant 0 : i32
    %c0_i32_0 = arith.constant 0 : i32
    %c0_i32_1 = arith.constant 0 : i32
    %c0_i32_2 = arith.constant 0 : i32
    return %arg0, %c0_i32, %c0_i32_0, %c0_i32_1 : i32, i32, i32, i32
  }
  func.func @transform_8(%arg0: i32) -> (i32, i32, i32) {
    %c0_i32 = arith.constant 0 : i32
    %c0_i32_0 = arith.constant 0 : i32
    %c0_i32_1 = arith.constant 0 : i32
    return %arg0, %c0_i32, %c0_i32_0 : i32, i32, i32
  }
  func.func @transform_9(%arg0: i32) -> (i32, i32, i32) {
    %c0_i32 = arith.constant 0 : i32
    %c0_i32_0 = arith.constant 0 : i32
    %c0_i32_1 = arith.constant 0 : i32
    return %arg0, %c0_i32, %c0_i32_0 : i32, i32, i32
  }
  func.func @transform_10(%arg0: i32) -> (i32, i32, i32) {
    %c0_i32 = arith.constant 0 : i32
    %c0_i32_0 = arith.constant 0 : i32
    %c0_i32_1 = arith.constant 0 : i32
    return %arg0, %c0_i32, %c0_i32_0 : i32, i32, i32
  }
  func.func @transform_11(%arg0: i32) -> (i32, i32, i32) {
    %c0_i32 = arith.constant 0 : i32
    %c0_i32_0 = arith.constant 0 : i32
    %c0_i32_1 = arith.constant 0 : i32
    return %arg0, %c0_i32, %c0_i32_0 : i32, i32, i32
  }
  func.func @transform_12(%arg0: i32) -> (i32, i32, i32) {
    %c0_i32 = arith.constant 0 : i32
    %c0_i32_0 = arith.constant 0 : i32
    %c0_i32_1 = arith.constant 0 : i32
    return %arg0, %c0_i32, %c0_i32_0 : i32, i32, i32
  }
  func.func @transform_13(%arg0: i32) -> (i32, i32, i32) {
    %c0_i32 = arith.constant 0 : i32
    %c0_i32_0 = arith.constant 0 : i32
    %c0_i32_1 = arith.constant 0 : i32
    return %arg0, %c0_i32, %c0_i32_0 : i32, i32, i32
  }
  func.func @transform_14(%arg0: i32) -> (i32, i32, i32) {
    %c0_i32 = arith.constant 0 : i32
    %c0_i32_0 = arith.constant 0 : i32
    %c0_i32_1 = arith.constant 0 : i32
    return %arg0, %c0_i32, %c0_i32_0 : i32, i32, i32
  }
  func.func @transform_15(%arg0: i32) -> (i32, i32, i32, i32) {
    %c0_i32 = arith.constant 0 : i32
    %c0_i32_0 = arith.constant 0 : i32
    %c0_i32_1 = arith.constant 0 : i32
    %c0_i32_2 = arith.constant 0 : i32
    return %arg0, %c0_i32, %c0_i32_0, %c0_i32_1 : i32, i32, i32, i32
  }
  func.func @transform_16(%arg0: i32) -> (i32, i32, i32) {
    %c0_i32 = arith.constant 0 : i32
    %c0_i32_0 = arith.constant 0 : i32
    %c0_i32_1 = arith.constant 0 : i32
    return %arg0, %c0_i32, %c0_i32_0 : i32, i32, i32
  }
  func.func @transform_17(%arg0: i32) -> (i32, i32, i32) {
    %c0_i32 = arith.constant 0 : i32
    %c0_i32_0 = arith.constant 0 : i32
    %c0_i32_1 = arith.constant 0 : i32
    return %arg0, %c0_i32, %c0_i32_0 : i32, i32, i32
  }
  func.func @transform_18(%arg0: i32) -> (i32, i32, i32) {
    %c0_i32 = arith.constant 0 : i32
    %c0_i32_0 = arith.constant 0 : i32
    %c0_i32_1 = arith.constant 0 : i32
    return %arg0, %c0_i32, %c0_i32_0 : i32, i32, i32
  }
  func.func @transform_19(%arg0: i32) -> (i32, i32, i32) {
    %c0_i32 = arith.constant 0 : i32
    %c0_i32_0 = arith.constant 0 : i32
    %c0_i32_1 = arith.constant 0 : i32
    return %arg0, %c0_i32, %c0_i32_0 : i32, i32, i32
  }
  func.func @transform_20(%arg0: i32) -> (i32, i32, i32) {
    %c0_i32 = arith.constant 0 : i32
    %c0_i32_0 = arith.constant 0 : i32
    %c0_i32_1 = arith.constant 0 : i32
    return %arg0, %c0_i32, %c0_i32_0 : i32, i32, i32
  }
  func.func @transform_21(%arg0: i32) -> (i32, i32, i32) {
    %c0_i32 = arith.constant 0 : i32
    %c0_i32_0 = arith.constant 0 : i32
    %c0_i32_1 = arith.constant 0 : i32
    return %arg0, %c0_i32, %c0_i32_0 : i32, i32, i32
  }
  func.func @transform_22(%arg0: i32) -> (i32, i32, i32) {
    %c0_i32 = arith.constant 0 : i32
    %c0_i32_0 = arith.constant 0 : i32
    %c0_i32_1 = arith.constant 0 : i32
    return %arg0, %c0_i32, %c0_i32_0 : i32, i32, i32
  }
  func.func @transform_23(%arg0: i32) -> (i32, i32, i32) {
    %c0_i32 = arith.constant 0 : i32
    %c0_i32_0 = arith.constant 0 : i32
    %c0_i32_1 = arith.constant 0 : i32
    return %arg0, %c0_i32, %c0_i32_0 : i32, i32, i32
  }
  func.func @transform_24(%arg0: i32) -> (i32, i32, i32) {
    %c0_i32 = arith.constant 0 : i32
    %c0_i32_0 = arith.constant 0 : i32
    %c0_i32_1 = arith.constant 0 : i32
    return %arg0, %c0_i32, %c0_i32_0 : i32, i32, i32
  }
  func.func @transform_25(%arg0: i32) -> (i32, i32) {
    %c0_i32 = arith.constant 0 : i32
    %c0_i32_0 = arith.constant 0 : i32
    %c0_i32_1 = arith.constant 0 : i32
    return %c0_i32, %c0_i32_0 : i32, i32
  }
  func.func @transform_26(%arg0: i32) -> (i32, i32, i32, i32) {
    %c0_i32 = arith.constant 0 : i32
    %c0_i32_0 = arith.constant 0 : i32
    %c0_i32_1 = arith.constant 0 : i32
    %c0_i32_2 = arith.constant 0 : i32
    return %arg0, %c0_i32, %c0_i32_0, %c0_i32_1 : i32, i32, i32, i32
  }
  func.func @transform_27(%arg0: i32) -> (i32, i32, i32, i32) {
    %c0_i32 = arith.constant 0 : i32
    %c0_i32_0 = arith.constant 0 : i32
    %c0_i32_1 = arith.constant 0 : i32
    %c0_i32_2 = arith.constant 0 : i32
    return %arg0, %c0_i32, %c0_i32_0, %c0_i32_1 : i32, i32, i32, i32
  }
}

</mosaic_0001>

<llo_original>
// kernel: tpu_custom_call.1
$region0: #{tpu_custom_call.1}
  #allocation0 [shape = 'u32[]', space=smem, size = 0x4, offset = 0x4, fixed_abs, tag = 'smem constant byte address 0x4 - core index']
  #allocation1 [shape = 'u32[144,128]{1,0:T(1,128)}', space=vmem, size = 0x12000, scoped, tag = 'internal scratch']
  %s0 = inlined_call_operand.hbm [shape: f32[16,32], index: 0, kind: input, shape index: {}, may-alias: {0,25}]
  %s1 = inlined_call_operand.vmem [shape: f32[32,32], index: 1, kind: input, shape index: {}]
  %s2 = inlined_call_operand.vmem [shape: f32[16,1], index: 2, kind: input, shape index: {}]
  %s3 = inlined_call_operand.hbm [shape: f32[2,8,8], index: 3, kind: input, shape index: {}]
  %s4 = inlined_call_operand.hbm [shape: f32[2,8,16], index: 4, kind: input, shape index: {}]
  %s5 = inlined_call_operand.vmem [shape: bf16[2,32,96], index: 5, kind: input, shape index: {}]
  %s6 = inlined_call_operand.vmem [shape: f32[2,1,96], index: 6, kind: input, shape index: {}]
  %s7 = inlined_call_operand.vmem [shape: bf16[2,2,16,32], index: 7, kind: input, shape index: {}]
  %s8 = inlined_call_operand.hbm [shape: f32[2,1,32], index: 8, kind: input, shape index: {}]
  %s9 = inlined_call_operand.hbm [shape: f32[2,1,32], index: 9, kind: input, shape index: {}]
  %s10 = inlined_call_operand.hbm [shape: f32[2,1,32], index: 10, kind: input, shape index: {}]
  %s11 = inlined_call_operand.vmem [shape: bf16[2,32,32], index: 11, kind: input, shape index: {}]
  %s12 = inlined_call_operand.hbm [shape: f32[2,1,32], index: 12, kind: input, shape index: {}]
  %s13 = inlined_call_operand.vmem [shape: bf16[2,32,64], index: 13, kind: input, shape index: {}]
  %s14 = inlined_call_operand.vmem [shape: f32[2,1,64], index: 14, kind: input, shape index: {}]
  %s15 = inlined_call_operand.hbm [shape: bf16[2,2,16,32], index: 15, kind: input, shape index: {}]
  %s16 = inlined_call_operand.vmem [shape: f32[2,1,32], index: 16, kind: input, shape index: {}]
  %s17 = inlined_call_operand.vmem [shape: f32[2,1,32], index: 17, kind: input, shape index: {}]
  %s18 = inlined_call_operand.vmem [shape: f32[2,1,32], index: 18, kind: input, shape index: {}]
  %s19 = inlined_call_operand.hbm [shape: bf16[2,32,64], index: 19, kind: input, shape index: {}]
  %s20 = inlined_call_operand.vmem [shape: f32[2,1,64], index: 20, kind: input, shape index: {}]
  %s21 = inlined_call_operand.vmem [shape: bf16[2,64,32], index: 21, kind: input, shape index: {}]
  %s22 = inlined_call_operand.vmem [shape: f32[2,1,32], index: 22, kind: input, shape index: {}]
  %s23 = inlined_call_operand.vmem [shape: f32[2,1,32], index: 23, kind: input, shape index: {}]
  %s24 = inlined_call_operand.vmem [shape: f32[2,1,32], index: 24, kind: input, shape index: {}]
  %s25 = inlined_call_operand.hbm [shape: f32[16,32], index: 25, kind: output, shape index: {0}, may-alias: {0,25}]
  %s26 = inlined_call_operand.hbm [shape: f32[2,4,8,128], index: 26, kind: output, shape index: {1}]
  %s27 = inlined_call_operand.hbm [shape: f32[2,4,8,128], index: 27, kind: output, shape index: {2}]
  %28 = xla_tuple %s25, %s26, %s27
  %s29 = sld [smem:[#allocation0]]
  $region189: #{tpu_custom_call.1} parent=0
    _
  %s31 = ssub.s32 1, %s29
  %s32 = scalar_select 0, %s31, %s29
  $region1: #{tpu_custom_call.1} parent=0
    #allocation2 [shape = 'u8[8192]{0}', space=vmem, size = 0x2000, scoped, tag = 'input window, operand 0, single buffered']
    #allocation3 [shape = 's32[2]{0}', space=sflag, size = 0x8, scoped, tag = 'scoped memory for tpu_custom_call.1']
    #allocation4 [shape = 's32[2]{0}', space=sflag, size = 0x8, scoped, tag = 'scoped memory for tpu_custom_call.1']
    #allocation5 [shape = 'u8[8192]{0}', space=vmem, size = 0x2000, scoped, tag = 'input window, operand 3, single buffered']
    #allocation6 [shape = 's32[1]{0}', space=sflag, size = 0x4, scoped, tag = 'scoped memory for tpu_custom_call.1']
    #allocation7 [shape = 'u8[8192]{0}', space=vmem, size = 0x2000, scoped, tag = 'input window, operand 4, single buffered']
    #allocation8 [shape = 'u8[1024]{0}', space=vmem, size = 0x400, scoped, tag = 'input window, operand 8']
    #allocation9 [shape = 's32[2]{0}', space=sflag, size = 0x8, scoped, tag = 'scoped memory for tpu_custom_call.1']
    #allocation10 [shape = 'u8[1024]{0}', space=vmem, size = 0x400, scoped, tag = 'input window, operand 9']
    #allocation11 [shape = 'u8[1024]{0}', space=vmem, size = 0x400, scoped, tag = 'input window, operand 10']
    #allocation12 [shape = 's32[2]{0}', space=sflag, size = 0x8, scoped, tag = 'scoped memory for tpu_custom_call.1']
    #allocation13 [shape = 'u8[1024]{0}', space=vmem, size = 0x400, scoped, tag = 'input window, operand 12']
    #allocation14 [shape = 'u8[16384]{0}', space=vmem, size = 0x4000, scoped, tag = 'input window, operand 15']
    #allocation15 [shape = 's32[2]{0}', space=sflag, size = 0x8, scoped, tag = 'scoped memory for tpu_custom_call.1']
    #allocation16 [shape = 'u8[16384]{0}', space=vmem, size = 0x4000, scoped, tag = 'input window, operand 19']
    #allocation17 [shape = 'u8[8192]{0}', space=vmem, size = 0x2000, scoped, tag = 'output window, operand 0, single buffered']
    #allocation18 [shape = 'u8[32768]{0}', space=vmem, size = 0x8000, scoped, tag = 'output window, operand 1']
    #allocation19 [shape = 's32[2]{0}', space=sflag, size = 0x8, scoped, tag = 'scoped memory for tpu_custom_call.1']
    #allocation20 [shape = 'u8[32768]{0}', space=vmem, size = 0x8000, scoped, tag = 'output window, operand 2']
    %33 = vsyncpa [#allocation3], 0
    %34 = vsyncpa [#allocation6], 0
    %35 = vsyncpa [#allocation9], 0
    %s36 = scalar_lea.sflag [#allocation9], 1
    %37 = vsyncpa %s36, 0
    %38 = vsyncpa [#allocation12], 0
    %s39 = scalar_lea.sflag [#allocation12], 1
    %40 = vsyncpa %s39, 0
    %41 = vsyncpa [#allocation15], 0
    %s42 = scalar_lea.sflag [#allocation15], 1
    %43 = vsyncpa %s42, 0
    %44 = vsyncpa [#allocation4], 0
    %45 = vsyncpa [#allocation19], 0
    %s46 = scalar_lea.sflag [#allocation19], 1
    %47 = vsyncpa %s46, 0
    loop: start=0, step=1, limit=4
    $region2: #{tpu_custom_call.1} parent=1 // loop_pre_header
      _
    $region3: #{tpu_custom_call.1} parent=1 // loop_header
      %s49 = sphi 0, %s53
      %p50 = scmp.ge.s32.totalorder %s49, 4
      %s57 = sphi 0, %s57
      %s59 = sphi 0, %s57
      %s60 = sphi 0, %s59
      %s74 = sphi 0, %s60
      %s78 = sphi 0, %s78
      %s80 = sphi 0, %s78
      %s81 = sphi 0, %s80
      %s95 = sphi 0, %s81
      %s99 = sphi 0, %s99
      %s101 = sphi 0, %s99
      %s102 = sphi 0, %s101
      %s116 = sphi 0, %s102
      %s120 = sphi 0, %s120
      %s122 = sphi 0, %s120
      %s123 = sphi 0, %s122
      %s137 = sphi 0, %s123
      %s141 = sphi 0, %s141
      %s143 = sphi 0, %s141
      %s144 = sphi 0, %s143
      %s158 = sphi 0, %s144
      %s164 = sphi 0, %s166
      %s167 = sphi 0, %s164
      %s168 = sphi 0, %s167
      %s184 = sphi 0, %s168
      %s190 = sphi 0, %s192
      %s193 = sphi 0, %s190
      %s194 = sphi 0, %s193
      %s210 = sphi 0, %s194
      %s216 = sphi 0, %s218
      %s219 = sphi 0, %s216
      %s220 = sphi 0, %s219
      %s236 = sphi 0, %s220
      %s242 = sphi 0, %s244
      %s245 = sphi 0, %s242
      %s246 = sphi 0, %s245
      %s262 = sphi 0, %s246
      %s268 = sphi 0, %s270
      %s271 = sphi 0, %s268
      %s272 = sphi 0, %s271
      %s288 = sphi 0, %s272
      %s294 = sphi 0, %s296
      %s297 = sphi 0, %s294
      %s298 = sphi 0, %s297
      %s314 = sphi 0, %s298
      %s320 = sphi 0, %s322
      %s323 = sphi 0, %s320
      %s324 = sphi 0, %s323
      %s340 = sphi 0, %s324
      %s346 = sphi 0, %s348
      %s349 = sphi 0, %s346
      %s350 = sphi 0, %s349
      %s366 = sphi 0, %s350
      %s372 = sphi 0, %s374
      %s375 = sphi 0, %s372
      %s376 = sphi 0, %s375
      %s392 = sphi 0, %s376
      %s398 = sphi 0, %s400
      %s401 = sphi 0, %s398
      %s402 = sphi 0, %s401
      %s418 = sphi 0, %s402
      %s424 = sphi 0, %s426
      %s427 = sphi 0, %s424
      %s428 = sphi 0, %s427
      %s444 = sphi 0, %s428
      %s450 = sphi 0, %s452
      %s453 = sphi 0, %s450
      %s454 = sphi 0, %s453
      %s470 = sphi 0, %s454
      %s476 = sphi 0, %s478
      %s479 = sphi 0, %s476
      %s480 = sphi 0, %s479
      %s496 = sphi 0, %s480
      %s502 = sphi 0, %s504
      %s505 = sphi 0, %s502
      %s506 = sphi 0, %s505
      %s522 = sphi 0, %s506
      %s528 = sphi 0, %s530
      %s531 = sphi 0, %s528
      %s532 = sphi 0, %s531
      %s548 = sphi 0, %s532
      %s554 = sphi 0, %s556
      %s557 = sphi 0, %s554
      %s558 = sphi 0, %s557
      %s574 = sphi 0, %s558
      %s580 = sphi 0, %s582
      %s583 = sphi 0, %s580
      %s584 = sphi 0, %s583
      %s600 = sphi 0, %s584
      %s606 = sphi 0, %s608
      %s609 = sphi 0, %s606
      %s610 = sphi 0, %s609
      %s626 = sphi 0, %s610
      %s632 = sphi 0, %s634
      %s635 = sphi 0, %s632
      %s636 = sphi 0, %s635
      %s652 = sphi 0, %s636
      %s658 = sphi 0, %s660
      %s661 = sphi 0, %s658
      %s662 = sphi 0, %s661
      %s678 = sphi 0, %s662
      %s682 = sphi 0, %s682
      %s684 = sphi 0, %s682
      %s685 = sphi 0, %s684
      %s699 = sphi 0, %s685
      %s705 = sphi 0, %s707
      %s708 = sphi 0, %s705
      %s709 = sphi 0, %s708
      %s725 = sphi 0, %s709
      %s731 = sphi 0, %s733
      %s734 = sphi 0, %s731
      %s735 = sphi 0, %s734
      %s751 = sphi 0, %s735
    $region4: #{tpu_custom_call.1} parent=1 // loop_header_branch
      %52 = sbr.rel (%p50) target = $region8
    $region5: #{tpu_custom_call.1} parent=1 // loop_body
      %s54 = ssub.s32 %s49, 1
      %s55 = ssub.s32 %s49, 2
      %s56 = sadd.s32 %s49, 1
      %s58 = sadd.s32 %s57, 1
      %p61 = scmp.eq.s32.totalorder %s49, 1
      %p62 = scmp.ne.s32.totalorder %s57, %s59
      %p63 = scmp.eq.s32.totalorder %s49, 0
      %p64 = por %p62, %p63
      %p65 = scmp.ne.s32.totalorder %s57, %s59
      %p66 = scmp.eq.s32.totalorder %s54, 1
      %p67 = por %p65, %p66
      %p68 = scmp.ne.s32.totalorder %s59, %s60
      %p69 = scmp.eq.s32.totalorder %s54, 0
      %p70 = por %p68, %p69
      %p71 = scmp.ne.s32.totalorder %s59, %s60
      %p72 = scmp.eq.s32.totalorder %s55, 1
      %p73 = por %p71, %p72
      %p75 = scmp.ne.s32.totalorder %s60, %s74
      %p76 = scmp.eq.s32.totalorder %s55, 0
      %p77 = por %p75, %p76
      %s79 = sadd.s32 %s78, 1
      %p82 = scmp.eq.s32.totalorder %s49, 1
      %p83 = scmp.ne.s32.totalorder %s78, %s80
      %p84 = scmp.eq.s32.totalorder %s49, 0
      %p85 = por %p83, %p84
      %p86 = scmp.ne.s32.totalorder %s78, %s80
      %p87 = scmp.eq.s32.totalorder %s54, 1
      %p88 = por %p86, %p87
      %p89 = scmp.ne.s32.totalorder %s80, %s81
      %p90 = scmp.eq.s32.totalorder %s54, 0
      %p91 = por %p89, %p90
      %p92 = scmp.ne.s32.totalorder %s80, %s81
      %p93 = scmp.eq.s32.totalorder %s55, 1
      %p94 = por %p92, %p93
      %p96 = scmp.ne.s32.totalorder %s81, %s95
      %p97 = scmp.eq.s32.totalorder %s55, 0
      %p98 = por %p96, %p97
      %s100 = sadd.s32 %s99, 1
      %p103 = scmp.eq.s32.totalorder %s49, 1
      %p104 = scmp.ne.s32.totalorder %s99, %s101
      %p105 = scmp.eq.s32.totalorder %s49, 0
      %p106 = por %p104, %p105
      %p107 = scmp.ne.s32.totalorder %s99, %s101
      %p108 = scmp.eq.s32.totalorder %s54, 1
      %p109 = por %p107, %p108
      %p110 = scmp.ne.s32.totalorder %s101, %s102
      %p111 = scmp.eq.s32.totalorder %s54, 0
      %p112 = por %p110, %p111
      %p113 = scmp.ne.s32.totalorder %s101, %s102
      %p114 = scmp.eq.s32.totalorder %s55, 1
      %p115 = por %p113, %p114
      %p117 = scmp.ne.s32.totalorder %s102, %s116
      %p118 = scmp.eq.s32.totalorder %s55, 0
      %p119 = por %p117, %p118
      %s121 = sadd.s32 %s120, 1
      %p124 = scmp.eq.s32.totalorder %s49, 1
      %p125 = scmp.ne.s32.totalorder %s120, %s122
      %p126 = scmp.eq.s32.totalorder %s49, 0
      %p127 = por %p125, %p126
      %p128 = scmp.ne.s32.totalorder %s120, %s122
      %p129 = scmp.eq.s32.totalorder %s54, 1
      %p130 = por %p128, %p129
      %p131 = scmp.ne.s32.totalorder %s122, %s123
      %p132 = scmp.eq.s32.totalorder %s54, 0
      %p133 = por %p131, %p132
      %p134 = scmp.ne.s32.totalorder %s122, %s123
      %p135 = scmp.eq.s32.totalorder %s55, 1
      %p136 = por %p134, %p135
      %p138 = scmp.ne.s32.totalorder %s123, %s137
      %p139 = scmp.eq.s32.totalorder %s55, 0
      %p140 = por %p138, %p139
      %s142 = sadd.s32 %s141, 1
      %p145 = scmp.eq.s32.totalorder %s49, 1
      %p146 = scmp.ne.s32.totalorder %s141, %s143
      %p147 = scmp.eq.s32.totalorder %s49, 0
      %p148 = por %p146, %p147
      %p149 = scmp.ne.s32.totalorder %s141, %s143
      %p150 = scmp.eq.s32.totalorder %s54, 1
      %p151 = por %p149, %p150
      %p152 = scmp.ne.s32.totalorder %s143, %s144
      %p153 = scmp.eq.s32.totalorder %s54, 0
      %p154 = por %p152, %p153
      %p155 = scmp.ne.s32.totalorder %s143, %s144
      %p156 = scmp.eq.s32.totalorder %s55, 1
      %p157 = por %p155, %p156
      %p159 = scmp.ne.s32.totalorder %s144, %s158
      %p160 = scmp.eq.s32.totalorder %s55, 0
      %p161 = por %p159, %p160
      %s162 = ssub.s32 %s49, %s56
      %p163 = scmp.eq.s32.totalorder %s162, 0
      %s165 = sadd.s32 %s164, 1
      %s166 = scalar_select %p163, %s164, %s165
      %p169 = pneg %p163
      %p170 = scmp.eq.s32.totalorder %s49, 1
      %p171 = por %p169, %p170
      %p172 = scmp.ne.s32.totalorder %s164, %s167
      %p173 = scmp.eq.s32.totalorder %s49, 0
      %p174 = por %p172, %p173
      %p175 = scmp.ne.s32.totalorder %s164, %s167
      %p176 = scmp.eq.s32.totalorder %s54, 1
      %p177 = por %p175, %p176
      %p178 = scmp.ne.s32.totalorder %s167, %s168
      %p179 = scmp.eq.s32.totalorder %s54, 0
      %p180 = por %p178, %p179
      %p181 = scmp.ne.s32.totalorder %s167, %s168
      %p182 = scmp.eq.s32.totalorder %s55, 1
      %p183 = por %p181, %p182
      %p185 = scmp.ne.s32.totalorder %s168, %s184
      %p186 = scmp.eq.s32.totalorder %s55, 0
      %p187 = por %p185, %p186
      %s188 = ssub.s32 %s49, %s56
      %p189 = scmp.eq.s32.totalorder %s188, 0
      %s191 = sadd.s32 %s190, 1
      %s192 = scalar_select %p189, %s190, %s191
      %p195 = pneg %p189
      %p196 = scmp.eq.s32.totalorder %s49, 1
      %p197 = por %p195, %p196
      %p198 = scmp.ne.s32.totalorder %s190, %s193
      %p199 = scmp.eq.s32.totalorder %s49, 0
      %p200 = por %p198, %p199
      %p201 = scmp.ne.s32.totalorder %s190, %s193
      %p202 = scmp.eq.s32.totalorder %s54, 1
      %p203 = por %p201, %p202
      %p204 = scmp.ne.s32.totalorder %s193, %s194
      %p205 = scmp.eq.s32.totalorder %s54, 0
      %p206 = por %p204, %p205
      %p207 = scmp.ne.s32.totalorder %s193, %s194
      %p208 = scmp.eq.s32.totalorder %s55, 1
      %p209 = por %p207, %p208
      %p211 = scmp.ne.s32.totalorder %s194, %s210
      %p212 = scmp.eq.s32.totalorder %s55, 0
      %p213 = por %p211, %p212
      %s214 = ssub.s32 %s49, %s56
      %p215 = scmp.eq.s32.totalorder %s214, 0
      %s217 = sadd.s32 %s216, 1
      %s218 = scalar_select %p215, %s216, %s217
      %p221 = pneg %p215
      %p222 = scmp.eq.s32.totalorder %s49, 1
      %p223 = por %p221, %p222
      %p224 = scmp.ne.s32.totalorder %s216, %s219
      %p225 = scmp.eq.s32.totalorder %s49, 0
      %p226 = por %p224, %p225
      %p227 = scmp.ne.s32.totalorder %s216, %s219
      %p228 = scmp.eq.s32.totalorder %s54, 1
      %p229 = por %p227, %p228
      %p230 = scmp.ne.s32.totalorder %s219, %s220
      %p231 = scmp.eq.s32.totalorder %s54, 0
      %p232 = por %p230, %p231
      %p233 = scmp.ne.s32.totalorder %s219, %s220
      %p234 = scmp.eq.s32.totalorder %s55, 1
      %p235 = por %p233, %p234
      %p237 = scmp.ne.s32.totalorder %s220, %s236
      %p238 = scmp.eq.s32.totalorder %s55, 0
      %p239 = por %p237, %p238
      %s240 = ssub.s32 %s49, %s56
      %p241 = scmp.eq.s32.totalorder %s240, 0
      %s243 = sadd.s32 %s242, 1
      %s244 = scalar_select %p241, %s242, %s243
      %p247 = pneg %p241
      %p248 = scmp.eq.s32.totalorder %s49, 1
      %p249 = por %p247, %p248
      %p250 = scmp.ne.s32.totalorder %s242, %s245
      %p251 = scmp.eq.s32.totalorder %s49, 0
      %p252 = por %p250, %p251
      %p253 = scmp.ne.s32.totalorder %s242, %s245
      %p254 = scmp.eq.s32.totalorder %s54, 1
      %p255 = por %p253, %p254
      %p256 = scmp.ne.s32.totalorder %s245, %s246
      %p257 = scmp.eq.s32.totalorder %s54, 0
      %p258 = por %p256, %p257
      %p259 = scmp.ne.s32.totalorder %s245, %s246
      %p260 = scmp.eq.s32.totalorder %s55, 1
      %p261 = por %p259, %p260
      %p263 = scmp.ne.s32.totalorder %s246, %s262
      %p264 = scmp.eq.s32.totalorder %s55, 0
      %p265 = por %p263, %p264
      %s266 = ssub.s32 %s49, %s56
      %p267 = scmp.eq.s32.totalorder %s266, 0
      %s269 = sadd.s32 %s268, 1
      %s270 = scalar_select %p267, %s268, %s269
      %p273 = pneg %p267
      %p274 = scmp.eq.s32.totalorder %s49, 1
      %p275 = por %p273, %p274
      %p276 = scmp.ne.s32.totalorder %s268, %s271
      %p277 = scmp.eq.s32.totalorder %s49, 0
      %p278 = por %p276, %p277
      %p279 = scmp.ne.s32.totalorder %s268, %s271
      %p280 = scmp.eq.s32.totalorder %s54, 1
      %p281 = por %p279, %p280
      %p282 = scmp.ne.s32.totalorder %s271, %s272
      %p283 = scmp.eq.s32.totalorder %s54, 0
      %p284 = por %p282, %p283
      %p285 = scmp.ne.s32.totalorder %s271, %s272
      %p286 = scmp.eq.s32.totalorder %s55, 1
      %p287 = por %p285, %p286
      %p289 = scmp.ne.s32.totalorder %s272, %s288
      %p290 = scmp.eq.s32.totalorder %s55, 0
      %p291 = por %p289, %p290
      %s292 = ssub.s32 %s49, %s56
      %p293 = scmp.eq.s32.totalorder %s292, 0
      %s295 = sadd.s32 %s294, 1
      %s296 = scalar_select %p293, %s294, %s295
      %p299 = pneg %p293
      %p300 = scmp.eq.s32.totalorder %s49, 1
      %p301 = por %p299, %p300
      %p302 = scmp.ne.s32.totalorder %s294, %s297
      %p303 = scmp.eq.s32.totalorder %s49, 0
      %p304 = por %p302, %p303
      %p305 = scmp.ne.s32.totalorder %s294, %s297
      %p306 = scmp.eq.s32.totalorder %s54, 1
      %p307 = por %p305, %p306
      %p308 = scmp.ne.s32.totalorder %s297, %s298
      %p309 = scmp.eq.s32.totalorder %s54, 0
      %p310 = por %p308, %p309
      %p311 = scmp.ne.s32.totalorder %s297, %s298
      %p312 = scmp.eq.s32.totalorder %s55, 1
      %p313 = por %p311, %p312
      %p315 = scmp.ne.s32.totalorder %s298, %s314
      %p316 = scmp.eq.s32.totalorder %s55, 0
      %p317 = por %p315, %p316
      %s318 = ssub.s32 %s49, %s56
      %p319 = scmp.eq.s32.totalorder %s318, 0
      %s321 = sadd.s32 %s320, 1
      %s322 = scalar_select %p319, %s320, %s321
      %p325 = pneg %p319
      %p326 = scmp.eq.s32.totalorder %s49, 1
      %p327 = por %p325, %p326
      %p328 = scmp.ne.s32.totalorder %s320, %s323
      %p329 = scmp.eq.s32.totalorder %s49, 0
      %p330 = por %p328, %p329
      %p331 = scmp.ne.s32.totalorder %s320, %s323
      %p332 = scmp.eq.s32.totalorder %s54, 1
      %p333 = por %p331, %p332
      %p334 = scmp.ne.s32.totalorder %s323, %s324
      %p335 = scmp.eq.s32.totalorder %s54, 0
      %p336 = por %p334, %p335
      %p337 = scmp.ne.s32.totalorder %s323, %s324
      %p338 = scmp.eq.s32.totalorder %s55, 1
      %p339 = por %p337, %p338
      %p341 = scmp.ne.s32.totalorder %s324, %s340
      %p342 = scmp.eq.s32.totalorder %s55, 0
      %p343 = por %p341, %p342
      %s344 = ssub.s32 %s49, %s56
      %p345 = scmp.eq.s32.totalorder %s344, 0
      %s347 = sadd.s32 %s346, 1
      %s348 = scalar_select %p345, %s346, %s347
      %p351 = pneg %p345
      %p352 = scmp.eq.s32.totalorder %s49, 1
      %p353 = por %p351, %p352
      %p354 = scmp.ne.s32.totalorder %s346, %s349
      %p355 = scmp.eq.s32.totalorder %s49, 0
      %p356 = por %p354, %p355
      %p357 = scmp.ne.s32.totalorder %s346, %s349
      %p358 = scmp.eq.s32.totalorder %s54, 1
      %p359 = por %p357, %p358
      %p360 = scmp.ne.s32.totalorder %s349, %s350
      %p361 = scmp.eq.s32.totalorder %s54, 0
      %p362 = por %p360, %p361
      %p363 = scmp.ne.s32.totalorder %s349, %s350
      %p364 = scmp.eq.s32.totalorder %s55, 1
      %p365 = por %p363, %p364
      %p367 = scmp.ne.s32.totalorder %s350, %s366
      %p368 = scmp.eq.s32.totalorder %s55, 0
      %p369 = por %p367, %p368
      %s370 = ssub.s32 %s49, %s56
      %p371 = scmp.eq.s32.totalorder %s370, 0
      %s373 = sadd.s32 %s372, 1
      %s374 = scalar_select %p371, %s372, %s373
      %p377 = pneg %p371
      %p378 = scmp.eq.s32.totalorder %s49, 1
      %p379 = por %p377, %p378
      %p380 = scmp.ne.s32.totalorder %s372, %s375
      %p381 = scmp.eq.s32.totalorder %s49, 0
      %p382 = por %p380, %p381
      %p383 = scmp.ne.s32.totalorder %s372, %s375
      %p384 = scmp.eq.s32.totalorder %s54, 1
      %p385 = por %p383, %p384
      %p386 = scmp.ne.s32.totalorder %s375, %s376
      %p387 = scmp.eq.s32.totalorder %s54, 0
      %p388 = por %p386, %p387
      %p389 = scmp.ne.s32.totalorder %s375, %s376
      %p390 = scmp.eq.s32.totalorder %s55, 1
      %p391 = por %p389, %p390
      %p393 = scmp.ne.s32.totalorder %s376, %s392
      %p394 = scmp.eq.s32.totalorder %s55, 0
      %p395 = por %p393, %p394
      %s396 = ssub.s32 %s49, %s56
      %p397 = scmp.eq.s32.totalorder %s396, 0
      %s399 = sadd.s32 %s398, 1
      %s400 = scalar_select %p397, %s398, %s399
      %p403 = pneg %p397
      %p404 = scmp.eq.s32.totalorder %s49, 1
      %p405 = por %p403, %p404
      %p406 = scmp.ne.s32.totalorder %s398, %s401
      %p407 = scmp.eq.s32.totalorder %s49, 0
      %p408 = por %p406, %p407
      %p409 = scmp.ne.s32.totalorder %s398, %s401
      %p410 = scmp.eq.s32.totalorder %s54, 1
      %p411 = por %p409, %p410
      %p412 = scmp.ne.s32.totalorder %s401, %s402
      %p413 = scmp.eq.s32.totalorder %s54, 0
      %p414 = por %p412, %p413
      %p415 = scmp.ne.s32.totalorder %s401, %s402
      %p416 = scmp.eq.s32.totalorder %s55, 1
      %p417 = por %p415, %p416
      %p419 = scmp.ne.s32.totalorder %s402, %s418
      %p420 = scmp.eq.s32.totalorder %s55, 0
      %p421 = por %p419, %p420
      %s422 = ssub.s32 %s49, %s56
      %p423 = scmp.eq.s32.totalorder %s422, 0
      %s425 = sadd.s32 %s424, 1
      %s426 = scalar_select %p423, %s424, %s425
      %p429 = pneg %p423
      %p430 = scmp.eq.s32.totalorder %s49, 1
      %p431 = por %p429, %p430
      %p432 = scmp.ne.s32.totalorder %s424, %s427
      %p433 = scmp.eq.s32.totalorder %s49, 0
      %p434 = por %p432, %p433
      %p435 = scmp.ne.s32.totalorder %s424, %s427
      %p436 = scmp.eq.s32.totalorder %s54, 1
      %p437 = por %p435, %p436
      %p438 = scmp.ne.s32.totalorder %s427, %s428
      %p439 = scmp.eq.s32.totalorder %s54, 0
      %p440 = por %p438, %p439
      %p441 = scmp.ne.s32.totalorder %s427, %s428
      %p442 = scmp.eq.s32.totalorder %s55, 1
      %p443 = por %p441, %p442
      %p445 = scmp.ne.s32.totalorder %s428, %s444
      %p446 = scmp.eq.s32.totalorder %s55, 0
      %p447 = por %p445, %p446
      %s448 = ssub.s32 %s49, %s56
      %p449 = scmp.eq.s32.totalorder %s448, 0
      %s451 = sadd.s32 %s450, 1
      %s452 = scalar_select %p449, %s450, %s451
      %p455 = pneg %p449
      %p456 = scmp.eq.s32.totalorder %s49, 1
      %p457 = por %p455, %p456
      %p458 = scmp.ne.s32.totalorder %s450, %s453
      %p459 = scmp.eq.s32.totalorder %s49, 0
      %p460 = por %p458, %p459
      %p461 = scmp.ne.s32.totalorder %s450, %s453
      %p462 = scmp.eq.s32.totalorder %s54, 1
      %p463 = por %p461, %p462
      %p464 = scmp.ne.s32.totalorder %s453, %s454
      %p465 = scmp.eq.s32.totalorder %s54, 0
      %p466 = por %p464, %p465
      %p467 = scmp.ne.s32.totalorder %s453, %s454
      %p468 = scmp.eq.s32.totalorder %s55, 1
      %p469 = por %p467, %p468
      %p471 = scmp.ne.s32.totalorder %s454, %s470
      %p472 = scmp.eq.s32.totalorder %s55, 0
      %p473 = por %p471, %p472
      %s474 = ssub.s32 %s49, %s56
      %p475 = scmp.eq.s32.totalorder %s474, 0
      %s477 = sadd.s32 %s476, 1
      %s478 = scalar_select %p475, %s476, %s477
      %p481 = pneg %p475
      %p482 = scmp.eq.s32.totalorder %s49, 1
      %p483 = por %p481, %p482
      %p484 = scmp.ne.s32.totalorder %s476, %s479
      %p485 = scmp.eq.s32.totalorder %s49, 0
      %p486 = por %p484, %p485
      %p487 = scmp.ne.s32.totalorder %s476, %s479
      %p488 = scmp.eq.s32.totalorder %s54, 1
      %p489 = por %p487, %p488
      %p490 = scmp.ne.s32.totalorder %s479, %s480
      %p491 = scmp.eq.s32.totalorder %s54, 0
      %p492 = por %p490, %p491
      %p493 = scmp.ne.s32.totalorder %s479, %s480
      %p494 = scmp.eq.s32.totalorder %s55, 1
      %p495 = por %p493, %p494
      %p497 = scmp.ne.s32.totalorder %s480, %s496
      %p498 = scmp.eq.s32.totalorder %s55, 0
      %p499 = por %p497, %p498
      %s500 = ssub.s32 %s49, %s56
      %p501 = scmp.eq.s32.totalorder %s500, 0
      %s503 = sadd.s32 %s502, 1
      %s504 = scalar_select %p501, %s502, %s503
      %p507 = pneg %p501
      %p508 = scmp.eq.s32.totalorder %s49, 1
      %p509 = por %p507, %p508
      %p510 = scmp.ne.s32.totalorder %s502, %s505
      %p511 = scmp.eq.s32.totalorder %s49, 0
      %p512 = por %p510, %p511
      %p513 = scmp.ne.s32.totalorder %s502, %s505
      %p514 = scmp.eq.s32.totalorder %s54, 1
      %p515 = por %p513, %p514
      %p516 = scmp.ne.s32.totalorder %s505, %s506
      %p517 = scmp.eq.s32.totalorder %s54, 0
      %p518 = por %p516, %p517
      %p519 = scmp.ne.s32.totalorder %s505, %s506
      %p520 = scmp.eq.s32.totalorder %s55, 1
      %p521 = por %p519, %p520
      %p523 = scmp.ne.s32.totalorder %s506, %s522
      %p524 = scmp.eq.s32.totalorder %s55, 0
      %p525 = por %p523, %p524
      %s526 = ssub.s32 %s49, %s56
      %p527 = scmp.eq.s32.totalorder %s526, 0
      %s529 = sadd.s32 %s528, 1
      %s530 = scalar_select %p527, %s528, %s529
      %p533 = pneg %p527
      %p534 = scmp.eq.s32.totalorder %s49, 1
      %p535 = por %p533, %p534
      %p536 = scmp.ne.s32.totalorder %s528, %s531
      %p537 = scmp.eq.s32.totalorder %s49, 0
      %p538 = por %p536, %p537
      %p539 = scmp.ne.s32.totalorder %s528, %s531
      %p540 = scmp.eq.s32.totalorder %s54, 1
      %p541 = por %p539, %p540
      %p542 = scmp.ne.s32.totalorder %s531, %s532
      %p543 = scmp.eq.s32.totalorder %s54, 0
      %p544 = por %p542, %p543
      %p545 = scmp.ne.s32.totalorder %s531, %s532
      %p546 = scmp.eq.s32.totalorder %s55, 1
      %p547 = por %p545, %p546
      %p549 = scmp.ne.s32.totalorder %s532, %s548
      %p550 = scmp.eq.s32.totalorder %s55, 0
      %p551 = por %p549, %p550
      %s552 = ssub.s32 %s49, %s56
      %p553 = scmp.eq.s32.totalorder %s552, 0
      %s555 = sadd.s32 %s554, 1
      %s556 = scalar_select %p553, %s554, %s555
      %p559 = pneg %p553
      %p560 = scmp.eq.s32.totalorder %s49, 1
      %p561 = por %p559, %p560
      %p562 = scmp.ne.s32.totalorder %s554, %s557
      %p563 = scmp.eq.s32.totalorder %s49, 0
      %p564 = por %p562, %p563
      %p565 = scmp.ne.s32.totalorder %s554, %s557
      %p566 = scmp.eq.s32.totalorder %s54, 1
      %p567 = por %p565, %p566
      %p568 = scmp.ne.s32.totalorder %s557, %s558
      %p569 = scmp.eq.s32.totalorder %s54, 0
      %p570 = por %p568, %p569
      %p571 = scmp.ne.s32.totalorder %s557, %s558
      %p572 = scmp.eq.s32.totalorder %s55, 1
      %p573 = por %p571, %p572
      %p575 = scmp.ne.s32.totalorder %s558, %s574
      %p576 = scmp.eq.s32.totalorder %s55, 0
      %p577 = por %p575, %p576
      %s578 = ssub.s32 %s49, %s56
      %p579 = scmp.eq.s32.totalorder %s578, 0
      %s581 = sadd.s32 %s580, 1
      %s582 = scalar_select %p579, %s580, %s581
      %p585 = pneg %p579
      %p586 = scmp.eq.s32.totalorder %s49, 1
      %p587 = por %p585, %p586
      %p588 = scmp.ne.s32.totalorder %s580, %s583
      %p589 = scmp.eq.s32.totalorder %s49, 0
      %p590 = por %p588, %p589
      %p591 = scmp.ne.s32.totalorder %s580, %s583
      %p592 = scmp.eq.s32.totalorder %s54, 1
      %p593 = por %p591, %p592
      %p594 = scmp.ne.s32.totalorder %s583, %s584
      %p595 = scmp.eq.s32.totalorder %s54, 0
      %p596 = por %p594, %p595
      %p597 = scmp.ne.s32.totalorder %s583, %s584
      %p598 = scmp.eq.s32.totalorder %s55, 1
      %p599 = por %p597, %p598
      %p601 = scmp.ne.s32.totalorder %s584, %s600
      %p602 = scmp.eq.s32.totalorder %s55, 0
      %p603 = por %p601, %p602
      %s604 = ssub.s32 %s49, %s56
      %p605 = scmp.eq.s32.totalorder %s604, 0
      %s607 = sadd.s32 %s606, 1
      %s608 = scalar_select %p605, %s606, %s607
      %p611 = pneg %p605
      %p612 = scmp.eq.s32.totalorder %s49, 1
      %p613 = por %p611, %p612
      %p614 = scmp.ne.s32.totalorder %s606, %s609
      %p615 = scmp.eq.s32.totalorder %s49, 0
      %p616 = por %p614, %p615
      %p617 = scmp.ne.s32.totalorder %s606, %s609
      %p618 = scmp.eq.s32.totalorder %s54, 1
      %p619 = por %p617, %p618
      %p620 = scmp.ne.s32.totalorder %s609, %s610
      %p621 = scmp.eq.s32.totalorder %s54, 0
      %p622 = por %p620, %p621
      %p623 = scmp.ne.s32.totalorder %s609, %s610
      %p624 = scmp.eq.s32.totalorder %s55, 1
      %p625 = por %p623, %p624
      %p627 = scmp.ne.s32.totalorder %s610, %s626
      %p628 = scmp.eq.s32.totalorder %s55, 0
      %p629 = por %p627, %p628
      %s630 = ssub.s32 %s49, %s56
      %p631 = scmp.eq.s32.totalorder %s630, 0
      %s633 = sadd.s32 %s632, 1
      %s634 = scalar_select %p631, %s632, %s633
      %p637 = pneg %p631
      %p638 = scmp.eq.s32.totalorder %s49, 1
      %p639 = por %p637, %p638
      %p640 = scmp.ne.s32.totalorder %s632, %s635
      %p641 = scmp.eq.s32.totalorder %s49, 0
      %p642 = por %p640, %p641
      %p643 = scmp.ne.s32.totalorder %s632, %s635
      %p644 = scmp.eq.s32.totalorder %s54, 1
      %p645 = por %p643, %p644
      %p646 = scmp.ne.s32.totalorder %s635, %s636
      %p647 = scmp.eq.s32.totalorder %s54, 0
      %p648 = por %p646, %p647
      %p649 = scmp.ne.s32.totalorder %s635, %s636
      %p650 = scmp.eq.s32.totalorder %s55, 1
      %p651 = por %p649, %p650
      %p653 = scmp.ne.s32.totalorder %s636, %s652
      %p654 = scmp.eq.s32.totalorder %s55, 0
      %p655 = por %p653, %p654
      %s656 = ssub.s32 %s49, %s56
      %p657 = scmp.eq.s32.totalorder %s656, 0
      %s659 = sadd.s32 %s658, 1
      %s660 = scalar_select %p657, %s658, %s659
      %p663 = pneg %p657
      %p664 = scmp.eq.s32.totalorder %s49, 1
      %p665 = por %p663, %p664
      %p666 = scmp.ne.s32.totalorder %s658, %s661
      %p667 = scmp.eq.s32.totalorder %s49, 0
      %p668 = por %p666, %p667
      %p669 = scmp.ne.s32.totalorder %s658, %s661
      %p670 = scmp.eq.s32.totalorder %s54, 1
      %p671 = por %p669, %p670
      %p672 = scmp.ne.s32.totalorder %s661, %s662
      %p673 = scmp.eq.s32.totalorder %s54, 0
      %p674 = por %p672, %p673
      %p675 = scmp.ne.s32.totalorder %s661, %s662
      %p676 = scmp.eq.s32.totalorder %s55, 1
      %p677 = por %p675, %p676
      %p679 = scmp.ne.s32.totalorder %s662, %s678
      %p680 = scmp.eq.s32.totalorder %s55, 0
      %p681 = por %p679, %p680
      %s683 = sadd.s32 %s682, 1
      %p686 = scmp.eq.s32.totalorder %s49, 1
      %p687 = scmp.ne.s32.totalorder %s682, %s684
      %p688 = scmp.eq.s32.totalorder %s49, 0
      %p689 = por %p687, %p688
      %p690 = scmp.ne.s32.totalorder %s682, %s684
      %p691 = scmp.eq.s32.totalorder %s54, 1
      %p692 = por %p690, %p691
      %p693 = scmp.ne.s32.totalorder %s684, %s685
      %p694 = scmp.eq.s32.totalorder %s54, 0
      %p695 = por %p693, %p694
      %p696 = scmp.ne.s32.totalorder %s684, %s685
      %p697 = scmp.eq.s32.totalorder %s55, 1
      %p698 = por %p696, %p697
      %p700 = scmp.ne.s32.totalorder %s685, %s699
      %p701 = scmp.eq.s32.totalorder %s55, 0
      %p702 = por %p700, %p701
      %s703 = ssub.s32 %s49, %s56
      %p704 = scmp.eq.s32.totalorder %s703, 0
      %s706 = sadd.s32 %s705, 1
      %s707 = scalar_select %p704, %s705, %s706
      %p710 = pneg %p704
      %p711 = scmp.eq.s32.totalorder %s49, 1
      %p712 = por %p710, %p711
      %p713 = scmp.ne.s32.totalorder %s705, %s708
      %p714 = scmp.eq.s32.totalorder %s49, 0
      %p715 = por %p713, %p714
      %p716 = scmp.ne.s32.totalorder %s705, %s708
      %p717 = scmp.eq.s32.totalorder %s54, 1
      %p718 = por %p716, %p717
      %p719 = scmp.ne.s32.totalorder %s708, %s709
      %p720 = scmp.eq.s32.totalorder %s54, 0
      %p721 = por %p719, %p720
      %p722 = scmp.ne.s32.totalorder %s708, %s709
      %p723 = scmp.eq.s32.totalorder %s55, 1
      %p724 = por %p722, %p723
      %p726 = scmp.ne.s32.totalorder %s709, %s725
      %p727 = scmp.eq.s32.totalorder %s55, 0
      %p728 = por %p726, %p727
      %s729 = ssub.s32 %s49, %s56
      %p730 = scmp.eq.s32.totalorder %s729, 0
      %s732 = sadd.s32 %s731, 1
      %s733 = scalar_select %p730, %s731, %s732
      %p736 = pneg %p730
      %p737 = scmp.eq.s32.totalorder %s49, 1
      %p738 = por %p736, %p737
      %p739 = scmp.ne.s32.totalorder %s731, %s734
      %p740 = scmp.eq.s32.totalorder %s49, 0
      %p741 = por %p739, %p740
      %p742 = scmp.ne.s32.totalorder %s731, %s734
      %p743 = scmp.eq.s32.totalorder %s54, 1
      %p744 = por %p742, %p743
      %p745 = scmp.ne.s32.totalorder %s734, %s735
      %p746 = scmp.eq.s32.totalorder %s54, 0
      %p747 = por %p745, %p746
      %p748 = scmp.ne.s32.totalorder %s734, %s735
      %p749 = scmp.eq.s32.totalorder %s55, 1
      %p750 = por %p748, %p749
      %p752 = scmp.ne.s32.totalorder %s735, %s751
      %p753 = scmp.eq.s32.totalorder %s55, 0
      %p754 = por %p752, %p753
      %p755 = scmp.le.s32.totalorder 1, %s49
      %p756 = scmp.lt.s32.totalorder %s49, 3
      %p757 = pnand %p755, %p756
      %p758 = pneg %p757
      // Predicated region
      $region9: #{tpu_custom_call.1} parent=5 // pred_check
        _
      $region10: #{tpu_custom_call.1} parent=5 // pred_check_branch
        %760 = sbr.rel (%p757) target = $region12
      $region11: #{tpu_custom_call.1} parent=5 // pred_region
        %s761 = ssub.s32 %s49, 1
        // Predicated region
        $region13: #{tpu_custom_call.1} parent=11 // pred_check
          %p762 = pneg %p70
        $region14: #{tpu_custom_call.1} parent=11 // pred_check_branch
          %764 = sbr.rel (%p762) target = $region16
        $region15: #{tpu_custom_call.1} parent=11 // pred_region
          %s766 = ssub.s32 256, 256
          %767 = vsyncadd [#allocation3], %s766
          %s768 = sshll.u32 [#allocation2], 4
          %s769 = int_to_ptr.vmem [resolvable:$true] %s768
          %774 = dma.hbm_to_vmem [thread:$0]  %s0, 256, %s769, [#allocation3], 128, 128, 8
        $region16: #{tpu_custom_call.1} parent=11 // pred_fallthru
          _
        // Predicated region
        $region17: #{tpu_custom_call.1} parent=11 // pred_check
          %p775 = pneg %p91
        $region18: #{tpu_custom_call.1} parent=11 // pred_check_branch
          %777 = sbr.rel (%p775) target = $region20
        $region19: #{tpu_custom_call.1} parent=11 // pred_region
          _
        $region20: #{tpu_custom_call.1} parent=11 // pred_fallthru
          _
        // Predicated region
        $region21: #{tpu_custom_call.1} parent=11 // pred_check
          %p778 = pneg %p112
        $region22: #{tpu_custom_call.1} parent=11 // pred_check_branch
          %780 = sbr.rel (%p778) target = $region24
        $region23: #{tpu_custom_call.1} parent=11 // pred_region
          _
        $region24: #{tpu_custom_call.1} parent=11 // pred_fallthru
          _
        // Predicated region
        $region25: #{tpu_custom_call.1} parent=11 // pred_check
          %p781 = pneg %p133
        $region26: #{tpu_custom_call.1} parent=11 // pred_check_branch
          %783 = sbr.rel (%p781) target = $region28
        $region27: #{tpu_custom_call.1} parent=11 // pred_region
          %s785 = ssub.s32 256, 256
          %786 = vsyncadd [#allocation6], %s785
          %s787 = sshll.u32 [#allocation5], 4
          %s788 = int_to_ptr.vmem [resolvable:$true] %s787
          %793 = dma.hbm_to_vmem [thread:$0]  %s3, 256, %s788, [#allocation6], 128, 128, 8
        $region28: #{tpu_custom_call.1} parent=11 // pred_fallthru
          _
        // Predicated region
        $region29: #{tpu_custom_call.1} parent=11 // pred_check
          %p794 = pneg %p154
        $region30: #{tpu_custom_call.1} parent=11 // pred_check_branch
          %796 = sbr.rel (%p794) target = $region32
        $region31: #{tpu_custom_call.1} parent=11 // pred_region
          %s798 = ssub.s32 256, 256
          %799 = vsyncadd [#allocation6], %s798
          %s800 = sshll.u32 [#allocation7], 4
          %s801 = int_to_ptr.vmem [resolvable:$true] %s800
          %806 = dma.hbm_to_vmem [thread:$0]  %s4, 256, %s801, [#allocation6], 128, 128, 8
        $region32: #{tpu_custom_call.1} parent=11 // pred_fallthru
          _
      $region12: #{tpu_custom_call.1} parent=5 // pred_fallthru
        _
      %p807 = scmp.lt.s32.totalorder %s49, 2
      // Predicated region
      $region33: #{tpu_custom_call.1} parent=5 // pred_check
        %p808 = pneg %p807
      $region34: #{tpu_custom_call.1} parent=5 // pred_check_branch
        %810 = sbr.rel (%p808) target = $region36
      $region35: #{tpu_custom_call.1} parent=5 // pred_region
        // Predicated region
        $region37: #{tpu_custom_call.1} parent=35 // pred_check
          %p811 = pneg %p174
        $region38: #{tpu_custom_call.1} parent=35 // pred_check_branch
          %813 = sbr.rel (%p811) target = $region40
        $region39: #{tpu_custom_call.1} parent=35 // pred_region
          %p814 = scmp.lt.s32.totalorder %s49, 1
          %s815 = scalar_select %p814, %s49, 1
          %s816 = smul.addr %s815, 4
          %s817 = smul.addr %s816, 4
          %s818 = scalar_lea.vmem %s5, %s817
        $region40: #{tpu_custom_call.1} parent=35 // pred_fallthru
          _
        // Predicated region
        $region41: #{tpu_custom_call.1} parent=35 // pred_check
          %p819 = pneg %p200
        $region42: #{tpu_custom_call.1} parent=35 // pred_check_branch
          %821 = sbr.rel (%p819) target = $region44
        $region43: #{tpu_custom_call.1} parent=35 // pred_region
          %p822 = scmp.lt.s32.totalorder %s49, 1
          %s823 = scalar_select %p822, %s49, 1
          %s824 = scalar_lea.vmem %s6, %s823
        $region44: #{tpu_custom_call.1} parent=35 // pred_fallthru
          _
        // Predicated region
        $region45: #{tpu_custom_call.1} parent=35 // pred_check
          %p825 = pneg %p226
        $region46: #{tpu_custom_call.1} parent=35 // pred_check_branch
          %827 = sbr.rel (%p825) target = $region48
        $region47: #{tpu_custom_call.1} parent=35 // pred_region
          %p828 = scmp.lt.s32.totalorder %s49, 1
          %s829 = scalar_select %p828, %s49, 1
          %s830 = smul.addr %s829, 4
          %s831 = smul.addr %s830, 4
          %s832 = scalar_lea.vmem %s7, %s831
        $region48: #{tpu_custom_call.1} parent=35 // pred_fallthru
          _
        // Predicated region
        $region49: #{tpu_custom_call.1} parent=35 // pred_check
          %p833 = pneg %p252
        $region50: #{tpu_custom_call.1} parent=35 // pred_check_branch
          %835 = sbr.rel (%p833) target = $region52
        $region51: #{tpu_custom_call.1} parent=35 // pred_region
          %s836 = sand.u32 %s49, 1
          %s837 = scalar_lea.sflag [#allocation9], %s836
          %s838 = sand.u32 %s242, 1
          %s839 = scalar_lea.vmem [#allocation8], %s838
          %s841 = ssub.s32 16, 16
          %842 = vsyncadd %s837, %s841
          %s843 = smul.addr %s49, 16
          %s844 = scalar_lea.hbm %s8, %s843
          %s846 = sshll.u32 %s839, 4
          %s847 = int_to_ptr.vmem [resolvable:$true] %s846
          %849 = dma.hbm_to_vmem [thread:$0]  %s844, 16, %s847, %s837
        $region52: #{tpu_custom_call.1} parent=35 // pred_fallthru
          _
        // Predicated region
        $region53: #{tpu_custom_call.1} parent=35 // pred_check
          %p850 = pneg %p278
        $region54: #{tpu_custom_call.1} parent=35 // pred_check_branch
          %852 = sbr.rel (%p850) target = $region56
        $region55: #{tpu_custom_call.1} parent=35 // pred_region
          %s853 = sand.u32 %s49, 1
          %s854 = scalar_lea.sflag [#allocation9], %s853
          %s855 = sand.u32 %s268, 1
          %s856 = scalar_lea.vmem [#allocation10], %s855
          %s858 = ssub.s32 16, 16
          %859 = vsyncadd %s854, %s858
          %s860 = smul.addr %s49, 16
          %s861 = scalar_lea.hbm %s9, %s860
          %s863 = sshll.u32 %s856, 4
          %s864 = int_to_ptr.vmem [resolvable:$true] %s863
          %866 = dma.hbm_to_vmem [thread:$0]  %s861, 16, %s864, %s854
        $region56: #{tpu_custom_call.1} parent=35 // pred_fallthru
          _
        // Predicated region
        $region57: #{tpu_custom_call.1} parent=35 // pred_check
          %p867 = pneg %p304
        $region58: #{tpu_custom_call.1} parent=35 // pred_check_branch
          %869 = sbr.rel (%p867) target = $region60
        $region59: #{tpu_custom_call.1} parent=35 // pred_region
          %s870 = sand.u32 %s49, 1
          %s871 = scalar_lea.sflag [#allocation12], %s870
          %s872 = sand.u32 %s294, 1
          %s873 = scalar_lea.vmem [#allocation11], %s872
          %s875 = ssub.s32 16, 16
          %876 = vsyncadd %s871, %s875
          %s877 = smul.addr %s49, 16
          %s878 = scalar_lea.hbm %s10, %s877
          %s880 = sshll.u32 %s873, 4
          %s881 = int_to_ptr.vmem [resolvable:$true] %s880
          %883 = dma.hbm_to_vmem [thread:$0]  %s878, 16, %s881, %s871
        $region60: #{tpu_custom_call.1} parent=35 // pred_fallthru
          _
        // Predicated region
        $region61: #{tpu_custom_call.1} parent=35 // pred_check
          %p884 = pneg %p330
        $region62: #{tpu_custom_call.1} parent=35 // pred_check_branch
          %886 = sbr.rel (%p884) target = $region64
        $region63: #{tpu_custom_call.1} parent=35 // pred_region
          %p887 = scmp.lt.s32.totalorder %s49, 1
          %s888 = scalar_select %p887, %s49, 1
          %s889 = smul.addr %s888, 4
          %s890 = smul.addr %s889, 4
          %s891 = scalar_lea.vmem %s11, %s890
        $region64: #{tpu_custom_call.1} parent=35 // pred_fallthru
          _
        // Predicated region
        $region65: #{tpu_custom_call.1} parent=35 // pred_check
          %p892 = pneg %p356
        $region66: #{tpu_custom_call.1} parent=35 // pred_check_branch
          %894 = sbr.rel (%p892) target = $region68
        $region67: #{tpu_custom_call.1} parent=35 // pred_region
          %s895 = sand.u32 %s49, 1
          %s896 = scalar_lea.sflag [#allocation12], %s895
          %s897 = sand.u32 %s346, 1
          %s898 = scalar_lea.vmem [#allocation13], %s897
          %s900 = ssub.s32 16, 16
          %901 = vsyncadd %s896, %s900
          %s902 = smul.addr %s49, 16
          %s903 = scalar_lea.hbm %s12, %s902
          %s905 = sshll.u32 %s898, 4
          %s906 = int_to_ptr.vmem [resolvable:$true] %s905
          %908 = dma.hbm_to_vmem [thread:$0]  %s903, 16, %s906, %s896
        $region68: #{tpu_custom_call.1} parent=35 // pred_fallthru
          _
        // Predicated region
        $region69: #{tpu_custom_call.1} parent=35 // pred_check
          %p909 = pneg %p382
        $region70: #{tpu_custom_call.1} parent=35 // pred_check_branch
          %911 = sbr.rel (%p909) target = $region72
        $region71: #{tpu_custom_call.1} parent=35 // pred_region
          %p912 = scmp.lt.s32.totalorder %s49, 1
          %s913 = scalar_select %p912, %s49, 1
          %s914 = smul.addr %s913, 4
          %s915 = smul.addr %s914, 4
          %s916 = scalar_lea.vmem %s13, %s915
        $region72: #{tpu_custom_call.1} parent=35 // pred_fallthru
          _
        // Predicated region
        $region73: #{tpu_custom_call.1} parent=35 // pred_check
          %p917 = pneg %p408
        $region74: #{tpu_custom_call.1} parent=35 // pred_check_branch
          %919 = sbr.rel (%p917) target = $region76
        $region75: #{tpu_custom_call.1} parent=35 // pred_region
          %p920 = scmp.lt.s32.totalorder %s49, 1
          %s921 = scalar_select %p920, %s49, 1
          %s922 = scalar_lea.vmem %s14, %s921
        $region76: #{tpu_custom_call.1} parent=35 // pred_fallthru
          _
        // Predicated region
        $region77: #{tpu_custom_call.1} parent=35 // pred_check
          %p923 = pneg %p434
        $region78: #{tpu_custom_call.1} parent=35 // pred_check_branch
          %925 = sbr.rel (%p923) target = $region80
        $region79: #{tpu_custom_call.1} parent=35 // pred_region
          %s926 = sand.u32 %s49, 1
          %s927 = scalar_lea.sflag [#allocation15], %s926
          %s928 = sand.u32 %s424, 1
          %s929 = smul.addr %s928, 16
          %s930 = scalar_lea.vmem [#allocation14], %s929
          %s932 = ssub.s32 256, 256
          %933 = vsyncadd %s927, %s932
          %s934 = smul.addr %s49, 4
          %s935 = smul.addr %s934, 64
          %s936 = scalar_lea.hbm %s15, %s935
          %s937 = sshll.u32 %s930, 4
          %s938 = int_to_ptr.vmem [resolvable:$true] %s937
          %943 = dma.hbm_to_vmem [thread:$0]  %s936, 256, %s938, %s927, 64, 64, 4
        $region80: #{tpu_custom_call.1} parent=35 // pred_fallthru
          _
        // Predicated region
        $region81: #{tpu_custom_call.1} parent=35 // pred_check
          %p944 = pneg %p460
        $region82: #{tpu_custom_call.1} parent=35 // pred_check_branch
          %946 = sbr.rel (%p944) target = $region84
        $region83: #{tpu_custom_call.1} parent=35 // pred_region
          %p947 = scmp.lt.s32.totalorder %s49, 1
          %s948 = scalar_select %p947, %s49, 1
          %s949 = scalar_lea.vmem %s16, %s948
        $region84: #{tpu_custom_call.1} parent=35 // pred_fallthru
          _
        // Predicated region
        $region85: #{tpu_custom_call.1} parent=35 // pred_check
          %p950 = pneg %p486
        $region86: #{tpu_custom_call.1} parent=35 // pred_check_branch
          %952 = sbr.rel (%p950) target = $region88
        $region87: #{tpu_custom_call.1} parent=35 // pred_region
          %p953 = scmp.lt.s32.totalorder %s49, 1
          %s954 = scalar_select %p953, %s49, 1
          %s955 = scalar_lea.vmem %s17, %s954
        $region88: #{tpu_custom_call.1} parent=35 // pred_fallthru
          _
        // Predicated region
        $region89: #{tpu_custom_call.1} parent=35 // pred_check
          %p956 = pneg %p512
        $region90: #{tpu_custom_call.1} parent=35 // pred_check_branch
          %958 = sbr.rel (%p956) target = $region92
        $region91: #{tpu_custom_call.1} parent=35 // pred_region
          %p959 = scmp.lt.s32.totalorder %s49, 1
          %s960 = scalar_select %p959, %s49, 1
          %s961 = scalar_lea.vmem %s18, %s960
        $region92: #{tpu_custom_call.1} parent=35 // pred_fallthru
          _
        // Predicated region
        $region93: #{tpu_custom_call.1} parent=35 // pred_check
          %p962 = pneg %p538
        $region94: #{tpu_custom_call.1} parent=35 // pred_check_branch
          %964 = sbr.rel (%p962) target = $region96
        $region95: #{tpu_custom_call.1} parent=35 // pred_region
          %s965 = sand.u32 %s49, 1
          %s966 = scalar_lea.sflag [#allocation15], %s965
          %s967 = sand.u32 %s528, 1
          %s968 = smul.addr %s967, 16
          %s969 = scalar_lea.vmem [#allocation16], %s968
          %s971 = ssub.s32 256, 256
          %972 = vsyncadd %s966, %s971
          %s973 = smul.addr %s49, 4
          %s974 = smul.addr %s973, 64
          %s975 = scalar_lea.hbm %s19, %s974
          %s976 = sshll.u32 %s969, 4
          %s977 = int_to_ptr.vmem [resolvable:$true] %s976
          %982 = dma.hbm_to_vmem [thread:$0]  %s975, 256, %s977, %s966, 64, 64, 4
        $region96: #{tpu_custom_call.1} parent=35 // pred_fallthru
          _
        // Predicated region
        $region97: #{tpu_custom_call.1} parent=35 // pred_check
          %p983 = pneg %p564
        $region98: #{tpu_custom_call.1} parent=35 // pred_check_branch
          %985 = sbr.rel (%p983) target = $region100
        $region99: #{tpu_custom_call.1} parent=35 // pred_region
          %p986 = scmp.lt.s32.totalorder %s49, 1
          %s987 = scalar_select %p986, %s49, 1
          %s988 = scalar_lea.vmem %s20, %s987
        $region100: #{tpu_custom_call.1} parent=35 // pred_fallthru
          _
        // Predicated region
        $region101: #{tpu_custom_call.1} parent=35 // pred_check
          %p989 = pneg %p590
        $region102: #{tpu_custom_call.1} parent=35 // pred_check_branch
          %991 = sbr.rel (%p989) target = $region104
        $region103: #{tpu_custom_call.1} parent=35 // pred_region
          %p992 = scmp.lt.s32.totalorder %s49, 1
          %s993 = scalar_select %p992, %s49, 1
          %s994 = smul.addr %s993, 8
          %s995 = smul.addr %s994, 4
          %s996 = scalar_lea.vmem %s21, %s995
        $region104: #{tpu_custom_call.1} parent=35 // pred_fallthru
          _
        // Predicated region
        $region105: #{tpu_custom_call.1} parent=35 // pred_check
          %p997 = pneg %p616
        $region106: #{tpu_custom_call.1} parent=35 // pred_check_branch
          %999 = sbr.rel (%p997) target = $region108
        $region107: #{tpu_custom_call.1} parent=35 // pred_region
          %p1000 = scmp.lt.s32.totalorder %s49, 1
          %s1001 = scalar_select %p1000, %s49, 1
          %s1002 = scalar_lea.vmem %s22, %s1001
        $region108: #{tpu_custom_call.1} parent=35 // pred_fallthru
          _
        // Predicated region
        $region109: #{tpu_custom_call.1} parent=35 // pred_check
          %p1003 = pneg %p642
        $region110: #{tpu_custom_call.1} parent=35 // pred_check_branch
          %1005 = sbr.rel (%p1003) target = $region112
        $region111: #{tpu_custom_call.1} parent=35 // pred_region
          %p1006 = scmp.lt.s32.totalorder %s49, 1
          %s1007 = scalar_select %p1006, %s49, 1
          %s1008 = scalar_lea.vmem %s23, %s1007
        $region112: #{tpu_custom_call.1} parent=35 // pred_fallthru
          _
        // Predicated region
        $region113: #{tpu_custom_call.1} parent=35 // pred_check
          %p1009 = pneg %p668
        $region114: #{tpu_custom_call.1} parent=35 // pred_check_branch
          %1011 = sbr.rel (%p1009) target = $region116
        $region115: #{tpu_custom_call.1} parent=35 // pred_region
          %p1012 = scmp.lt.s32.totalorder %s49, 1
          %s1013 = scalar_select %p1012, %s49, 1
          %s1014 = scalar_lea.vmem %s24, %s1013
        $region116: #{tpu_custom_call.1} parent=35 // pred_fallthru
          _
      $region36: #{tpu_custom_call.1} parent=5 // pred_fallthru
        _
      %p1015 = scmp.le.s32.totalorder 1, %s49
      %p1016 = scmp.lt.s32.totalorder %s49, 3
      %p1017 = pnand %p1015, %p1016
      %p1018 = pneg %p1017
      // Predicated region
      $region117: #{tpu_custom_call.1} parent=5 // pred_check
        _
      $region118: #{tpu_custom_call.1} parent=5 // pred_check_branch
        %1020 = sbr.rel (%p1017) target = $region120
      $region119: #{tpu_custom_call.1} parent=5 // pred_region
        %s1021 = ssub.s32 %s49, 1
        // Predicated region
        $region121: #{tpu_custom_call.1} parent=119 // pred_check
          %p1022 = pneg %p70
        $region122: #{tpu_custom_call.1} parent=119 // pred_check_branch
          %1024 = sbr.rel (%p1022) target = $region124
        $region123: #{tpu_custom_call.1} parent=119 // pred_region
          %1025 = dma.done [#allocation3], 256
        $region124: #{tpu_custom_call.1} parent=119 // pred_fallthru
          _
        // Predicated region
        $region125: #{tpu_custom_call.1} parent=119 // pred_check
          %p1026 = pneg %p133
        $region126: #{tpu_custom_call.1} parent=119 // pred_check_branch
          %1028 = sbr.rel (%p1026) target = $region128
        $region127: #{tpu_custom_call.1} parent=119 // pred_region
          %1029 = dma.done [#allocation6], 256
        $region128: #{tpu_custom_call.1} parent=119 // pred_fallthru
          _
        // Predicated region
        $region129: #{tpu_custom_call.1} parent=119 // pred_check
          %p1030 = pneg %p154
        $region130: #{tpu_custom_call.1} parent=119 // pred_check_branch
          %1032 = sbr.rel (%p1030) target = $region132
        $region131: #{tpu_custom_call.1} parent=119 // pred_region
          %1033 = dma.done [#allocation6], 256
        $region132: #{tpu_custom_call.1} parent=119 // pred_fallthru
          _
        %s1034 = sand.u32 %s54, 1
        %s1035 = scalar_lea.sflag [#allocation9], %s1034
        %s1036 = sand.u32 %s245, 1
        %s1037 = scalar_lea.vmem [#allocation8], %s1036
        // Predicated region
        $region133: #{tpu_custom_call.1} parent=119 // pred_check
          %p1038 = pneg %p258
        $region134: #{tpu_custom_call.1} parent=119 // pred_check_branch
          %1040 = sbr.rel (%p1038) target = $region136
        $region135: #{tpu_custom_call.1} parent=119 // pred_region
          %1041 = dma.done %s1035, 16
        $region136: #{tpu_custom_call.1} parent=119 // pred_fallthru
          _
        %s1042 = sand.u32 %s54, 1
        %s1043 = scalar_lea.sflag [#allocation9], %s1042
        %s1044 = sand.u32 %s271, 1
        %s1045 = scalar_lea.vmem [#allocation10], %s1044
        // Predicated region
        $region137: #{tpu_custom_call.1} parent=119 // pred_check
          %p1046 = pneg %p284
        $region138: #{tpu_custom_call.1} parent=119 // pred_check_branch
          %1048 = sbr.rel (%p1046) target = $region140
        $region139: #{tpu_custom_call.1} parent=119 // pred_region
          %1049 = dma.done %s1043, 16
        $region140: #{tpu_custom_call.1} parent=119 // pred_fallthru
          _
        %s1050 = sand.u32 %s54, 1
        %s1051 = scalar_lea.sflag [#allocation12], %s1050
        %s1052 = sand.u32 %s297, 1
        %s1053 = scalar_lea.vmem [#allocation11], %s1052
        // Predicated region
        $region141: #{tpu_custom_call.1} parent=119 // pred_check
          %p1054 = pneg %p310
        $region142: #{tpu_custom_call.1} parent=119 // pred_check_branch
          %1056 = sbr.rel (%p1054) target = $region144
        $region143: #{tpu_custom_call.1} parent=119 // pred_region
          %1057 = dma.done %s1051, 16
        $region144: #{tpu_custom_call.1} parent=119 // pred_fallthru
          _
        %s1058 = sand.u32 %s54, 1
        %s1059 = scalar_lea.sflag [#allocation12], %s1058
        %s1060 = sand.u32 %s349, 1
        %s1061 = scalar_lea.vmem [#allocation13], %s1060
        // Predicated region
        $region145: #{tpu_custom_call.1} parent=119 // pred_check
          %p1062 = pneg %p362
        $region146: #{tpu_custom_call.1} parent=119 // pred_check_branch
          %1064 = sbr.rel (%p1062) target = $region148
        $region147: #{tpu_custom_call.1} parent=119 // pred_region
          %1065 = dma.done %s1059, 16
        $region148: #{tpu_custom_call.1} parent=119 // pred_fallthru
          _
        %s1066 = sand.u32 %s54, 1
        %s1067 = scalar_lea.sflag [#allocation15], %s1066
        %s1068 = sand.u32 %s427, 1
        %s1069 = smul.addr %s1068, 16
        %s1070 = scalar_lea.vmem [#allocation14], %s1069
        // Predicated region
        $region149: #{tpu_custom_call.1} parent=119 // pred_check
          %p1071 = pneg %p440
        $region150: #{tpu_custom_call.1} parent=119 // pred_check_branch
          %1073 = sbr.rel (%p1071) target = $region152
        $region151: #{tpu_custom_call.1} parent=119 // pred_region
          %1074 = dma.done %s1067, 256
        $region152: #{tpu_custom_call.1} parent=119 // pred_fallthru
          _
        %s1075 = sand.u32 %s54, 1
        %s1076 = scalar_lea.sflag [#allocation15], %s1075
        %s1077 = sand.u32 %s531, 1
        %s1078 = smul.addr %s1077, 16
        %s1079 = scalar_lea.vmem [#allocation16], %s1078
        // Predicated region
        $region153: #{tpu_custom_call.1} parent=119 // pred_check
          %p1080 = pneg %p544
        $region154: #{tpu_custom_call.1} parent=119 // pred_check_branch
          %1082 = sbr.rel (%p1080) target = $region156
        $region155: #{tpu_custom_call.1} parent=119 // pred_region
          %1083 = dma.done %s1076, 256
        $region156: #{tpu_custom_call.1} parent=119 // pred_fallthru
          _
        %p1084 = pneg %p70
        %p1085 = pneg %p67
        %p1086 = pneg %p91
        %p1087 = pneg %p88
        %p1088 = pneg %p112
        %p1089 = pneg %p109
        %p1090 = pneg %p133
        %p1091 = pneg %p130
        %p1092 = pneg %p154
        %p1093 = pneg %p151
        %p1094 = scmp.lt.s32.totalorder %s54, 1
        %s1095 = scalar_select %p1094, %s54, 1
        %s1096 = smul.addr %s1095, 4
        %s1097 = smul.addr %s1096, 4
        %s1098 = scalar_lea.vmem %s5, %s1097
        %p1099 = pneg %p180
        %p1100 = pneg %p177
        %p1101 = scmp.lt.s32.totalorder %s54, 1
        %s1102 = scalar_select %p1101, %s54, 1
        %s1103 = scalar_lea.vmem %s6, %s1102
        %p1104 = pneg %p206
        %p1105 = pneg %p203
        %p1106 = scmp.lt.s32.totalorder %s54, 1
        %s1107 = scalar_select %p1106, %s54, 1
        %s1108 = smul.addr %s1107, 4
        %s1109 = smul.addr %s1108, 4
        %s1110 = scalar_lea.vmem %s7, %s1109
        %p1111 = pneg %p232
        %p1112 = pneg %p229
        %s1113 = sand.u32 %s54, 1
        %s1114 = scalar_lea.sflag [#allocation9], %s1113
        %s1115 = sand.u32 %s245, 1
        %s1116 = scalar_lea.vmem [#allocation8], %s1115
        %p1117 = pneg %p258
        %p1118 = pneg %p255
        %s1119 = sand.u32 %s54, 1
        %s1120 = scalar_lea.sflag [#allocation9], %s1119
        %s1121 = sand.u32 %s271, 1
        %s1122 = scalar_lea.vmem [#allocation10], %s1121
        %p1123 = pneg %p284
        %p1124 = pneg %p281
        %s1125 = sand.u32 %s54, 1
        %s1126 = scalar_lea.sflag [#allocation12], %s1125
        %s1127 = sand.u32 %s297, 1
        %s1128 = scalar_lea.vmem [#allocation11], %s1127
        %p1129 = pneg %p310
        %p1130 = pneg %p307
        %p1131 = scmp.lt.s32.totalorder %s54, 1
        %s1132 = scalar_select %p1131, %s54, 1
        %s1133 = smul.addr %s1132, 4
        %s1134 = smul.addr %s1133, 4
        %s1135 = scalar_lea.vmem %s11, %s1134
        %p1136 = pneg %p336
        %p1137 = pneg %p333
        %s1138 = sand.u32 %s54, 1
        %s1139 = scalar_lea.sflag [#allocation12], %s1138
        %s1140 = sand.u32 %s349, 1
        %s1141 = scalar_lea.vmem [#allocation13], %s1140
        %p1142 = pneg %p362
        %p1143 = pneg %p359
        %p1144 = scmp.lt.s32.totalorder %s54, 1
        %s1145 = scalar_select %p1144, %s54, 1
        %s1146 = smul.addr %s1145, 4
        %s1147 = smul.addr %s1146, 4
        %s1148 = scalar_lea.vmem %s13, %s1147
        %p1149 = pneg %p388
        %p1150 = pneg %p385
        %p1151 = scmp.lt.s32.totalorder %s54, 1
        %s1152 = scalar_select %p1151, %s54, 1
        %s1153 = scalar_lea.vmem %s14, %s1152
        %p1154 = pneg %p414
        %p1155 = pneg %p411
        %s1156 = sand.u32 %s54, 1
        %s1157 = scalar_lea.sflag [#allocation15], %s1156
        %s1158 = sand.u32 %s427, 1
        %s1159 = smul.addr %s1158, 16
        %s1160 = scalar_lea.vmem [#allocation14], %s1159
        %p1161 = pneg %p440
        %p1162 = pneg %p437
        %p1163 = scmp.lt.s32.totalorder %s54, 1
        %s1164 = scalar_select %p1163, %s54, 1
        %s1165 = scalar_lea.vmem %s16, %s1164
        %p1166 = pneg %p466
        %p1167 = pneg %p463
        %p1168 = scmp.lt.s32.totalorder %s54, 1
        %s1169 = scalar_select %p1168, %s54, 1
        %s1170 = scalar_lea.vmem %s17, %s1169
        %p1171 = pneg %p492
        %p1172 = pneg %p489
        %p1173 = scmp.lt.s32.totalorder %s54, 1
        %s1174 = scalar_select %p1173, %s54, 1
        %s1175 = scalar_lea.vmem %s18, %s1174
        %p1176 = pneg %p518
        %p1177 = pneg %p515
        %s1178 = sand.u32 %s54, 1
        %s1179 = scalar_lea.sflag [#allocation15], %s1178
        %s1180 = sand.u32 %s531, 1
        %s1181 = smul.addr %s1180, 16
        %s1182 = scalar_lea.vmem [#allocation16], %s1181
        %p1183 = pneg %p544
        %p1184 = pneg %p541
        %p1185 = scmp.lt.s32.totalorder %s54, 1
        %s1186 = scalar_select %p1185, %s54, 1
        %s1187 = scalar_lea.vmem %s20, %s1186
        %p1188 = pneg %p570
        %p1189 = pneg %p567
        %p1190 = scmp.lt.s32.totalorder %s54, 1
        %s1191 = scalar_select %p1190, %s54, 1
        %s1192 = smul.addr %s1191, 8
        %s1193 = smul.addr %s1192, 4
        %s1194 = scalar_lea.vmem %s21, %s1193
        %p1195 = pneg %p596
        %p1196 = pneg %p593
        %p1197 = scmp.lt.s32.totalorder %s54, 1
        %s1198 = scalar_select %p1197, %s54, 1
        %s1199 = scalar_lea.vmem %s22, %s1198
        %p1200 = pneg %p622
        %p1201 = pneg %p619
        %p1202 = scmp.lt.s32.totalorder %s54, 1
        %s1203 = scalar_select %p1202, %s54, 1
        %s1204 = scalar_lea.vmem %s23, %s1203
        %p1205 = pneg %p648
        %p1206 = pneg %p645
        %p1207 = scmp.lt.s32.totalorder %s54, 1
        %s1208 = scalar_select %p1207, %s54, 1
        %s1209 = scalar_lea.vmem %s24, %s1208
        %p1210 = pneg %p674
        %p1211 = pneg %p671
        %p1212 = pneg %p695
        %p1213 = pneg %p692
        %p1214 = pneg %p721
        %p1215 = pneg %p718
        %s1216 = sand.u32 %s54, 1
        %s1217 = scalar_lea.sflag [#allocation19], %s1216
        %s1218 = sand.u32 %s708, 1
        %s1219 = smul.addr %s1218, 32
        %s1220 = scalar_lea.vmem [#allocation18], %s1219
        %p1221 = pneg %p747
        %p1222 = pneg %p744
        %s1223 = sand.u32 %s54, 1
        %s1224 = scalar_lea.sflag [#allocation19], %s1223
        %s1225 = sand.u32 %s734, 1
        %s1226 = smul.addr %s1225, 32
        %s1227 = scalar_lea.vmem [#allocation20], %s1226
        %p1228 = scmp.lt.s32.totalorder %s54, 1
        %s1229 = scalar_select %p1228, %s54, 1
        %s1230 = smul.addr %s1229, 4
        %s1231 = smul.addr %s1230, 4
        %s1232 = scalar_lea.vmem %s5, %s1231
        %p1233 = scmp.lt.s32.totalorder %s54, 1
        %s1234 = scalar_select %p1233, %s54, 1
        %s1235 = scalar_lea.vmem %s6, %s1234
        %p1236 = scmp.lt.s32.totalorder %s54, 1
        %s1237 = scalar_select %p1236, %s54, 1
        %s1238 = smul.addr %s1237, 4
        %s1239 = smul.addr %s1238, 4
        %s1240 = scalar_lea.vmem %s7, %s1239
        %p1241 = scmp.lt.s32.totalorder %s54, 1
        %s1242 = scalar_select %p1241, %s54, 1
        %s1243 = smul.addr %s1242, 4
        %s1244 = smul.addr %s1243, 4
        %s1245 = scalar_lea.vmem %s11, %s1244
        %p1246 = scmp.lt.s32.totalorder %s54, 1
        %s1247 = scalar_select %p1246, %s54, 1
        %s1248 = smul.addr %s1247, 4
        %s1249 = smul.addr %s1248, 4
        %s1250 = scalar_lea.vmem %s13, %s1249
        %p1251 = scmp.lt.s32.totalorder %s54, 1
        %s1252 = scalar_select %p1251, %s54, 1
        %s1253 = scalar_lea.vmem %s14, %s1252
        %p1254 = scmp.lt.s32.totalorder %s54, 1
        %s1255 = scalar_select %p1254, %s54, 1
        %s1256 = scalar_lea.vmem %s16, %s1255
        %p1257 = scmp.lt.s32.totalorder %s54, 1
        %s1258 = scalar_select %p1257, %s54, 1
        %s1259 = scalar_lea.vmem %s17, %s1258
        %p1260 = scmp.lt.s32.totalorder %s54, 1
        %s1261 = scalar_select %p1260, %s54, 1
        %s1262 = scalar_lea.vmem %s18, %s1261
        %p1263 = scmp.lt.s32.totalorder %s54, 1
        %s1264 = scalar_select %p1263, %s54, 1
        %s1265 = scalar_lea.vmem %s20, %s1264
        %p1266 = scmp.lt.s32.totalorder %s54, 1
        %s1267 = scalar_select %p1266, %s54, 1
        %s1268 = smul.addr %s1267, 8
        %s1269 = smul.addr %s1268, 4
        %s1270 = scalar_lea.vmem %s21, %s1269
        %p1271 = scmp.lt.s32.totalorder %s54, 1
        %s1272 = scalar_select %p1271, %s54, 1
        %s1273 = scalar_lea.vmem %s22, %s1272
        %p1274 = scmp.lt.s32.totalorder %s54, 1
        %s1275 = scalar_select %p1274, %s54, 1
        %s1276 = scalar_lea.vmem %s23, %s1275
        %p1277 = scmp.lt.s32.totalorder %s54, 1
        %s1278 = scalar_select %p1277, %s54, 1
        %s1279 = scalar_lea.vmem %s24, %s1278
        %p1281 = scmp.eq.s32.totalorder %s54, 0
        // Predicated region
        $region157: #{tpu_custom_call.1} parent=119 // pred_check
          %p1282 = pneg %p1281
        $region158: #{tpu_custom_call.1} parent=119 // pred_check_branch
          %1284 = sbr.rel (%p1282) target = $region160
        $region159: #{tpu_custom_call.1} parent=119 // pred_region
          %v1285 = vld [vmem:[#allocation2] sm:$0xff]
          %v1286 = vld [vmem:[#allocation2 + $0x8] sm:$0xff]
          %vm1287 = vcmask 261120
          %1288 = vst.msk [vmem:[#allocation17] sm:$0xff] %vm1287, %v1285
          %1289 = vst.msk [vmem:[#allocation17 + $0x8] sm:$0xff] %vm1287, %v1286
        $region160: #{tpu_custom_call.1} parent=119 // pred_fallthru
          _
        %v1290 = vld [vmem:[#allocation17] sm:$0xff]
        %v1291 = vld [vmem:[#allocation17 + $0x8] sm:$0xff]
        %v1292 = vld [vmem:[%s2] sm:$0xff]
        %v1293 = vld [vmem:[%s2 + $0x8] sm:$0xff]
        %v1294 = vld [vmem:[#allocation5] sm:$0xff]
        %v1295 = vld [vmem:[#allocation5 + $0x8] sm:$0xff]
        %v1296 = vld [vmem:[#allocation7] sm:$0xff]
        %v1297 = vld [vmem:[#allocation7 + $0x8] sm:$0xff]
        %v1298 = vpack.c.bf16 %v1291, %v1290
        %v1299 = vld [vmem:[%s1232] sm:$0xf]
        %v1300 = vld [vmem:[%s1232 + $0x4] sm:$0xf]
        %v1301 = vld [vmem:[%s1232 + $0x8] sm:$0xf]
        %v1302 = vld [vmem:[%s1232 + $0xc] sm:$0xf]
        %v1303 = vld [vmem:[%s1235] sm:$0x1]
        %v1305 = vlaneseq
        %v1306 = vshrl.u32 %v1305, 7
        %v1307 = vsub.s32 0, %v1306
        %v1308 = vrot.slane %v1303, %v1307
        %v1314 = vunpack.c.l.b16 %v1299
        %v1315 = vunpack.c.l.b16 %v1300
        %v1316 = vunpack.c.l.b16 %v1301
        %v1317 = vunpack.c.l.b16 %v1302
        %v1318 = vpack.c.b16 %v1315, %v1314
        %v1319 = vpack.c.b16 %v1317, %v1316
        %vm1322 = vcmask 261120
        %v1324 = vsel %vm1322, %v1298, 0
        %1326 = vmatprep.subr.bf16.mxu0 0
        %1327 = vmatpush1.bf16.msra.mxu0 %v1318
        %1328 = vmatprep.subr.bf16.mxu0 0
        %1329 = vmatpush1.bf16.msra.mxu0 %v1319
        %1330 = vmatprep.subr.bf16.mxu0 0
        %1331 = vmatpush1.bf16.msra.mxu0 0
        %1332 = vmatprep.subr.bf16.mxu0 0
        %1333 = vmatpush1.bf16.msra.mxu0 0
        %1334 = vmatprep.subr.bf16.mxu0 0
        %1335 = vmatpush1.bf16.msra.mxu0 0
        %1336 = vmatprep.subr.bf16.mxu0 0
        %1337 = vmatpush1.bf16.msra.mxu0 0
        %1338 = vmatprep.subr.bf16.mxu0 0
        %1339 = vmatpush1.bf16.msra.mxu0 0
        %1340 = vmatprep.subr.bf16.mxu0 0
        %1341 = vmatpush1.bf16.msra.mxu0 0
        %1342 = vmatprep.subr.bf16.mxu0 0
        %1343 = vmatpush1.bf16.msra.mxu0 0
        %1344 = vmatprep.subr.bf16.mxu0 0
        %1345 = vmatpush1.bf16.msra.mxu0 0
        %1346 = vmatprep.subr.bf16.mxu0 0
        %1347 = vmatpush1.bf16.msra.mxu0 0
        %1348 = vmatprep.subr.bf16.mxu0 0
        %1349 = vmatpush1.bf16.msra.mxu0 0
        %1350 = vmatprep.subr.bf16.mxu0 0
        %1351 = vmatpush1.bf16.msra.mxu0 0
        %1352 = vmatprep.subr.bf16.mxu0 0
        %1353 = vmatpush1.bf16.msra.mxu0 0
        %1354 = vmatprep.subr.bf16.mxu0 0
        %1355 = vmatpush1.bf16.msra.mxu0 0
        %1356 = vmatprep.subr.bf16.mxu0 0
        %1357 = vmatpush1.bf16.msra.mxu0 0
        %1358 = vmatprep.mubr.bf16.mxu0 0
        %1359 = vmatmul.mubr.bf16.gmra.mrb[0].mxu0 %v1324
        %v1360 = vpop.f32.mrb[0].mxu0
        %v1361 = vadd.f32 %v1308, %v1360
        %v1362 = vpop.f32.mrb[0].mxu0
        %v1363 = vpop.f32.mrb[0].mxu0
        %v1364 = vadd.f32 %v1308, %v1363
        %v1365 = vpop.f32.mrb[0].mxu0
        %1366 = vdwg.mxu0
        %v1367 = vld [vmem:[%s1037] sm:$0x1]
        %v1369 = vlaneseq
        %v1370 = vshrl.u32 %v1369, 7
        %v1371 = vsub.s32 0, %v1370
        %v1372 = vrot.slane %v1367, %v1371
        %v1374 = vadd.f32 %v1290, %v1372
        %v1375 = vadd.f32 %v1291, %v1372
        %v1376 = vpack.c.bf16 %v1361, %v1361
        %v1377 = vpack.c.bf16 %v1364, %v1364
        %1379 = vrot.lane.b32.xlu0 %v1376, 96
        %v1380 = vpop.permute.xlu0 %1379
        %vm1381 = vcmask 130048
        %v1383 = vsel %vm1381, %v1376, 0
        %v1386 = vsel %vm1381, %v1380, 0
        %1388 = vmatprep.subr.bf16.mxu0 0
        %1389 = vmatpush1.bf16.xpose.msra.mxu0 %v1386
        %1390 = vmatprep.subr.bf16.mxu0 0
        %1391 = vmatpush1.bf16.xpose.msra.mxu0 0
        %1392 = vmatprep.subr.bf16.mxu0 0
        %1393 = vmatpush1.bf16.xpose.msra.mxu0 0
        %1394 = vmatprep.subr.bf16.mxu0 0
        %1395 = vmatpush1.bf16.xpose.msra.mxu0 0
        %1396 = vmatprep.subr.bf16.mxu0 0
        %1397 = vmatpush1.bf16.xpose.msra.mxu0 0
        %1398 = vmatprep.subr.bf16.mxu0 0
        %1399 = vmatpush1.bf16.xpose.msra.mxu0 0
        %1400 = vmatprep.subr.bf16.mxu0 0
        %1401 = vmatpush1.bf16.xpose.msra.mxu0 0
        %1402 = vmatprep.subr.bf16.mxu0 0
        %1403 = vmatpush1.bf16.xpose.msra.mxu0 0
        %1404 = vmatprep.subr.bf16.mxu0 0
        %1405 = vmatpush1.bf16.xpose.msra.mxu0 0
        %1406 = vmatprep.subr.bf16.mxu0 0
        %1407 = vmatpush1.bf16.xpose.msra.mxu0 0
        %1408 = vmatprep.subr.bf16.mxu0 0
        %1409 = vmatpush1.bf16.xpose.msra.mxu0 0
        %1410 = vmatprep.subr.bf16.mxu0 0
        %1411 = vmatpush1.bf16.xpose.msra.mxu0 0
        %1412 = vmatprep.subr.bf16.mxu0 0
        %1413 = vmatpush1.bf16.xpose.msra.mxu0 0
        %1414 = vmatprep.subr.bf16.mxu0 0
        %1415 = vmatpush1.bf16.xpose.msra.mxu0 0
        %1416 = vmatprep.subr.bf16.mxu0 0
        %1417 = vmatpush1.bf16.xpose.msra.mxu0 0
        %1418 = vmatprep.subr.bf16.mxu0 0
        %1419 = vmatpush1.bf16.xpose.msra.mxu0 0
        %1420 = vmatprep.mubr.bf16.mxu0 0
        %1421 = vmatmul.mubr.bf16.gmra.mrb[0].mxu0 %v1383
        %v1422 = vpop.f32.mrb[0].mxu0
        %v1423 = vadd.f32 0.0, %v1422
        %v1424 = vpop.f32.mrb[0].mxu0
        %v1425 = vpop.f32.mrb[0].mxu0
        %v1426 = vpop.f32.mrb[0].mxu0
        %1427 = vdwg.mxu0
        %1429 = vrot.lane.b32.xlu0 %v1377, 96
        %v1430 = vpop.permute.xlu0 %1429
        %v1432 = vsel %vm1381, %v1377, 0
        %v1435 = vsel %vm1381, %v1430, 0
        %1437 = vmatprep.subr.bf16.mxu0 0
        %1438 = vmatpush1.bf16.xpose.msra.mxu0 %v1435
        %1439 = vmatprep.subr.bf16.mxu0 0
        %1440 = vmatpush1.bf16.xpose.msra.mxu0 0
        %1441 = vmatprep.subr.bf16.mxu0 0
        %1442 = vmatpush1.bf16.xpose.msra.mxu0 0
        %1443 = vmatprep.subr.bf16.mxu0 0
        %1444 = vmatpush1.bf16.xpose.msra.mxu0 0
        %1445 = vmatprep.subr.bf16.mxu0 0
        %1446 = vmatpush1.bf16.xpose.msra.mxu0 0
        %1447 = vmatprep.subr.bf16.mxu0 0
        %1448 = vmatpush1.bf16.xpose.msra.mxu0 0
        %1449 = vmatprep.subr.bf16.mxu0 0
        %1450 = vmatpush1.bf16.xpose.msra.mxu0 0
        %1451 = vmatprep.subr.bf16.mxu0 0
        %1452 = vmatpush1.bf16.xpose.msra.mxu0 0
        %1453 = vmatprep.subr.bf16.mxu0 0
        %1454 = vmatpush1.bf16.xpose.msra.mxu0 0
        %1455 = vmatprep.subr.bf16.mxu0 0
        %1456 = vmatpush1.bf16.xpose.msra.mxu0 0
        %1457 = vmatprep.subr.bf16.mxu0 0
        %1458 = vmatpush1.bf16.xpose.msra.mxu0 0
        %1459 = vmatprep.subr.bf16.mxu0 0
        %1460 = vmatpush1.bf16.xpose.msra.mxu0 0
        %1461 = vmatprep.subr.bf16.mxu0 0
        %1462 = vmatpush1.bf16.xpose.msra.mxu0 0
        %1463 = vmatprep.subr.bf16.mxu0 0
        %1464 = vmatpush1.bf16.xpose.msra.mxu0 0
        %1465 = vmatprep.subr.bf16.mxu0 0
        %1466 = vmatpush1.bf16.xpose.msra.mxu0 0
        %1467 = vmatprep.subr.bf16.mxu0 0
        %1468 = vmatpush1.bf16.xpose.msra.mxu0 0
        %1469 = vmatprep.mubr.bf16.mxu0 0
        %1470 = vmatmul.mubr.bf16.gmra.mrb[0].mxu0 %v1432
        %v1471 = vpop.f32.mrb[0].mxu0
        %v1472 = vadd.f32 0.0, %v1471
        %v1473 = vpop.f32.mrb[0].mxu0
        %v1474 = vpop.f32.mrb[0].mxu0
        %v1475 = vpop.f32.mrb[0].mxu0
        %1476 = vdwg.mxu0
        %vm1477 = vcmp.gt.f32.partialorder %v1294, 0.5
        %vm1478 = vcmp.gt.f32.partialorder %v1295, 0.5
        %v1479 = vsel %vm1477, -1e+30, %v1423
        %v1480 = vsel %vm1478, -1e+30, %v1472
        %vm1481 = vcmask 64512
        %v1482 = vsel %vm1481, %v1479, -inf
        %1483 = vmax.xlane.f32.xlu0 %v1482
        %v1484 = vpop.xlane.xlu0 %1483
        %v1485 = vsel %vm1481, %v1480, -inf
        %1486 = vmax.xlane.f32.xlu0 %v1485
        %v1487 = vpop.xlane.xlu0 %1486
        %v1488 = vsub.f32 %v1479, %v1484
        %v1489 = vsub.f32 %v1480, %v1487
        %v1490 = vmul.f32 %v1488, 1.442695
        %v1491 = vpow.pop %v1490
        %v1492 = vmul.f32 %v1489, 1.442695
        %v1493 = vpow.pop %v1492
        %v1494 = vsel %vm1481, %v1491, 0.0
        %1495 = vadd.xlane.f32.xlu0 %v1494
        %v1496 = vpop.xlane.xlu0 %1495
        %v1497 = vsel %vm1481, %v1493, 0.0
        %1498 = vadd.xlane.f32.xlu0 %v1497
        %v1499 = vpop.xlane.xlu0 %1498
        %v1500 = vrcp.pop %v1496
        %v1501 = vrcp.pop %v1499
        %v1502 = vmul.f32 %v1491, %v1500
        %v1503 = vmul.f32 %v1493, %v1501
        %v1504 = vsel %vm1481, %v1502, 0.0
        %v1505 = vsel %vm1481, %v1503, 0.0
        %1506 = vst [vmem:[%s1220] sm:$0xff] %v1504
        %1507 = vst [vmem:[%s1220 + $0x8] sm:$0xff] %v1505
        %v1508 = vpack.c.bf16 %v1502, %v1502
        %v1509 = vpack.c.bf16 %v1503, %v1503
        %1510 = vrot.lane.b32.xlu0 %v1376, 64
        %v1511 = vpop.permute.xlu0 %1510
        %v1513 = vsel %vm1481, %v1508, 0
        %vm1515 = vcmask 1043456
        %v1517 = vsel %vm1515, %v1511, 0
        %1519 = vmatprep.subr.bf16.mxu0 0
        %1520 = vmatpush1.bf16.msra.mxu0 %v1517
        %1521 = vmatprep.subr.bf16.mxu0 0
        %1522 = vmatpush1.bf16.msra.mxu0 0
        %1523 = vmatprep.subr.bf16.mxu0 0
        %1524 = vmatpush1.bf16.msra.mxu0 0
        %1525 = vmatprep.subr.bf16.mxu0 0
        %1526 = vmatpush1.bf16.msra.mxu0 0
        %1527 = vmatprep.subr.bf16.mxu0 0
        %1528 = vmatpush1.bf16.msra.mxu0 0
        %1529 = vmatprep.subr.bf16.mxu0 0
        %1530 = vmatpush1.bf16.msra.mxu0 0
        %1531 = vmatprep.subr.bf16.mxu0 0
        %1532 = vmatpush1.bf16.msra.mxu0 0
        %1533 = vmatprep.subr.bf16.mxu0 0
        %1534 = vmatpush1.bf16.msra.mxu0 0
        %1535 = vmatprep.subr.bf16.mxu0 0
        %1536 = vmatpush1.bf16.msra.mxu0 0
        %1537 = vmatprep.subr.bf16.mxu0 0
        %1538 = vmatpush1.bf16.msra.mxu0 0
        %1539 = vmatprep.subr.bf16.mxu0 0
        %1540 = vmatpush1.bf16.msra.mxu0 0
        %1541 = vmatprep.subr.bf16.mxu0 0
        %1542 = vmatpush1.bf16.msra.mxu0 0
        %1543 = vmatprep.subr.bf16.mxu0 0
        %1544 = vmatpush1.bf16.msra.mxu0 0
        %1545 = vmatprep.subr.bf16.mxu0 0
        %1546 = vmatpush1.bf16.msra.mxu0 0
        %1547 = vmatprep.subr.bf16.mxu0 0
        %1548 = vmatpush1.bf16.msra.mxu0 0
        %1549 = vmatprep.subr.bf16.mxu0 0
        %1550 = vmatpush1.bf16.msra.mxu0 0
        %1551 = vmatprep.mubr.bf16.mxu0 0
        %1552 = vmatmul.mubr.bf16.gmra.mrb[0].mxu0 %v1513
        %v1553 = vpop.f32.mrb[0].mxu0
        %v1554 = vadd.f32 0.0, %v1553
        %v1555 = vpop.f32.mrb[0].mxu0
        %v1556 = vpop.f32.mrb[0].mxu0
        %v1557 = vpop.f32.mrb[0].mxu0
        %1558 = vdwg.mxu0
        %1559 = vrot.lane.b32.xlu0 %v1377, 64
        %v1560 = vpop.permute.xlu0 %1559
        %v1562 = vsel %vm1481, %v1509, 0
        %v1565 = vsel %vm1515, %v1560, 0
        %1567 = vmatprep.subr.bf16.mxu0 0
        %1568 = vmatpush1.bf16.msra.mxu0 %v1565
        %1569 = vmatprep.subr.bf16.mxu0 0
        %1570 = vmatpush1.bf16.msra.mxu0 0
        %1571 = vmatprep.subr.bf16.mxu0 0
        %1572 = vmatpush1.bf16.msra.mxu0 0
        %1573 = vmatprep.subr.bf16.mxu0 0
        %1574 = vmatpush1.bf16.msra.mxu0 0
        %1575 = vmatprep.subr.bf16.mxu0 0
        %1576 = vmatpush1.bf16.msra.mxu0 0
        %1577 = vmatprep.subr.bf16.mxu0 0
        %1578 = vmatpush1.bf16.msra.mxu0 0
        %1579 = vmatprep.subr.bf16.mxu0 0
        %1580 = vmatpush1.bf16.msra.mxu0 0
        %1581 = vmatprep.subr.bf16.mxu0 0
        %1582 = vmatpush1.bf16.msra.mxu0 0
        %1583 = vmatprep.subr.bf16.mxu0 0
        %1584 = vmatpush1.bf16.msra.mxu0 0
        %1585 = vmatprep.subr.bf16.mxu0 0
        %1586 = vmatpush1.bf16.msra.mxu0 0
        %1587 = vmatprep.subr.bf16.mxu0 0
        %1588 = vmatpush1.bf16.msra.mxu0 0
        %1589 = vmatprep.subr.bf16.mxu0 0
        %1590 = vmatpush1.bf16.msra.mxu0 0
        %1591 = vmatprep.subr.bf16.mxu0 0
        %1592 = vmatpush1.bf16.msra.mxu0 0
        %1593 = vmatprep.subr.bf16.mxu0 0
        %1594 = vmatpush1.bf16.msra.mxu0 0
        %1595 = vmatprep.subr.bf16.mxu0 0
        %1596 = vmatpush1.bf16.msra.mxu0 0
        %1597 = vmatprep.subr.bf16.mxu0 0
        %1598 = vmatpush1.bf16.msra.mxu0 0
        %1599 = vmatprep.mubr.bf16.mxu0 0
        %1600 = vmatmul.mubr.bf16.gmra.mrb[0].mxu0 %v1562
        %v1601 = vpop.f32.mrb[0].mxu0
        %v1602 = vadd.f32 0.0, %v1601
        %v1603 = vpop.f32.mrb[0].mxu0
        %v1604 = vpop.f32.mrb[0].mxu0
        %v1605 = vpop.f32.mrb[0].mxu0
        %1606 = vdwg.mxu0
        %v1607 = vpack.c.bf16 %v1602, %v1554
        %v1608 = vld [vmem:[%s1240] sm:$0xf]
        %v1609 = vld [vmem:[%s1240 + $0x4] sm:$0xf]
        %v1612 = vunpack.c.l.b16 %v1608
        %v1613 = vunpack.c.l.b16 %v1609
        %v1614 = vpack.c.b16 %v1613, %v1612
        %v1617 = vsel %vm1381, %v1607, 0
        %1619 = vmatprep.subr.bf16.mxu0 0
        %1620 = vmatpush1.bf16.msra.mxu0 %v1614
        %1621 = vmatprep.subr.bf16.mxu0 0
        %1622 = vmatpush1.bf16.msra.mxu0 0
        %1623 = vmatprep.subr.bf16.mxu0 0
        %1624 = vmatpush1.bf16.msra.mxu0 0
        %1625 = vmatprep.subr.bf16.mxu0 0
        %1626 = vmatpush1.bf16.msra.mxu0 0
        %1627 = vmatprep.subr.bf16.mxu0 0
        %1628 = vmatpush1.bf16.msra.mxu0 0
        %1629 = vmatprep.subr.bf16.mxu0 0
        %1630 = vmatpush1.bf16.msra.mxu0 0
        %1631 = vmatprep.subr.bf16.mxu0 0
        %1632 = vmatpush1.bf16.msra.mxu0 0
        %1633 = vmatprep.subr.bf16.mxu0 0
        %1634 = vmatpush1.bf16.msra.mxu0 0
        %1635 = vmatprep.subr.bf16.mxu0 0
        %1636 = vmatpush1.bf16.msra.mxu0 0
        %1637 = vmatprep.subr.bf16.mxu0 0
        %1638 = vmatpush1.bf16.msra.mxu0 0
        %1639 = vmatprep.subr.bf16.mxu0 0
        %1640 = vmatpush1.bf16.msra.mxu0 0
        %1641 = vmatprep.subr.bf16.mxu0 0
        %1642 = vmatpush1.bf16.msra.mxu0 0
        %1643 = vmatprep.subr.bf16.mxu0 0
        %1644 = vmatpush1.bf16.msra.mxu0 0
        %1645 = vmatprep.subr.bf16.mxu0 0
        %1646 = vmatpush1.bf16.msra.mxu0 0
        %1647 = vmatprep.subr.bf16.mxu0 0
        %1648 = vmatpush1.bf16.msra.mxu0 0
        %1649 = vmatprep.subr.bf16.mxu0 0
        %1650 = vmatpush1.bf16.msra.mxu0 0
        %1651 = vmatprep.mubr.bf16.mxu0 0
        %1652 = vmatmul.mubr.bf16.gmra.mrb[0].mxu0 %v1617
        %v1653 = vpop.f32.mrb[0].mxu0
        %v1654 = vadd.f32 0.0, %v1653
        %v1655 = vpop.f32.mrb[0].mxu0
        %v1656 = vpop.f32.mrb[0].mxu0
        %v1657 = vadd.f32 0.0, %v1656
        %v1658 = vpop.f32.mrb[0].mxu0
        %1659 = vdwg.mxu0
        %v1660 = vadd.f32 %v1374, %v1654
        %v1661 = vadd.f32 %v1375, %v1657
        %1662 = vrot.lane.b32.xlu0 %v1376, 112
        %v1663 = vpop.permute.xlu0 %1662
        %1664 = vrot.lane.b32.xlu0 %v1376, 80
        %v1665 = vpop.permute.xlu0 %1664
        %v1667 = vsel %vm1381, %v1663, 0
        %v1670 = vsel %vm1381, %v1665, 0
        %1672 = vmatprep.subr.bf16.mxu0 0
        %1673 = vmatpush1.bf16.xpose.msra.mxu0 %v1670
        %1674 = vmatprep.subr.bf16.mxu0 0
        %1675 = vmatpush1.bf16.xpose.msra.mxu0 0
        %1676 = vmatprep.subr.bf16.mxu0 0
        %1677 = vmatpush1.bf16.xpose.msra.mxu0 0
        %1678 = vmatprep.subr.bf16.mxu0 0
        %1679 = vmatpush1.bf16.xpose.msra.mxu0 0
        %1680 = vmatprep.subr.bf16.mxu0 0
        %1681 = vmatpush1.bf16.xpose.msra.mxu0 0
        %1682 = vmatprep.subr.bf16.mxu0 0
        %1683 = vmatpush1.bf16.xpose.msra.mxu0 0
        %1684 = vmatprep.subr.bf16.mxu0 0
        %1685 = vmatpush1.bf16.xpose.msra.mxu0 0
        %1686 = vmatprep.subr.bf16.mxu0 0
        %1687 = vmatpush1.bf16.xpose.msra.mxu0 0
        %1688 = vmatprep.subr.bf16.mxu0 0
        %1689 = vmatpush1.bf16.xpose.msra.mxu0 0
        %1690 = vmatprep.subr.bf16.mxu0 0
        %1691 = vmatpush1.bf16.xpose.msra.mxu0 0
        %1692 = vmatprep.subr.bf16.mxu0 0
        %1693 = vmatpush1.bf16.xpose.msra.mxu0 0
        %1694 = vmatprep.subr.bf16.mxu0 0
        %1695 = vmatpush1.bf16.xpose.msra.mxu0 0
        %1696 = vmatprep.subr.bf16.mxu0 0
        %1697 = vmatpush1.bf16.xpose.msra.mxu0 0
        %1698 = vmatprep.subr.bf16.mxu0 0
        %1699 = vmatpush1.bf16.xpose.msra.mxu0 0
        %1700 = vmatprep.subr.bf16.mxu0 0
        %1701 = vmatpush1.bf16.xpose.msra.mxu0 0
        %1702 = vmatprep.subr.bf16.mxu0 0
        %1703 = vmatpush1.bf16.xpose.msra.mxu0 0
        %1704 = vmatprep.mubr.bf16.mxu0 0
        %1705 = vmatmul.mubr.bf16.gmra.mrb[0].mxu0 %v1667
        %v1706 = vpop.f32.mrb[0].mxu0
        %v1707 = vadd.f32 0.0, %v1706
        %v1708 = vpop.f32.mrb[0].mxu0
        %v1709 = vpop.f32.mrb[0].mxu0
        %v1710 = vpop.f32.mrb[0].mxu0
        %1711 = vdwg.mxu0
        %1712 = vrot.lane.b32.xlu0 %v1377, 112
        %v1713 = vpop.permute.xlu0 %1712
        %1714 = vrot.lane.b32.xlu0 %v1377, 80
        %v1715 = vpop.permute.xlu0 %1714
        %v1717 = vsel %vm1381, %v1713, 0
        %v1720 = vsel %vm1381, %v1715, 0
        %1722 = vmatprep.subr.bf16.mxu0 0
        %1723 = vmatpush1.bf16.xpose.msra.mxu0 %v1720
        %1724 = vmatprep.subr.bf16.mxu0 0
        %1725 = vmatpush1.bf16.xpose.msra.mxu0 0
        %1726 = vmatprep.subr.bf16.mxu0 0
        %1727 = vmatpush1.bf16.xpose.msra.mxu0 0
        %1728 = vmatprep.subr.bf16.mxu0 0
        %1729 = vmatpush1.bf16.xpose.msra.mxu0 0
        %1730 = vmatprep.subr.bf16.mxu0 0
        %1731 = vmatpush1.bf16.xpose.msra.mxu0 0
        %1732 = vmatprep.subr.bf16.mxu0 0
        %1733 = vmatpush1.bf16.xpose.msra.mxu0 0
        %1734 = vmatprep.subr.bf16.mxu0 0
        %1735 = vmatpush1.bf16.xpose.msra.mxu0 0
        %1736 = vmatprep.subr.bf16.mxu0 0
        %1737 = vmatpush1.bf16.xpose.msra.mxu0 0
        %1738 = vmatprep.subr.bf16.mxu0 0
        %1739 = vmatpush1.bf16.xpose.msra.mxu0 0
        %1740 = vmatprep.subr.bf16.mxu0 0
        %1741 = vmatpush1.bf16.xpose.msra.mxu0 0
        %1742 = vmatprep.subr.bf16.mxu0 0
        %1743 = vmatpush1.bf16.xpose.msra.mxu0 0
        %1744 = vmatprep.subr.bf16.mxu0 0
        %1745 = vmatpush1.bf16.xpose.msra.mxu0 0
        %1746 = vmatprep.subr.bf16.mxu0 0
        %1747 = vmatpush1.bf16.xpose.msra.mxu0 0
        %1748 = vmatprep.subr.bf16.mxu0 0
        %1749 = vmatpush1.bf16.xpose.msra.mxu0 0
        %1750 = vmatprep.subr.bf16.mxu0 0
        %1751 = vmatpush1.bf16.xpose.msra.mxu0 0
        %1752 = vmatprep.subr.bf16.mxu0 0
        %1753 = vmatpush1.bf16.xpose.msra.mxu0 0
        %1754 = vmatprep.mubr.bf16.mxu0 0
        %1755 = vmatmul.mubr.bf16.gmra.mrb[0].mxu0 %v1717
        %v1756 = vpop.f32.mrb[0].mxu0
        %v1757 = vadd.f32 0.0, %v1756
        %v1758 = vpop.f32.mrb[0].mxu0
        %v1759 = vpop.f32.mrb[0].mxu0
        %v1760 = vpop.f32.mrb[0].mxu0
        %1761 = vdwg.mxu0
        %v1762 = vsel %vm1477, -1e+30, %v1707
        %v1763 = vsel %vm1478, -1e+30, %v1757
        %v1764 = vsel %vm1481, %v1762, -inf
        %1765 = vmax.xlane.f32.xlu0 %v1764
        %v1766 = vpop.xlane.xlu0 %1765
        %v1767 = vsel %vm1481, %v1763, -inf
        %1768 = vmax.xlane.f32.xlu0 %v1767
        %v1769 = vpop.xlane.xlu0 %1768
        %v1770 = vsub.f32 %v1762, %v1766
        %v1771 = vsub.f32 %v1763, %v1769
        %v1772 = vmul.f32 %v1770, 1.442695
        %v1773 = vpow.pop %v1772
        %v1774 = vmul.f32 %v1771, 1.442695
        %v1775 = vpow.pop %v1774
        %v1776 = vsel %vm1481, %v1773, 0.0
        %1777 = vadd.xlane.f32.xlu0 %v1776
        %v1778 = vpop.xlane.xlu0 %1777
        %v1779 = vsel %vm1481, %v1775, 0.0
        %1780 = vadd.xlane.f32.xlu0 %v1779
        %v1781 = vpop.xlane.xlu0 %1780
        %v1782 = vrcp.pop %v1778
        %v1783 = vrcp.pop %v1781
        %v1784 = vmul.f32 %v1773, %v1782
        %v1785 = vmul.f32 %v1775, %v1783
        %v1786 = vsel %vm1481, %v1784, 0.0
        %v1787 = vsel %vm1481, %v1785, 0.0
        %s1788 = scalar_lea.vmem %s1220, 16 [#allocation18]
        %1789 = vst [vmem:[%s1788] sm:$0xff] %v1786
        %1790 = vst [vmem:[%s1788 + $0x8] sm:$0xff] %v1787
        %v1791 = vpack.c.bf16 %v1784, %v1784
        %v1792 = vpack.c.bf16 %v1785, %v1785
        %1793 = vrot.lane.b32.xlu0 %v1376, 48
        %v1794 = vpop.permute.xlu0 %1793
        %v1796 = vsel %vm1481, %v1791, 0
        %v1799 = vsel %vm1515, %v1794, 0
        %1801 = vmatprep.subr.bf16.mxu0 0
        %1802 = vmatpush1.bf16.msra.mxu0 %v1799
        %1803 = vmatprep.subr.bf16.mxu0 0
        %1804 = vmatpush1.bf16.msra.mxu0 0
        %1805 = vmatprep.subr.bf16.mxu0 0
        %1806 = vmatpush1.bf16.msra.mxu0 0
        %1807 = vmatprep.subr.bf16.mxu0 0
        %1808 = vmatpush1.bf16.msra.mxu0 0
        %1809 = vmatprep.subr.bf16.mxu0 0
        %1810 = vmatpush1.bf16.msra.mxu0 0
        %1811 = vmatprep.subr.bf16.mxu0 0
        %1812 = vmatpush1.bf16.msra.mxu0 0
        %1813 = vmatprep.subr.bf16.mxu0 0
        %1814 = vmatpush1.bf16.msra.mxu0 0
        %1815 = vmatprep.subr.bf16.mxu0 0
        %1816 = vmatpush1.bf16.msra.mxu0 0
        %1817 = vmatprep.subr.bf16.mxu0 0
        %1818 = vmatpush1.bf16.msra.mxu0 0
        %1819 = vmatprep.subr.bf16.mxu0 0
        %1820 = vmatpush1.bf16.msra.mxu0 0
        %1821 = vmatprep.subr.bf16.mxu0 0
        %1822 = vmatpush1.bf16.msra.mxu0 0
        %1823 = vmatprep.subr.bf16.mxu0 0
        %1824 = vmatpush1.bf16.msra.mxu0 0
        %1825 = vmatprep.subr.bf16.mxu0 0
        %1826 = vmatpush1.bf16.msra.mxu0 0
        %1827 = vmatprep.subr.bf16.mxu0 0
        %1828 = vmatpush1.bf16.msra.mxu0 0
        %1829 = vmatprep.subr.bf16.mxu0 0
        %1830 = vmatpush1.bf16.msra.mxu0 0
        %1831 = vmatprep.subr.bf16.mxu0 0
        %1832 = vmatpush1.bf16.msra.mxu0 0
        %1833 = vmatprep.mubr.bf16.mxu0 0
        %1834 = vmatmul.mubr.bf16.gmra.mrb[0].mxu0 %v1796
        %v1835 = vpop.f32.mrb[0].mxu0
        %v1836 = vadd.f32 0.0, %v1835
        %v1837 = vpop.f32.mrb[0].mxu0
        %v1838 = vpop.f32.mrb[0].mxu0
        %v1839 = vpop.f32.mrb[0].mxu0
        %1840 = vdwg.mxu0
        %1841 = vrot.lane.b32.xlu0 %v1377, 48
        %v1842 = vpop.permute.xlu0 %1841
        %v1844 = vsel %vm1481, %v1792, 0
        %v1847 = vsel %vm1515, %v1842, 0
        %1849 = vmatprep.subr.bf16.mxu0 0
        %1850 = vmatpush1.bf16.msra.mxu0 %v1847
        %1851 = vmatprep.subr.bf16.mxu0 0
        %1852 = vmatpush1.bf16.msra.mxu0 0
        %1853 = vmatprep.subr.bf16.mxu0 0
        %1854 = vmatpush1.bf16.msra.mxu0 0
        %1855 = vmatprep.subr.bf16.mxu0 0
        %1856 = vmatpush1.bf16.msra.mxu0 0
        %1857 = vmatprep.subr.bf16.mxu0 0
        %1858 = vmatpush1.bf16.msra.mxu0 0
        %1859 = vmatprep.subr.bf16.mxu0 0
        %1860 = vmatpush1.bf16.msra.mxu0 0
        %1861 = vmatprep.subr.bf16.mxu0 0
        %1862 = vmatpush1.bf16.msra.mxu0 0
        %1863 = vmatprep.subr.bf16.mxu0 0
        %1864 = vmatpush1.bf16.msra.mxu0 0
        %1865 = vmatprep.subr.bf16.mxu0 0
        %1866 = vmatpush1.bf16.msra.mxu0 0
        %1867 = vmatprep.subr.bf16.mxu0 0
        %1868 = vmatpush1.bf16.msra.mxu0 0
        %1869 = vmatprep.subr.bf16.mxu0 0
        %1870 = vmatpush1.bf16.msra.mxu0 0
        %1871 = vmatprep.subr.bf16.mxu0 0
        %1872 = vmatpush1.bf16.msra.mxu0 0
        %1873 = vmatprep.subr.bf16.mxu0 0
        %1874 = vmatpush1.bf16.msra.mxu0 0
        %1875 = vmatprep.subr.bf16.mxu0 0
        %1876 = vmatpush1.bf16.msra.mxu0 0
        %1877 = vmatprep.subr.bf16.mxu0 0
        %1878 = vmatpush1.bf16.msra.mxu0 0
        %1879 = vmatprep.subr.bf16.mxu0 0
        %1880 = vmatpush1.bf16.msra.mxu0 0
        %1881 = vmatprep.mubr.bf16.mxu0 0
        %1882 = vmatmul.mubr.bf16.gmra.mrb[0].mxu0 %v1844
        %v1883 = vpop.f32.mrb[0].mxu0
        %v1884 = vadd.f32 0.0, %v1883
        %v1885 = vpop.f32.mrb[0].mxu0
        %v1886 = vpop.f32.mrb[0].mxu0
        %v1887 = vpop.f32.mrb[0].mxu0
        %1888 = vdwg.mxu0
        %v1889 = vpack.c.bf16 %v1884, %v1836
        %s1890 = scalar_lea.vmem %s1240, 8
        %v1891 = vld [vmem:[%s1890] sm:$0xf]
        %v1892 = vld [vmem:[%s1890 + $0x4] sm:$0xf]
        %v1895 = vunpack.c.l.b16 %v1891
        %v1896 = vunpack.c.l.b16 %v1892
        %v1897 = vpack.c.b16 %v1896, %v1895
        %v1900 = vsel %vm1381, %v1889, 0
        %1902 = vmatprep.subr.bf16.mxu0 0
        %1903 = vmatpush1.bf16.msra.mxu0 %v1897
        %1904 = vmatprep.subr.bf16.mxu0 0
        %1905 = vmatpush1.bf16.msra.mxu0 0
        %1906 = vmatprep.subr.bf16.mxu0 0
        %1907 = vmatpush1.bf16.msra.mxu0 0
        %1908 = vmatprep.subr.bf16.mxu0 0
        %1909 = vmatpush1.bf16.msra.mxu0 0
        %1910 = vmatprep.subr.bf16.mxu0 0
        %1911 = vmatpush1.bf16.msra.mxu0 0
        %1912 = vmatprep.subr.bf16.mxu0 0
        %1913 = vmatpush1.bf16.msra.mxu0 0
        %1914 = vmatprep.subr.bf16.mxu0 0
        %1915 = vmatpush1.bf16.msra.mxu0 0
        %1916 = vmatprep.subr.bf16.mxu0 0
        %1917 = vmatpush1.bf16.msra.mxu0 0
        %1918 = vmatprep.subr.bf16.mxu0 0
        %1919 = vmatpush1.bf16.msra.mxu0 0
        %1920 = vmatprep.subr.bf16.mxu0 0
        %1921 = vmatpush1.bf16.msra.mxu0 0
        %1922 = vmatprep.subr.bf16.mxu0 0
        %1923 = vmatpush1.bf16.msra.mxu0 0
        %1924 = vmatprep.subr.bf16.mxu0 0
        %1925 = vmatpush1.bf16.msra.mxu0 0
        %1926 = vmatprep.subr.bf16.mxu0 0
        %1927 = vmatpush1.bf16.msra.mxu0 0
        %1928 = vmatprep.subr.bf16.mxu0 0
        %1929 = vmatpush1.bf16.msra.mxu0 0
        %1930 = vmatprep.subr.bf16.mxu0 0
        %1931 = vmatpush1.bf16.msra.mxu0 0
        %1932 = vmatprep.subr.bf16.mxu0 0
        %1933 = vmatpush1.bf16.msra.mxu0 0
        %1934 = vmatprep.mubr.bf16.mxu0 0
        %1935 = vmatmul.mubr.bf16.gmra.mrb[0].mxu0 %v1900
        %v1936 = vpop.f32.mrb[0].mxu0
        %v1937 = vadd.f32 0.0, %v1936
        %v1938 = vpop.f32.mrb[0].mxu0
        %v1939 = vpop.f32.mrb[0].mxu0
        %v1940 = vadd.f32 0.0, %v1939
        %v1941 = vpop.f32.mrb[0].mxu0
        %1942 = vdwg.mxu0
        %v1943 = vadd.f32 %v1660, %v1937
        %v1944 = vadd.f32 %v1661, %v1940
        %v1945 = vld [vmem:[%s1045] sm:$0x1]
        %v1946 = vld [vmem:[%s1053] sm:$0x1]
        %v1947 = vsel %vm1322, %v1943, 0.0
        %1948 = vadd.xlane.f32.xlu0 %v1947
        %v1949 = vpop.xlane.xlu0 %1948
        %v1950 = vsel %vm1322, %v1944, 0.0
        %1951 = vadd.xlane.f32.xlu0 %v1950
        %v1952 = vpop.xlane.xlu0 %1951
        %v1953 = vrcp.pop 32.0
        %v1954 = vmul.f32 %v1949, %v1953
        %v1955 = vmul.f32 %v1952, %v1953
        %v1956 = vsub.f32 %v1943, %v1954
        %v1957 = vsub.f32 %v1944, %v1955
        %v1958 = vmul.f32 %v1956, %v1956
        %v1959 = vmul.f32 %v1957, %v1957
        %v1960 = vsel %vm1322, %v1958, 0.0
        %1961 = vadd.xlane.f32.xlu0 %v1960
        %v1962 = vpop.xlane.xlu0 %1961
        %v1963 = vsel %vm1322, %v1959, 0.0
        %1964 = vadd.xlane.f32.xlu0 %v1963
        %v1965 = vpop.xlane.xlu0 %1964
        %v1966 = vmul.f32 %v1962, %v1953
        %v1967 = vmul.f32 %v1965, %v1953
        %v1968 = vadd.f32 %v1966, 1e-05
        %v1969 = vadd.f32 %v1967, 1e-05
        %v1970 = vrsqrt.pop %v1968
        %v1971 = vrsqrt.pop %v1969
        %v1972 = vmul.f32 %v1956, %v1970
        %v1973 = vmul.f32 %v1957, %v1971
        %v1975 = vlaneseq
        %v1976 = vshrl.u32 %v1975, 7
        %v1977 = vsub.s32 0, %v1976
        %v1978 = vrot.slane %v1945, %v1977
        %v1980 = vmul.f32 %v1972, %v1978
        %v1981 = vmul.f32 %v1973, %v1978
        %v1983 = vlaneseq
        %v1984 = vshrl.u32 %v1983, 7
        %v1985 = vsub.s32 0, %v1984
        %v1986 = vrot.slane %v1946, %v1985
        %v1988 = vadd.f32 %v1980, %v1986
        %v1989 = vadd.f32 %v1981, %v1986
        %1991 = vset.pattern.permute.xlu0 0
        %1992 = vperm.xlu0 %1991, %v1292
        %v1993 = vpop.permute.xlu0 %1992
        %1996 = vset.pattern.permute.xlu0 0
        %1997 = vperm.xlu0 %1996, %v1293
        %v1998 = vpop.permute.xlu0 %1997
        %v2000 = vmul.f32 %v1988, %v1993
        %v2001 = vmul.f32 %v1989, %v1998
        %v2002 = vpack.c.bf16 %v2001, %v2000
        %v2003 = vld [vmem:[%s1245] sm:$0xf]
        %v2004 = vld [vmem:[%s1245 + $0x4] sm:$0xf]
        %v2005 = vld [vmem:[%s1245 + $0x8] sm:$0xf]
        %v2006 = vld [vmem:[%s1245 + $0xc] sm:$0xf]
        %v2007 = vld [vmem:[%s1061] sm:$0x1]
        %v2009 = vlaneseq
        %v2010 = vshrl.u32 %v2009, 7
        %v2011 = vsub.s32 0, %v2010
        %v2012 = vrot.slane %v2007, %v2011
        %v2018 = vunpack.c.l.b16 %v2003
        %v2019 = vunpack.c.l.b16 %v2004
        %v2020 = vunpack.c.l.b16 %v2005
        %v2021 = vunpack.c.l.b16 %v2006
        %v2022 = vpack.c.b16 %v2019, %v2018
        %v2023 = vpack.c.b16 %v2021, %v2020
        %v2027 = vsel %vm1322, %v2002, 0
        %2029 = vmatprep.subr.bf16.mxu0 0
        %2030 = vmatpush1.bf16.msra.mxu0 %v2022
        %2031 = vmatprep.subr.bf16.mxu0 0
        %2032 = vmatpush1.bf16.msra.mxu0 %v2023
        %2033 = vmatprep.subr.bf16.mxu0 0
        %2034 = vmatpush1.bf16.msra.mxu0 0
        %2035 = vmatprep.subr.bf16.mxu0 0
        %2036 = vmatpush1.bf16.msra.mxu0 0
        %2037 = vmatprep.subr.bf16.mxu0 0
        %2038 = vmatpush1.bf16.msra.mxu0 0
        %2039 = vmatprep.subr.bf16.mxu0 0
        %2040 = vmatpush1.bf16.msra.mxu0 0
        %2041 = vmatprep.subr.bf16.mxu0 0
        %2042 = vmatpush1.bf16.msra.mxu0 0
        %2043 = vmatprep.subr.bf16.mxu0 0
        %2044 = vmatpush1.bf16.msra.mxu0 0
        %2045 = vmatprep.subr.bf16.mxu0 0
        %2046 = vmatpush1.bf16.msra.mxu0 0
        %2047 = vmatprep.subr.bf16.mxu0 0
        %2048 = vmatpush1.bf16.msra.mxu0 0
        %2049 = vmatprep.subr.bf16.mxu0 0
        %2050 = vmatpush1.bf16.msra.mxu0 0
        %2051 = vmatprep.subr.bf16.mxu0 0
        %2052 = vmatpush1.bf16.msra.mxu0 0
        %2053 = vmatprep.subr.bf16.mxu0 0
        %2054 = vmatpush1.bf16.msra.mxu0 0
        %2055 = vmatprep.subr.bf16.mxu0 0
        %2056 = vmatpush1.bf16.msra.mxu0 0
        %2057 = vmatprep.subr.bf16.mxu0 0
        %2058 = vmatpush1.bf16.msra.mxu0 0
        %2059 = vmatprep.subr.bf16.mxu0 0
        %2060 = vmatpush1.bf16.msra.mxu0 0
        %2061 = vmatprep.mubr.bf16.mxu0 0
        %2062 = vmatmul.mubr.bf16.gmra.mrb[0].mxu0 %v2027
        %v2063 = vpop.f32.mrb[0].mxu0
        %v2064 = vadd.f32 %v2012, %v2063
        %v2065 = vpop.f32.mrb[0].mxu0
        %v2066 = vpop.f32.mrb[0].mxu0
        %v2067 = vadd.f32 %v2012, %v2066
        %v2068 = vpop.f32.mrb[0].mxu0
        %2069 = vdwg.mxu0
        %v2070 = vld [vmem:[%s1] sm:$0xff]
        %v2071 = vld [vmem:[%s1 + $0x8] sm:$0xff]
        %v2072 = vld [vmem:[%s1 + $0x10] sm:$0xff]
        %v2073 = vld [vmem:[%s1 + $0x18] sm:$0xff]
        %v2074 = vpack.c.bf16 %v2071, %v2070
        %v2075 = vpack.c.bf16 %v2073, %v2072
        %v2076 = vld [vmem:[%s1250] sm:$0xf]
        %v2077 = vld [vmem:[%s1250 + $0x4] sm:$0xf]
        %v2078 = vld [vmem:[%s1250 + $0x8] sm:$0xf]
        %v2079 = vld [vmem:[%s1250 + $0xc] sm:$0xf]
        %v2080 = vld [vmem:[%s1253] sm:$0x1]
        %v2082 = vlaneseq
        %v2083 = vshrl.u32 %v2082, 7
        %v2084 = vsub.s32 0, %v2083
        %v2085 = vrot.slane %v2080, %v2084
        %v2091 = vunpack.c.l.b16 %v2076
        %v2092 = vunpack.c.l.b16 %v2077
        %v2093 = vunpack.c.l.b16 %v2078
        %v2094 = vunpack.c.l.b16 %v2079
        %v2095 = vpack.c.b16 %v2092, %v2091
        %v2096 = vpack.c.b16 %v2094, %v2093
        %v2100 = vsel %vm1322, %v2074, 0
        %v2103 = vsel %vm1322, %v2075, 0
        %2105 = vmatprep.subr.bf16.mxu0 0
        %2106 = vmatpush1.bf16.msra.mxu0 %v2095
        %2107 = vmatprep.subr.bf16.mxu0 0
        %2108 = vmatpush1.bf16.msra.mxu0 %v2096
        %2109 = vmatprep.subr.bf16.mxu0 0
        %2110 = vmatpush1.bf16.msra.mxu0 0
        %2111 = vmatprep.subr.bf16.mxu0 0
        %2112 = vmatpush1.bf16.msra.mxu0 0
        %2113 = vmatprep.subr.bf16.mxu0 0
        %2114 = vmatpush1.bf16.msra.mxu0 0
        %2115 = vmatprep.subr.bf16.mxu0 0
        %2116 = vmatpush1.bf16.msra.mxu0 0
        %2117 = vmatprep.subr.bf16.mxu0 0
        %2118 = vmatpush1.bf16.msra.mxu0 0
        %2119 = vmatprep.subr.bf16.mxu0 0
        %2120 = vmatpush1.bf16.msra.mxu0 0
        %2121 = vmatprep.subr.bf16.mxu0 0
        %2122 = vmatpush1.bf16.msra.mxu0 0
        %2123 = vmatprep.subr.bf16.mxu0 0
        %2124 = vmatpush1.bf16.msra.mxu0 0
        %2125 = vmatprep.subr.bf16.mxu0 0
        %2126 = vmatpush1.bf16.msra.mxu0 0
        %2127 = vmatprep.subr.bf16.mxu0 0
        %2128 = vmatpush1.bf16.msra.mxu0 0
        %2129 = vmatprep.subr.bf16.mxu0 0
        %2130 = vmatpush1.bf16.msra.mxu0 0
        %2131 = vmatprep.subr.bf16.mxu0 0
        %2132 = vmatpush1.bf16.msra.mxu0 0
        %2133 = vmatprep.subr.bf16.mxu0 0
        %2134 = vmatpush1.bf16.msra.mxu0 0
        %2135 = vmatprep.subr.bf16.mxu0 0
        %2136 = vmatpush1.bf16.msra.mxu0 0
        %2137 = vmatprep.mubr.bf16.mxu0 0
        %2138 = vmatmul.mubr.bf16.gmra.mrb[0].mxu0 %v2100
        %v2139 = vpop.f32.mrb[0].mxu0
        %v2140 = vadd.f32 %v2085, %v2139
        %v2141 = vpop.f32.mrb[0].mxu0
        %v2142 = vpop.f32.mrb[0].mxu0
        %v2143 = vadd.f32 %v2085, %v2142
        %v2144 = vpop.f32.mrb[0].mxu0
        %2145 = vmatprep.mubr.bf16.mxu0 0
        %2146 = vmatmul.mubr.bf16.gmra.mrb[0].mxu0 %v2103
        %v2147 = vpop.f32.mrb[0].mxu0
        %v2148 = vadd.f32 %v2085, %v2147
        %v2149 = vpop.f32.mrb[0].mxu0
        %v2150 = vpop.f32.mrb[0].mxu0
        %v2151 = vadd.f32 %v2085, %v2150
        %v2152 = vpop.f32.mrb[0].mxu0
        %2153 = vdwg.mxu0
        %v2154 = vld [vmem:[%s1256] sm:$0x1]
        %v2156 = vlaneseq
        %v2157 = vshrl.u32 %v2156, 7
        %v2158 = vsub.s32 0, %v2157
        %v2159 = vrot.slane %v2154, %v2158
        %v2161 = vadd.f32 %v2000, %v2159
        %v2162 = vadd.f32 %v2001, %v2159
        %v2163 = vpack.c.bf16 %v2064, %v2064
        %v2164 = vpack.c.bf16 %v2067, %v2067
        %v2165 = vpack.c.bf16 %v2143, %v2140
        %v2166 = vpack.c.bf16 %v2151, %v2148
        %v2168 = vsel %vm1381, %v2163, 0
        %v2171 = vsel %vm1381, %v2165, 0
        %2173 = vmatprep.subr.bf16.mxu0 0
        %2174 = vmatpush1.bf16.xpose.msra.mxu0 %v2171
        %2175 = vmatprep.subr.bf16.mxu0 0
        %2176 = vmatpush1.bf16.xpose.msra.mxu0 0
        %2177 = vmatprep.subr.bf16.mxu0 0
        %2178 = vmatpush1.bf16.xpose.msra.mxu0 0
        %2179 = vmatprep.subr.bf16.mxu0 0
        %2180 = vmatpush1.bf16.xpose.msra.mxu0 0
        %2181 = vmatprep.subr.bf16.mxu0 0
        %2182 = vmatpush1.bf16.xpose.msra.mxu0 0
        %2183 = vmatprep.subr.bf16.mxu0 0
        %2184 = vmatpush1.bf16.xpose.msra.mxu0 0
        %2185 = vmatprep.subr.bf16.mxu0 0
        %2186 = vmatpush1.bf16.xpose.msra.mxu0 0
        %2187 = vmatprep.subr.bf16.mxu0 0
        %2188 = vmatpush1.bf16.xpose.msra.mxu0 0
        %2189 = vmatprep.subr.bf16.mxu0 0
        %2190 = vmatpush1.bf16.xpose.msra.mxu0 0
        %2191 = vmatprep.subr.bf16.mxu0 0
        %2192 = vmatpush1.bf16.xpose.msra.mxu0 0
        %2193 = vmatprep.subr.bf16.mxu0 0
        %2194 = vmatpush1.bf16.xpose.msra.mxu0 0
        %2195 = vmatprep.subr.bf16.mxu0 0
        %2196 = vmatpush1.bf16.xpose.msra.mxu0 0
        %2197 = vmatprep.subr.bf16.mxu0 0
        %2198 = vmatpush1.bf16.xpose.msra.mxu0 0
        %2199 = vmatprep.subr.bf16.mxu0 0
        %2200 = vmatpush1.bf16.xpose.msra.mxu0 0
        %2201 = vmatprep.subr.bf16.mxu0 0
        %2202 = vmatpush1.bf16.xpose.msra.mxu0 0
        %2203 = vmatprep.subr.bf16.mxu0 0
        %2204 = vmatpush1.bf16.xpose.msra.mxu0 0
        %2205 = vmatprep.mubr.bf16.mxu0 0
        %2206 = vmatmul.mubr.bf16.gmra.mrb[0].mxu0 %v2168
        %v2207 = vpop.f32.mrb[0].mxu0
        %v2208 = vadd.f32 0.0, %v2207
        %v2209 = vpop.f32.mrb[0].mxu0
        %v2210 = vpop.f32.mrb[0].mxu0
        %v2211 = vpop.f32.mrb[0].mxu0
        %2212 = vdwg.mxu0
        %v2214 = vsel %vm1381, %v2164, 0
        %v2217 = vsel %vm1381, %v2166, 0
        %2219 = vmatprep.subr.bf16.mxu0 0
        %2220 = vmatpush1.bf16.xpose.msra.mxu0 %v2217
        %2221 = vmatprep.subr.bf16.mxu0 0
        %2222 = vmatpush1.bf16.xpose.msra.mxu0 0
        %2223 = vmatprep.subr.bf16.mxu0 0
        %2224 = vmatpush1.bf16.xpose.msra.mxu0 0
        %2225 = vmatprep.subr.bf16.mxu0 0
        %2226 = vmatpush1.bf16.xpose.msra.mxu0 0
        %2227 = vmatprep.subr.bf16.mxu0 0
        %2228 = vmatpush1.bf16.xpose.msra.mxu0 0
        %2229 = vmatprep.subr.bf16.mxu0 0
        %2230 = vmatpush1.bf16.xpose.msra.mxu0 0
        %2231 = vmatprep.subr.bf16.mxu0 0
        %2232 = vmatpush1.bf16.xpose.msra.mxu0 0
        %2233 = vmatprep.subr.bf16.mxu0 0
        %2234 = vmatpush1.bf16.xpose.msra.mxu0 0
        %2235 = vmatprep.subr.bf16.mxu0 0
        %2236 = vmatpush1.bf16.xpose.msra.mxu0 0
        %2237 = vmatprep.subr.bf16.mxu0 0
        %2238 = vmatpush1.bf16.xpose.msra.mxu0 0
        %2239 = vmatprep.subr.bf16.mxu0 0
        %2240 = vmatpush1.bf16.xpose.msra.mxu0 0
        %2241 = vmatprep.subr.bf16.mxu0 0
        %2242 = vmatpush1.bf16.xpose.msra.mxu0 0
        %2243 = vmatprep.subr.bf16.mxu0 0
        %2244 = vmatpush1.bf16.xpose.msra.mxu0 0
        %2245 = vmatprep.subr.bf16.mxu0 0
        %2246 = vmatpush1.bf16.xpose.msra.mxu0 0
        %2247 = vmatprep.subr.bf16.mxu0 0
        %2248 = vmatpush1.bf16.xpose.msra.mxu0 0
        %2249 = vmatprep.subr.bf16.mxu0 0
        %2250 = vmatpush1.bf16.xpose.msra.mxu0 0
        %2251 = vmatprep.mubr.bf16.mxu0 0
        %2252 = vmatmul.mubr.bf16.gmra.mrb[0].mxu0 %v2214
        %v2253 = vpop.f32.mrb[0].mxu0
        %v2254 = vadd.f32 0.0, %v2253
        %v2255 = vpop.f32.mrb[0].mxu0
        %v2256 = vpop.f32.mrb[0].mxu0
        %v2257 = vpop.f32.mrb[0].mxu0
        %2258 = vdwg.mxu0
        %vm2259 = vcmp.gt.f32.partialorder %v1296, 0.5
        %vm2260 = vcmp.gt.f32.partialorder %v1297, 0.5
        %v2261 = vsel %vm2259, -1e+30, %v2208
        %v2262 = vsel %vm2260, -1e+30, %v2254
        %v2263 = vsel %vm1381, %v2261, -inf
        %2264 = vmax.xlane.f32.xlu0 %v2263
        %v2265 = vpop.xlane.xlu0 %2264
        %v2266 = vsel %vm1381, %v2262, -inf
        %2267 = vmax.xlane.f32.xlu0 %v2266
        %v2268 = vpop.xlane.xlu0 %2267
        %v2269 = vsub.f32 %v2261, %v2265
        %v2270 = vsub.f32 %v2262, %v2268
        %v2271 = vmul.f32 %v2269, 1.442695
        %v2272 = vpow.pop %v2271
        %v2273 = vmul.f32 %v2270, 1.442695
        %v2274 = vpow.pop %v2273
        %v2275 = vsel %vm1381, %v2272, 0.0
        %2276 = vadd.xlane.f32.xlu0 %v2275
        %v2277 = vpop.xlane.xlu0 %2276
        %v2278 = vsel %vm1381, %v2274, 0.0
        %2279 = vadd.xlane.f32.xlu0 %v2278
        %v2280 = vpop.xlane.xlu0 %2279
        %v2281 = vrcp.pop %v2277
        %v2282 = vrcp.pop %v2280
        %v2283 = vmul.f32 %v2272, %v2281
        %v2284 = vmul.f32 %v2274, %v2282
        %v2285 = vsel %vm1381, %v2283, 0.0
        %v2286 = vsel %vm1381, %v2284, 0.0
        %2287 = vst [vmem:[%s1227] sm:$0xff] %v2285
        %2288 = vst [vmem:[%s1227 + $0x8] sm:$0xff] %v2286
        %v2289 = vpack.c.bf16 %v2283, %v2283
        %v2290 = vpack.c.bf16 %v2284, %v2284
        %2292 = vrot.lane.b32.xlu0 %v2165, 96
        %v2293 = vpop.permute.xlu0 %2292
        %v2296 = vsel %vm1381, %v2289, 0
        %2298 = vmatprep.subr.bf16.mxu0 0
        %2299 = vmatpush1.bf16.msra.mxu0 %v2293
        %2300 = vmatprep.subr.bf16.mxu0 0
        %2301 = vmatpush1.bf16.msra.mxu0 0
        %2302 = vmatprep.subr.bf16.mxu0 0
        %2303 = vmatpush1.bf16.msra.mxu0 0
        %2304 = vmatprep.subr.bf16.mxu0 0
        %2305 = vmatpush1.bf16.msra.mxu0 0
        %2306 = vmatprep.subr.bf16.mxu0 0
        %2307 = vmatpush1.bf16.msra.mxu0 0
        %2308 = vmatprep.subr.bf16.mxu0 0
        %2309 = vmatpush1.bf16.msra.mxu0 0
        %2310 = vmatprep.subr.bf16.mxu0 0
        %2311 = vmatpush1.bf16.msra.mxu0 0
        %2312 = vmatprep.subr.bf16.mxu0 0
        %2313 = vmatpush1.bf16.msra.mxu0 0
        %2314 = vmatprep.subr.bf16.mxu0 0
        %2315 = vmatpush1.bf16.msra.mxu0 0
        %2316 = vmatprep.subr.bf16.mxu0 0
        %2317 = vmatpush1.bf16.msra.mxu0 0
        %2318 = vmatprep.subr.bf16.mxu0 0
        %2319 = vmatpush1.bf16.msra.mxu0 0
        %2320 = vmatprep.subr.bf16.mxu0 0
        %2321 = vmatpush1.bf16.msra.mxu0 0
        %2322 = vmatprep.subr.bf16.mxu0 0
        %2323 = vmatpush1.bf16.msra.mxu0 0
        %2324 = vmatprep.subr.bf16.mxu0 0
        %2325 = vmatpush1.bf16.msra.mxu0 0
        %2326 = vmatprep.subr.bf16.mxu0 0
        %2327 = vmatpush1.bf16.msra.mxu0 0
        %2328 = vmatprep.subr.bf16.mxu0 0
        %2329 = vmatpush1.bf16.msra.mxu0 0
        %2330 = vmatprep.mubr.bf16.mxu0 0
        %2331 = vmatmul.mubr.bf16.gmra.mrb[0].mxu0 %v2296
        %v2332 = vpop.f32.mrb[0].mxu0
        %v2333 = vadd.f32 0.0, %v2332
        %v2334 = vpop.f32.mrb[0].mxu0
        %v2335 = vpop.f32.mrb[0].mxu0
        %v2336 = vpop.f32.mrb[0].mxu0
        %2337 = vdwg.mxu0
        %2339 = vrot.lane.b32.xlu0 %v2166, 96
        %v2340 = vpop.permute.xlu0 %2339
        %v2343 = vsel %vm1381, %v2290, 0
        %2345 = vmatprep.subr.bf16.mxu0 0
        %2346 = vmatpush1.bf16.msra.mxu0 %v2340
        %2347 = vmatprep.subr.bf16.mxu0 0
        %2348 = vmatpush1.bf16.msra.mxu0 0
        %2349 = vmatprep.subr.bf16.mxu0 0
        %2350 = vmatpush1.bf16.msra.mxu0 0
        %2351 = vmatprep.subr.bf16.mxu0 0
        %2352 = vmatpush1.bf16.msra.mxu0 0
        %2353 = vmatprep.subr.bf16.mxu0 0
        %2354 = vmatpush1.bf16.msra.mxu0 0
        %2355 = vmatprep.subr.bf16.mxu0 0
        %2356 = vmatpush1.bf16.msra.mxu0 0
        %2357 = vmatprep.subr.bf16.mxu0 0
        %2358 = vmatpush1.bf16.msra.mxu0 0
        %2359 = vmatprep.subr.bf16.mxu0 0
        %2360 = vmatpush1.bf16.msra.mxu0 0
        %2361 = vmatprep.subr.bf16.mxu0 0
        %2362 = vmatpush1.bf16.msra.mxu0 0
        %2363 = vmatprep.subr.bf16.mxu0 0
        %2364 = vmatpush1.bf16.msra.mxu0 0
        %2365 = vmatprep.subr.bf16.mxu0 0
        %2366 = vmatpush1.bf16.msra.mxu0 0
        %2367 = vmatprep.subr.bf16.mxu0 0
        %2368 = vmatpush1.bf16.msra.mxu0 0
        %2369 = vmatprep.subr.bf16.mxu0 0
        %2370 = vmatpush1.bf16.msra.mxu0 0
        %2371 = vmatprep.subr.bf16.mxu0 0
        %2372 = vmatpush1.bf16.msra.mxu0 0
        %2373 = vmatprep.subr.bf16.mxu0 0
        %2374 = vmatpush1.bf16.msra.mxu0 0
        %2375 = vmatprep.subr.bf16.mxu0 0
        %2376 = vmatpush1.bf16.msra.mxu0 0
        %2377 = vmatprep.mubr.bf16.mxu0 0
        %2378 = vmatmul.mubr.bf16.gmra.mrb[0].mxu0 %v2343
        %v2379 = vpop.f32.mrb[0].mxu0
        %v2380 = vadd.f32 0.0, %v2379
        %v2381 = vpop.f32.mrb[0].mxu0
        %v2382 = vpop.f32.mrb[0].mxu0
        %v2383 = vpop.f32.mrb[0].mxu0
        %2384 = vdwg.mxu0
        %v2385 = vpack.c.bf16 %v2380, %v2333
        %v2386 = vld [vmem:[%s1070] sm:$0xf]
        %v2387 = vld [vmem:[%s1070 + $0x4] sm:$0xf]
        %v2390 = vunpack.c.l.b16 %v2386
        %v2391 = vunpack.c.l.b16 %v2387
        %v2392 = vpack.c.b16 %v2391, %v2390
        %v2395 = vsel %vm1381, %v2385, 0
        %2397 = vmatprep.subr.bf16.mxu0 0
        %2398 = vmatpush1.bf16.msra.mxu0 %v2392
        %2399 = vmatprep.subr.bf16.mxu0 0
        %2400 = vmatpush1.bf16.msra.mxu0 0
        %2401 = vmatprep.subr.bf16.mxu0 0
        %2402 = vmatpush1.bf16.msra.mxu0 0
        %2403 = vmatprep.subr.bf16.mxu0 0
        %2404 = vmatpush1.bf16.msra.mxu0 0
        %2405 = vmatprep.subr.bf16.mxu0 0
        %2406 = vmatpush1.bf16.msra.mxu0 0
        %2407 = vmatprep.subr.bf16.mxu0 0
        %2408 = vmatpush1.bf16.msra.mxu0 0
        %2409 = vmatprep.subr.bf16.mxu0 0
        %2410 = vmatpush1.bf16.msra.mxu0 0
        %2411 = vmatprep.subr.bf16.mxu0 0
        %2412 = vmatpush1.bf16.msra.mxu0 0
        %2413 = vmatprep.subr.bf16.mxu0 0
        %2414 = vmatpush1.bf16.msra.mxu0 0
        %2415 = vmatprep.subr.bf16.mxu0 0
        %2416 = vmatpush1.bf16.msra.mxu0 0
        %2417 = vmatprep.subr.bf16.mxu0 0
        %2418 = vmatpush1.bf16.msra.mxu0 0
        %2419 = vmatprep.subr.bf16.mxu0 0
        %2420 = vmatpush1.bf16.msra.mxu0 0
        %2421 = vmatprep.subr.bf16.mxu0 0
        %2422 = vmatpush1.bf16.msra.mxu0 0
        %2423 = vmatprep.subr.bf16.mxu0 0
        %2424 = vmatpush1.bf16.msra.mxu0 0
        %2425 = vmatprep.subr.bf16.mxu0 0
        %2426 = vmatpush1.bf16.msra.mxu0 0
        %2427 = vmatprep.subr.bf16.mxu0 0
        %2428 = vmatpush1.bf16.msra.mxu0 0
        %2429 = vmatprep.mubr.bf16.mxu0 0
        %2430 = vmatmul.mubr.bf16.gmra.mrb[0].mxu0 %v2395
        %v2431 = vpop.f32.mrb[0].mxu0
        %v2432 = vadd.f32 0.0, %v2431
        %v2433 = vpop.f32.mrb[0].mxu0
        %v2434 = vpop.f32.mrb[0].mxu0
        %v2435 = vadd.f32 0.0, %v2434
        %v2436 = vpop.f32.mrb[0].mxu0
        %2437 = vdwg.mxu0
        %v2438 = vadd.f32 %v2161, %v2432
        %v2439 = vadd.f32 %v2162, %v2435
        %2441 = vrot.lane.b32.xlu0 %v2163, 112
        %v2442 = vpop.permute.xlu0 %2441
        %2443 = vrot.lane.b32.xlu0 %v2165, 112
        %v2444 = vpop.permute.xlu0 %2443
        %v2446 = vsel %vm1381, %v2442, 0
        %v2449 = vsel %vm1381, %v2444, 0
        %2451 = vmatprep.subr.bf16.mxu0 0
        %2452 = vmatpush1.bf16.xpose.msra.mxu0 %v2449
        %2453 = vmatprep.subr.bf16.mxu0 0
        %2454 = vmatpush1.bf16.xpose.msra.mxu0 0
        %2455 = vmatprep.subr.bf16.mxu0 0
        %2456 = vmatpush1.bf16.xpose.msra.mxu0 0
        %2457 = vmatprep.subr.bf16.mxu0 0
        %2458 = vmatpush1.bf16.xpose.msra.mxu0 0
        %2459 = vmatprep.subr.bf16.mxu0 0
        %2460 = vmatpush1.bf16.xpose.msra.mxu0 0
        %2461 = vmatprep.subr.bf16.mxu0 0
        %2462 = vmatpush1.bf16.xpose.msra.mxu0 0
        %2463 = vmatprep.subr.bf16.mxu0 0
        %2464 = vmatpush1.bf16.xpose.msra.mxu0 0
        %2465 = vmatprep.subr.bf16.mxu0 0
        %2466 = vmatpush1.bf16.xpose.msra.mxu0 0
        %2467 = vmatprep.subr.bf16.mxu0 0
        %2468 = vmatpush1.bf16.xpose.msra.mxu0 0
        %2469 = vmatprep.subr.bf16.mxu0 0
        %2470 = vmatpush1.bf16.xpose.msra.mxu0 0
        %2471 = vmatprep.subr.bf16.mxu0 0
        %2472 = vmatpush1.bf16.xpose.msra.mxu0 0
        %2473 = vmatprep.subr.bf16.mxu0 0
        %2474 = vmatpush1.bf16.xpose.msra.mxu0 0
        %2475 = vmatprep.subr.bf16.mxu0 0
        %2476 = vmatpush1.bf16.xpose.msra.mxu0 0
        %2477 = vmatprep.subr.bf16.mxu0 0
        %2478 = vmatpush1.bf16.xpose.msra.mxu0 0
        %2479 = vmatprep.subr.bf16.mxu0 0
        %2480 = vmatpush1.bf16.xpose.msra.mxu0 0
        %2481 = vmatprep.subr.bf16.mxu0 0
        %2482 = vmatpush1.bf16.xpose.msra.mxu0 0
        %2483 = vmatprep.mubr.bf16.mxu0 0
        %2484 = vmatmul.mubr.bf16.gmra.mrb[0].mxu0 %v2446
        %v2485 = vpop.f32.mrb[0].mxu0
        %v2486 = vadd.f32 0.0, %v2485
        %v2487 = vpop.f32.mrb[0].mxu0
        %v2488 = vpop.f32.mrb[0].mxu0
        %v2489 = vpop.f32.mrb[0].mxu0
        %2490 = vdwg.mxu0
        %2492 = vrot.lane.b32.xlu0 %v2164, 112
        %v2493 = vpop.permute.xlu0 %2492
        %2494 = vrot.lane.b32.xlu0 %v2166, 112
        %v2495 = vpop.permute.xlu0 %2494
        %v2497 = vsel %vm1381, %v2493, 0
        %v2500 = vsel %vm1381, %v2495, 0
        %2502 = vmatprep.subr.bf16.mxu0 0
        %2503 = vmatpush1.bf16.xpose.msra.mxu0 %v2500
        %2504 = vmatprep.subr.bf16.mxu0 0
        %2505 = vmatpush1.bf16.xpose.msra.mxu0 0
        %2506 = vmatprep.subr.bf16.mxu0 0
        %2507 = vmatpush1.bf16.xpose.msra.mxu0 0
        %2508 = vmatprep.subr.bf16.mxu0 0
        %2509 = vmatpush1.bf16.xpose.msra.mxu0 0
        %2510 = vmatprep.subr.bf16.mxu0 0
        %2511 = vmatpush1.bf16.xpose.msra.mxu0 0
        %2512 = vmatprep.subr.bf16.mxu0 0
        %2513 = vmatpush1.bf16.xpose.msra.mxu0 0
        %2514 = vmatprep.subr.bf16.mxu0 0
        %2515 = vmatpush1.bf16.xpose.msra.mxu0 0
        %2516 = vmatprep.subr.bf16.mxu0 0
        %2517 = vmatpush1.bf16.xpose.msra.mxu0 0
        %2518 = vmatprep.subr.bf16.mxu0 0
        %2519 = vmatpush1.bf16.xpose.msra.mxu0 0
        %2520 = vmatprep.subr.bf16.mxu0 0
        %2521 = vmatpush1.bf16.xpose.msra.mxu0 0
        %2522 = vmatprep.subr.bf16.mxu0 0
        %2523 = vmatpush1.bf16.xpose.msra.mxu0 0
        %2524 = vmatprep.subr.bf16.mxu0 0
        %2525 = vmatpush1.bf16.xpose.msra.mxu0 0
        %2526 = vmatprep.subr.bf16.mxu0 0
        %2527 = vmatpush1.bf16.xpose.msra.mxu0 0
        %2528 = vmatprep.subr.bf16.mxu0 0
        %2529 = vmatpush1.bf16.xpose.msra.mxu0 0
        %2530 = vmatprep.subr.bf16.mxu0 0
        %2531 = vmatpush1.bf16.xpose.msra.mxu0 0
        %2532 = vmatprep.subr.bf16.mxu0 0
        %2533 = vmatpush1.bf16.xpose.msra.mxu0 0
        %2534 = vmatprep.mubr.bf16.mxu0 0
        %2535 = vmatmul.mubr.bf16.gmra.mrb[0].mxu0 %v2497
        %v2536 = vpop.f32.mrb[0].mxu0
        %v2537 = vadd.f32 0.0, %v2536
        %v2538 = vpop.f32.mrb[0].mxu0
        %v2539 = vpop.f32.mrb[0].mxu0
        %v2540 = vpop.f32.mrb[0].mxu0
        %2541 = vdwg.mxu0
        %v2542 = vsel %vm2259, -1e+30, %v2486
        %v2543 = vsel %vm2260, -1e+30, %v2537
        %v2544 = vsel %vm1381, %v2542, -inf
        %2545 = vmax.xlane.f32.xlu0 %v2544
        %v2546 = vpop.xlane.xlu0 %2545
        %v2547 = vsel %vm1381, %v2543, -inf
        %2548 = vmax.xlane.f32.xlu0 %v2547
        %v2549 = vpop.xlane.xlu0 %2548
        %v2550 = vsub.f32 %v2542, %v2546
        %v2551 = vsub.f32 %v2543, %v2549
        %v2552 = vmul.f32 %v2550, 1.442695
        %v2553 = vpow.pop %v2552
        %v2554 = vmul.f32 %v2551, 1.442695
        %v2555 = vpow.pop %v2554
        %v2556 = vsel %vm1381, %v2553, 0.0
        %2557 = vadd.xlane.f32.xlu0 %v2556
        %v2558 = vpop.xlane.xlu0 %2557
        %v2559 = vsel %vm1381, %v2555, 0.0
        %2560 = vadd.xlane.f32.xlu0 %v2559
        %v2561 = vpop.xlane.xlu0 %2560
        %v2562 = vrcp.pop %v2558
        %v2563 = vrcp.pop %v2561
        %v2564 = vmul.f32 %v2553, %v2562
        %v2565 = vmul.f32 %v2555, %v2563
        %v2566 = vsel %vm1381, %v2564, 0.0
        %v2567 = vsel %vm1381, %v2565, 0.0
        %s2568 = scalar_lea.vmem %s1227, 16 [#allocation20]
        %2569 = vst [vmem:[%s2568] sm:$0xff] %v2566
        %2570 = vst [vmem:[%s2568 + $0x8] sm:$0xff] %v2567
        %v2571 = vpack.c.bf16 %v2564, %v2564
        %v2572 = vpack.c.bf16 %v2565, %v2565
        %2573 = vrot.lane.b32.xlu0 %v2165, 80
        %v2574 = vpop.permute.xlu0 %2573
        %v2577 = vsel %vm1381, %v2571, 0
        %2579 = vmatprep.subr.bf16.mxu0 0
        %2580 = vmatpush1.bf16.msra.mxu0 %v2574
        %2581 = vmatprep.subr.bf16.mxu0 0
        %2582 = vmatpush1.bf16.msra.mxu0 0
        %2583 = vmatprep.subr.bf16.mxu0 0
        %2584 = vmatpush1.bf16.msra.mxu0 0
        %2585 = vmatprep.subr.bf16.mxu0 0
        %2586 = vmatpush1.bf16.msra.mxu0 0
        %2587 = vmatprep.subr.bf16.mxu0 0
        %2588 = vmatpush1.bf16.msra.mxu0 0
        %2589 = vmatprep.subr.bf16.mxu0 0
        %2590 = vmatpush1.bf16.msra.mxu0 0
        %2591 = vmatprep.subr.bf16.mxu0 0
        %2592 = vmatpush1.bf16.msra.mxu0 0
        %2593 = vmatprep.subr.bf16.mxu0 0
        %2594 = vmatpush1.bf16.msra.mxu0 0
        %2595 = vmatprep.subr.bf16.mxu0 0
        %2596 = vmatpush1.bf16.msra.mxu0 0
        %2597 = vmatprep.subr.bf16.mxu0 0
        %2598 = vmatpush1.bf16.msra.mxu0 0
        %2599 = vmatprep.subr.bf16.mxu0 0
        %2600 = vmatpush1.bf16.msra.mxu0 0
        %2601 = vmatprep.subr.bf16.mxu0 0
        %2602 = vmatpush1.bf16.msra.mxu0 0
        %2603 = vmatprep.subr.bf16.mxu0 0
        %2604 = vmatpush1.bf16.msra.mxu0 0
        %2605 = vmatprep.subr.bf16.mxu0 0
        %2606 = vmatpush1.bf16.msra.mxu0 0
        %2607 = vmatprep.subr.bf16.mxu0 0
        %2608 = vmatpush1.bf16.msra.mxu0 0
        %2609 = vmatprep.subr.bf16.mxu0 0
        %2610 = vmatpush1.bf16.msra.mxu0 0
        %2611 = vmatprep.mubr.bf16.mxu0 0
        %2612 = vmatmul.mubr.bf16.gmra.mrb[0].mxu0 %v2577
        %v2613 = vpop.f32.mrb[0].mxu0
        %v2614 = vadd.f32 0.0, %v2613
        %v2615 = vpop.f32.mrb[0].mxu0
        %v2616 = vpop.f32.mrb[0].mxu0
        %v2617 = vpop.f32.mrb[0].mxu0
        %2618 = vdwg.mxu0
        %2619 = vrot.lane.b32.xlu0 %v2166, 80
        %v2620 = vpop.permute.xlu0 %2619
        %v2623 = vsel %vm1381, %v2572, 0
        %2625 = vmatprep.subr.bf16.mxu0 0
        %2626 = vmatpush1.bf16.msra.mxu0 %v2620
        %2627 = vmatprep.subr.bf16.mxu0 0
        %2628 = vmatpush1.bf16.msra.mxu0 0
        %2629 = vmatprep.subr.bf16.mxu0 0
        %2630 = vmatpush1.bf16.msra.mxu0 0
        %2631 = vmatprep.subr.bf16.mxu0 0
        %2632 = vmatpush1.bf16.msra.mxu0 0
        %2633 = vmatprep.subr.bf16.mxu0 0
        %2634 = vmatpush1.bf16.msra.mxu0 0
        %2635 = vmatprep.subr.bf16.mxu0 0
        %2636 = vmatpush1.bf16.msra.mxu0 0
        %2637 = vmatprep.subr.bf16.mxu0 0
        %2638 = vmatpush1.bf16.msra.mxu0 0
        %2639 = vmatprep.subr.bf16.mxu0 0
        %2640 = vmatpush1.bf16.msra.mxu0 0
        %2641 = vmatprep.subr.bf16.mxu0 0
        %2642 = vmatpush1.bf16.msra.mxu0 0
        %2643 = vmatprep.subr.bf16.mxu0 0
        %2644 = vmatpush1.bf16.msra.mxu0 0
        %2645 = vmatprep.subr.bf16.mxu0 0
        %2646 = vmatpush1.bf16.msra.mxu0 0
        %2647 = vmatprep.subr.bf16.mxu0 0
        %2648 = vmatpush1.bf16.msra.mxu0 0
        %2649 = vmatprep.subr.bf16.mxu0 0
        %2650 = vmatpush1.bf16.msra.mxu0 0
        %2651 = vmatprep.subr.bf16.mxu0 0
        %2652 = vmatpush1.bf16.msra.mxu0 0
        %2653 = vmatprep.subr.bf16.mxu0 0
        %2654 = vmatpush1.bf16.msra.mxu0 0
        %2655 = vmatprep.subr.bf16.mxu0 0
        %2656 = vmatpush1.bf16.msra.mxu0 0
        %2657 = vmatprep.mubr.bf16.mxu0 0
        %2658 = vmatmul.mubr.bf16.gmra.mrb[0].mxu0 %v2623
        %v2659 = vpop.f32.mrb[0].mxu0
        %v2660 = vadd.f32 0.0, %v2659
        %v2661 = vpop.f32.mrb[0].mxu0
        %v2662 = vpop.f32.mrb[0].mxu0
        %v2663 = vpop.f32.mrb[0].mxu0
        %2664 = vdwg.mxu0
        %v2665 = vpack.c.bf16 %v2660, %v2614
        %s2666 = scalar_lea.vmem %s1070, 8 [#allocation14]
        %v2667 = vld [vmem:[%s2666] sm:$0xf]
        %v2668 = vld [vmem:[%s2666 + $0x4] sm:$0xf]
        %v2671 = vunpack.c.l.b16 %v2667
        %v2672 = vunpack.c.l.b16 %v2668
        %v2673 = vpack.c.b16 %v2672, %v2671
        %v2676 = vsel %vm1381, %v2665, 0
        %2678 = vmatprep.subr.bf16.mxu0 0
        %2679 = vmatpush1.bf16.msra.mxu0 %v2673
        %2680 = vmatprep.subr.bf16.mxu0 0
        %2681 = vmatpush1.bf16.msra.mxu0 0
        %2682 = vmatprep.subr.bf16.mxu0 0
        %2683 = vmatpush1.bf16.msra.mxu0 0
        %2684 = vmatprep.subr.bf16.mxu0 0
        %2685 = vmatpush1.bf16.msra.mxu0 0
        %2686 = vmatprep.subr.bf16.mxu0 0
        %2687 = vmatpush1.bf16.msra.mxu0 0
        %2688 = vmatprep.subr.bf16.mxu0 0
        %2689 = vmatpush1.bf16.msra.mxu0 0
        %2690 = vmatprep.subr.bf16.mxu0 0
        %2691 = vmatpush1.bf16.msra.mxu0 0
        %2692 = vmatprep.subr.bf16.mxu0 0
        %2693 = vmatpush1.bf16.msra.mxu0 0
        %2694 = vmatprep.subr.bf16.mxu0 0
        %2695 = vmatpush1.bf16.msra.mxu0 0
        %2696 = vmatprep.subr.bf16.mxu0 0
        %2697 = vmatpush1.bf16.msra.mxu0 0
        %2698 = vmatprep.subr.bf16.mxu0 0
        %2699 = vmatpush1.bf16.msra.mxu0 0
        %2700 = vmatprep.subr.bf16.mxu0 0
        %2701 = vmatpush1.bf16.msra.mxu0 0
        %2702 = vmatprep.subr.bf16.mxu0 0
        %2703 = vmatpush1.bf16.msra.mxu0 0
        %2704 = vmatprep.subr.bf16.mxu0 0
        %2705 = vmatpush1.bf16.msra.mxu0 0
        %2706 = vmatprep.subr.bf16.mxu0 0
        %2707 = vmatpush1.bf16.msra.mxu0 0
        %2708 = vmatprep.subr.bf16.mxu0 0
        %2709 = vmatpush1.bf16.msra.mxu0 0
        %2710 = vmatprep.mubr.bf16.mxu0 0
        %2711 = vmatmul.mubr.bf16.gmra.mrb[0].mxu0 %v2676
        %v2712 = vpop.f32.mrb[0].mxu0
        %v2713 = vadd.f32 0.0, %v2712
        %v2714 = vpop.f32.mrb[0].mxu0
        %v2715 = vpop.f32.mrb[0].mxu0
        %v2716 = vadd.f32 0.0, %v2715
        %v2717 = vpop.f32.mrb[0].mxu0
        %2718 = vdwg.mxu0
        %v2719 = vadd.f32 %v2438, %v2713
        %v2720 = vadd.f32 %v2439, %v2716
        %v2721 = vld [vmem:[%s1259] sm:$0x1]
        %v2722 = vld [vmem:[%s1262] sm:$0x1]
        %v2723 = vsel %vm1322, %v2719, 0.0
        %2724 = vadd.xlane.f32.xlu0 %v2723
        %v2725 = vpop.xlane.xlu0 %2724
        %v2726 = vsel %vm1322, %v2720, 0.0
        %2727 = vadd.xlane.f32.xlu0 %v2726
        %v2728 = vpop.xlane.xlu0 %2727
        %v2729 = vmul.f32 %v2725, %v1953
        %v2730 = vmul.f32 %v2728, %v1953
        %v2731 = vsub.f32 %v2719, %v2729
        %v2732 = vsub.f32 %v2720, %v2730
        %v2733 = vmul.f32 %v2731, %v2731
        %v2734 = vmul.f32 %v2732, %v2732
        %v2735 = vsel %vm1322, %v2733, 0.0
        %2736 = vadd.xlane.f32.xlu0 %v2735
        %v2737 = vpop.xlane.xlu0 %2736
        %v2738 = vsel %vm1322, %v2734, 0.0
        %2739 = vadd.xlane.f32.xlu0 %v2738
        %v2740 = vpop.xlane.xlu0 %2739
        %v2741 = vmul.f32 %v2737, %v1953
        %v2742 = vmul.f32 %v2740, %v1953
        %v2743 = vadd.f32 %v2741, 1e-05
        %v2744 = vadd.f32 %v2742, 1e-05
        %v2745 = vrsqrt.pop %v2743
        %v2746 = vrsqrt.pop %v2744
        %v2747 = vmul.f32 %v2731, %v2745
        %v2748 = vmul.f32 %v2732, %v2746
        %v2750 = vlaneseq
        %v2751 = vshrl.u32 %v2750, 7
        %v2752 = vsub.s32 0, %v2751
        %v2753 = vrot.slane %v2721, %v2752
        %v2755 = vmul.f32 %v2747, %v2753
        %v2756 = vmul.f32 %v2748, %v2753
        %v2758 = vlaneseq
        %v2759 = vshrl.u32 %v2758, 7
        %v2760 = vsub.s32 0, %v2759
        %v2761 = vrot.slane %v2722, %v2760
        %v2763 = vadd.f32 %v2755, %v2761
        %v2764 = vadd.f32 %v2756, %v2761
        %v2765 = vmul.f32 %v2763, %v1993
        %v2766 = vmul.f32 %v2764, %v1998
        %v2767 = vpack.c.bf16 %v2766, %v2765
        %v2768 = vld [vmem:[%s1079] sm:$0xf]
        %v2769 = vld [vmem:[%s1079 + $0x4] sm:$0xf]
        %v2770 = vld [vmem:[%s1079 + $0x8] sm:$0xf]
        %v2771 = vld [vmem:[%s1079 + $0xc] sm:$0xf]
        %v2772 = vld [vmem:[%s1265] sm:$0x1]
        %v2774 = vlaneseq
        %v2775 = vshrl.u32 %v2774, 7
        %v2776 = vsub.s32 0, %v2775
        %v2777 = vrot.slane %v2772, %v2776
        %v2783 = vunpack.c.l.b16 %v2768
        %v2784 = vunpack.c.l.b16 %v2769
        %v2785 = vunpack.c.l.b16 %v2770
        %v2786 = vunpack.c.l.b16 %v2771
        %v2787 = vpack.c.b16 %v2784, %v2783
        %v2788 = vpack.c.b16 %v2786, %v2785
        %v2792 = vsel %vm1322, %v2767, 0
        %2794 = vmatprep.subr.bf16.mxu0 0
        %2795 = vmatpush1.bf16.msra.mxu0 %v2787
        %2796 = vmatprep.subr.bf16.mxu0 0
        %2797 = vmatpush1.bf16.msra.mxu0 %v2788
        %2798 = vmatprep.subr.bf16.mxu0 0
        %2799 = vmatpush1.bf16.msra.mxu0 0
        %2800 = vmatprep.subr.bf16.mxu0 0
        %2801 = vmatpush1.bf16.msra.mxu0 0
        %2802 = vmatprep.subr.bf16.mxu0 0
        %2803 = vmatpush1.bf16.msra.mxu0 0
        %2804 = vmatprep.subr.bf16.mxu0 0
        %2805 = vmatpush1.bf16.msra.mxu0 0
        %2806 = vmatprep.subr.bf16.mxu0 0
        %2807 = vmatpush1.bf16.msra.mxu0 0
        %2808 = vmatprep.subr.bf16.mxu0 0
        %2809 = vmatpush1.bf16.msra.mxu0 0
        %2810 = vmatprep.subr.bf16.mxu0 0
        %2811 = vmatpush1.bf16.msra.mxu0 0
        %2812 = vmatprep.subr.bf16.mxu0 0
        %2813 = vmatpush1.bf16.msra.mxu0 0
        %2814 = vmatprep.subr.bf16.mxu0 0
        %2815 = vmatpush1.bf16.msra.mxu0 0
        %2816 = vmatprep.subr.bf16.mxu0 0
        %2817 = vmatpush1.bf16.msra.mxu0 0
        %2818 = vmatprep.subr.bf16.mxu0 0
        %2819 = vmatpush1.bf16.msra.mxu0 0
        %2820 = vmatprep.subr.bf16.mxu0 0
        %2821 = vmatpush1.bf16.msra.mxu0 0
        %2822 = vmatprep.subr.bf16.mxu0 0
        %2823 = vmatpush1.bf16.msra.mxu0 0
        %2824 = vmatprep.subr.bf16.mxu0 0
        %2825 = vmatpush1.bf16.msra.mxu0 0
        %2826 = vmatprep.mubr.bf16.mxu0 0
        %2827 = vmatmul.mubr.bf16.gmra.mrb[0].mxu0 %v2792
        %v2828 = vpop.f32.mrb[0].mxu0
        %v2829 = vadd.f32 %v2777, %v2828
        %v2830 = vpop.f32.mrb[0].mxu0
        %v2831 = vpop.f32.mrb[0].mxu0
        %v2832 = vadd.f32 %v2777, %v2831
        %v2833 = vpop.f32.mrb[0].mxu0
        %2834 = vdwg.mxu0
        %v2835 = vmax.f32 %v2829, 0.0
        %v2836 = vmax.f32 %v2832, 0.0
        %v2837 = vpack.c.bf16 %v2836, %v2835
        %v2838 = vld [vmem:[%s1270] sm:$0xf]
        %v2839 = vld [vmem:[%s1270 + $0x4] sm:$0xf]
        %v2840 = vld [vmem:[%s1270 + $0x8] sm:$0xf]
        %v2841 = vld [vmem:[%s1270 + $0xc] sm:$0xf]
        %v2842 = vld [vmem:[%s1270 + $0x10] sm:$0xf]
        %v2843 = vld [vmem:[%s1270 + $0x14] sm:$0xf]
        %v2844 = vld [vmem:[%s1270 + $0x18] sm:$0xf]
        %v2845 = vld [vmem:[%s1270 + $0x1c] sm:$0xf]
        %v2846 = vld [vmem:[%s1273] sm:$0x1]
        %v2848 = vlaneseq
        %v2849 = vshrl.u32 %v2848, 7
        %v2850 = vsub.s32 0, %v2849
        %v2851 = vrot.slane %v2846, %v2850
        %v2861 = vunpack.c.l.b16 %v2838
        %v2862 = vunpack.c.l.b16 %v2839
        %v2863 = vunpack.c.l.b16 %v2840
        %v2864 = vunpack.c.l.b16 %v2841
        %v2865 = vunpack.c.l.b16 %v2842
        %v2866 = vunpack.c.l.b16 %v2843
        %v2867 = vunpack.c.l.b16 %v2844
        %v2868 = vunpack.c.l.b16 %v2845
        %v2869 = vpack.c.b16 %v2862, %v2861
        %v2870 = vpack.c.b16 %v2864, %v2863
        %v2871 = vpack.c.b16 %v2866, %v2865
        %v2872 = vpack.c.b16 %v2868, %v2867
        %vm2877 = vcmask 523264
        %v2879 = vsel %vm2877, %v2837, 0
        %2881 = vmatprep.subr.bf16.mxu0 0
        %2882 = vmatpush1.bf16.msra.mxu0 %v2869
        %2883 = vmatprep.subr.bf16.mxu0 0
        %2884 = vmatpush1.bf16.msra.mxu0 %v2870
        %2885 = vmatprep.subr.bf16.mxu0 0
        %2886 = vmatpush1.bf16.msra.mxu0 %v2871
        %2887 = vmatprep.subr.bf16.mxu0 0
        %2888 = vmatpush1.bf16.msra.mxu0 %v2872
        %2889 = vmatprep.subr.bf16.mxu0 0
        %2890 = vmatpush1.bf16.msra.mxu0 0
        %2891 = vmatprep.subr.bf16.mxu0 0
        %2892 = vmatpush1.bf16.msra.mxu0 0
        %2893 = vmatprep.subr.bf16.mxu0 0
        %2894 = vmatpush1.bf16.msra.mxu0 0
        %2895 = vmatprep.subr.bf16.mxu0 0
        %2896 = vmatpush1.bf16.msra.mxu0 0
        %2897 = vmatprep.subr.bf16.mxu0 0
        %2898 = vmatpush1.bf16.msra.mxu0 0
        %2899 = vmatprep.subr.bf16.mxu0 0
        %2900 = vmatpush1.bf16.msra.mxu0 0
        %2901 = vmatprep.subr.bf16.mxu0 0
        %2902 = vmatpush1.bf16.msra.mxu0 0
        %2903 = vmatprep.subr.bf16.mxu0 0
        %2904 = vmatpush1.bf16.msra.mxu0 0
        %2905 = vmatprep.subr.bf16.mxu0 0
        %2906 = vmatpush1.bf16.msra.mxu0 0
        %2907 = vmatprep.subr.bf16.mxu0 0
        %2908 = vmatpush1.bf16.msra.mxu0 0
        %2909 = vmatprep.subr.bf16.mxu0 0
        %2910 = vmatpush1.bf16.msra.mxu0 0
        %2911 = vmatprep.subr.bf16.mxu0 0
        %2912 = vmatpush1.bf16.msra.mxu0 0
        %2913 = vmatprep.mubr.bf16.mxu0 0
        %2914 = vmatmul.mubr.bf16.gmra.mrb[0].mxu0 %v2879
        %v2915 = vpop.f32.mrb[0].mxu0
        %v2916 = vadd.f32 %v2851, %v2915
        %v2917 = vpop.f32.mrb[0].mxu0
        %v2918 = vpop.f32.mrb[0].mxu0
        %v2919 = vadd.f32 %v2851, %v2918
        %v2920 = vpop.f32.mrb[0].mxu0
        %2921 = vdwg.mxu0
        %v2922 = vadd.f32 %v2916, %v2765
        %v2923 = vadd.f32 %v2919, %v2766
        %v2924 = vld [vmem:[%s1276] sm:$0x1]
        %v2925 = vld [vmem:[%s1279] sm:$0x1]
        %v2926 = vsel %vm1322, %v2922, 0.0
        %2927 = vadd.xlane.f32.xlu0 %v2926
        %v2928 = vpop.xlane.xlu0 %2927
        %v2929 = vsel %vm1322, %v2923, 0.0
        %2930 = vadd.xlane.f32.xlu0 %v2929
        %v2931 = vpop.xlane.xlu0 %2930
        %v2932 = vmul.f32 %v2928, %v1953
        %v2933 = vmul.f32 %v2931, %v1953
        %v2934 = vsub.f32 %v2922, %v2932
        %v2935 = vsub.f32 %v2923, %v2933
        %v2936 = vmul.f32 %v2934, %v2934
        %v2937 = vmul.f32 %v2935, %v2935
        %v2938 = vsel %vm1322, %v2936, 0.0
        %2939 = vadd.xlane.f32.xlu0 %v2938
        %v2940 = vpop.xlane.xlu0 %2939
        %v2941 = vsel %vm1322, %v2937, 0.0
        %2942 = vadd.xlane.f32.xlu0 %v2941
        %v2943 = vpop.xlane.xlu0 %2942
        %v2944 = vmul.f32 %v2940, %v1953
        %v2945 = vmul.f32 %v2943, %v1953
        %v2946 = vadd.f32 %v2944, 1e-05
        %v2947 = vadd.f32 %v2945, 1e-05
        %v2948 = vrsqrt.pop %v2946
        %v2949 = vrsqrt.pop %v2947
        %v2950 = vmul.f32 %v2934, %v2948
        %v2951 = vmul.f32 %v2935, %v2949
        %v2953 = vlaneseq
        %v2954 = vshrl.u32 %v2953, 7
        %v2955 = vsub.s32 0, %v2954
        %v2956 = vrot.slane %v2924, %v2955
        %v2958 = vmul.f32 %v2950, %v2956
        %v2959 = vmul.f32 %v2951, %v2956
        %v2961 = vlaneseq
        %v2962 = vshrl.u32 %v2961, 7
        %v2963 = vsub.s32 0, %v2962
        %v2964 = vrot.slane %v2925, %v2963
        %v2966 = vadd.f32 %v2958, %v2964
        %v2967 = vadd.f32 %v2959, %v2964
        %v2968 = vmul.f32 %v2966, %v1993
        %v2969 = vmul.f32 %v2967, %v1998
        %2970 = vst.msk [vmem:[#allocation17] sm:$0xff] %vm1322, %v2968
        %2971 = vst.msk [vmem:[#allocation17 + $0x8] sm:$0xff] %vm1322, %v2969
        %s2972 = sand.u32 %s54, 1
        %s2973 = scalar_lea.sflag [#allocation19], %s2972
        %s2974 = sand.u32 %s708, 1
        %s2975 = smul.addr %s2974, 32
        %s2976 = scalar_lea.vmem [#allocation18], %s2975
        %s2977 = sand.u32 %s54, 1
        %s2978 = scalar_lea.sflag [#allocation19], %s2977
        %s2979 = sand.u32 %s734, 1
        %s2980 = smul.addr %s2979, 32
        %s2981 = scalar_lea.vmem [#allocation20], %s2980
        // Predicated region
        $region161: #{tpu_custom_call.1} parent=119 // pred_check
          %p2982 = pneg %p692
        $region162: #{tpu_custom_call.1} parent=119 // pred_check_branch
          %2984 = sbr.rel (%p2982) target = $region164
        $region163: #{tpu_custom_call.1} parent=119 // pred_region
          %s2986 = ssub.s32 256, 256
          %2987 = vsyncadd [#allocation4], %s2986
          %s2988 = sshll.u32 [#allocation17], 4
          %s2989 = int_to_ptr.vmem [resolvable:$true] %s2988
          %2994 = dma.vmem_to_hbm [thread:$0]  %s2989, 256, %s25, [#allocation4], 128, 128, 8
        $region164: #{tpu_custom_call.1} parent=119 // pred_fallthru
          _
        // Predicated region
        $region165: #{tpu_custom_call.1} parent=119 // pred_check
          %p2995 = pneg %p718
        $region166: #{tpu_custom_call.1} parent=119 // pred_check_branch
          %2997 = sbr.rel (%p2995) target = $region168
        $region167: #{tpu_custom_call.1} parent=119 // pred_region
          %s2999 = ssub.s32 512, 512
          %3000 = vsyncadd %s2973, %s2999
          %s3001 = smul.addr %s54, 4
          %s3002 = smul.addr %s3001, 128
          %s3003 = scalar_lea.hbm %s26, %s3002
          %s3004 = sshll.u32 %s2976, 4
          %s3005 = int_to_ptr.vmem [resolvable:$true] %s3004
          %3010 = dma.vmem_to_hbm [thread:$0]  %s3005, 512, %s3003, %s2973, 128, 128, 8
        $region168: #{tpu_custom_call.1} parent=119 // pred_fallthru
          _
        // Predicated region
        $region169: #{tpu_custom_call.1} parent=119 // pred_check
          %p3011 = pneg %p744
        $region170: #{tpu_custom_call.1} parent=119 // pred_check_branch
          %3013 = sbr.rel (%p3011) target = $region172
        $region171: #{tpu_custom_call.1} parent=119 // pred_region
          %s3015 = ssub.s32 512, 512
          %3016 = vsyncadd %s2978, %s3015
          %s3017 = smul.addr %s54, 4
          %s3018 = smul.addr %s3017, 128
          %s3019 = scalar_lea.hbm %s27, %s3018
          %s3020 = sshll.u32 %s2981, 4
          %s3021 = int_to_ptr.vmem [resolvable:$true] %s3020
          %3026 = dma.vmem_to_hbm [thread:$0]  %s3021, 512, %s3019, %s2978, 128, 128, 8
        $region172: #{tpu_custom_call.1} parent=119 // pred_fallthru
          _
        // Predicated region
        $region173: #{tpu_custom_call.1} parent=119 // pred_check
          %p3027 = pneg %p692
        $region174: #{tpu_custom_call.1} parent=119 // pred_check_branch
          %3029 = sbr.rel (%p3027) target = $region176
        $region175: #{tpu_custom_call.1} parent=119 // pred_region
          %3030 = dma.done [#allocation4], 256
        $region176: #{tpu_custom_call.1} parent=119 // pred_fallthru
          _
      $region120: #{tpu_custom_call.1} parent=5 // pred_fallthru
        _
      %p3031 = scmp.le.s32.totalorder 2, %s49
      // Predicated region
      $region177: #{tpu_custom_call.1} parent=5 // pred_check
        %p3032 = pneg %p3031
      $region178: #{tpu_custom_call.1} parent=5 // pred_check_branch
        %3034 = sbr.rel (%p3032) target = $region180
      $region179: #{tpu_custom_call.1} parent=5 // pred_region
        %s3035 = ssub.s32 %s49, 2
        // Predicated region
        $region181: #{tpu_custom_call.1} parent=179 // pred_check
          %p3036 = pneg %p724
        $region182: #{tpu_custom_call.1} parent=179 // pred_check_branch
          %3038 = sbr.rel (%p3036) target = $region184
        $region183: #{tpu_custom_call.1} parent=179 // pred_region
          %s3039 = sand.u32 %s55, 1
          %s3040 = scalar_lea.sflag [#allocation19], %s3039
          %s3041 = sand.u32 %s709, 1
          %s3042 = smul.addr %s3041, 32
          %s3043 = scalar_lea.vmem [#allocation18], %s3042
          %3044 = dma.done %s3040, 512
        $region184: #{tpu_custom_call.1} parent=179 // pred_fallthru
          _
        // Predicated region
        $region185: #{tpu_custom_call.1} parent=179 // pred_check
          %p3045 = pneg %p750
        $region186: #{tpu_custom_call.1} parent=179 // pred_check_branch
          %3047 = sbr.rel (%p3045) target = $region188
        $region187: #{tpu_custom_call.1} parent=179 // pred_region
          %s3048 = sand.u32 %s55, 1
          %s3049 = scalar_lea.sflag [#allocation19], %s3048
          %s3050 = sand.u32 %s735, 1
          %s3051 = smul.addr %s3050, 32
          %s3052 = scalar_lea.vmem [#allocation20], %s3051
          %3053 = dma.done %s3049, 512
        $region188: #{tpu_custom_call.1} parent=179 // pred_fallthru
          _
      $region180: #{tpu_custom_call.1} parent=5 // pred_fallthru
        _
    $region6: #{tpu_custom_call.1} parent=1 // loop_footer
      %s53 = sadd.s32 1, %s49
    $region7: #{tpu_custom_call.1} parent=1 // loop_footer_branch
      %48 = sbr.rel target = $region3
    $region8: #{tpu_custom_call.1} parent=1 // loop_exit
      _
    %3054 = vsyncpa [#allocation3], 1
    %s3055 = scalar_lea.sflag [#allocation3], 1
    %3056 = vsyncpa %s3055, 1
    %3057 = vsyncpa [#allocation6], 1
    %3058 = vsyncpa [#allocation9], 1
    %s3059 = scalar_lea.sflag [#allocation9], 1
    %3060 = vsyncpa %s3059, 1
    %3061 = vsyncpa [#allocation12], 1
    %s3062 = scalar_lea.sflag [#allocation12], 1
    %3063 = vsyncpa %s3062, 1
    %3064 = vsyncpa [#allocation15], 1
    %s3065 = scalar_lea.sflag [#allocation15], 1
    %3066 = vsyncpa %s3065, 1
    %3067 = vsyncpa [#allocation4], 1
    %s3068 = scalar_lea.sflag [#allocation4], 1
    %3069 = vsyncpa %s3068, 1
    %3070 = vsyncpa [#allocation19], 1
    %s3071 = scalar_lea.sflag [#allocation19], 1
    %3072 = vsyncpa %s3071, 1

</llo_original>
